<compile_context>
chip_gen: v7x
topology: tpu7x:2x2x1
jax: 0.10.0
libtpu: 0.0.40
codegen_flags: <defaults>
</compile_context>

<pallas_src>
import functools

import numpy as np
import jax
import jax.numpy as jnp
from jax.experimental import pallas as pl
from jax.experimental.pallas import tpu as pltpu

F32 = jnp.float32
_LANE = 128
_DIM1 = (((1,), (1,)), ((), ()))   # contract trailing dims of both operands (A @ B^T)


def _rup(x):
    return ((x + _LANE - 1) // _LANE) * _LANE


def _dot(a, b):
    return jnp.dot(a, b, preferred_element_type=F32)


def _dot1(a, b):
    return jax.lax.dot_general(a, b, _DIM1, preferred_element_type=F32)


def _softmax_axis0(m):
    # F.softmax(..., dim=1) on a (B, D, D) tensor == softmax over axis 0 of each (D, D).
    m = m - jnp.max(m, axis=0, keepdims=True)
    e = jnp.exp(m)
    # approx=True -> EUP vrcp (free slot); set approx=False for bit-level PyTorch parity.
    return e * pl.reciprocal(jnp.sum(e, axis=0, keepdims=True), approx=True)


# ---------------------------------------------------------------------------
# Fused per-block kernel.  One grid step == `bt` batch elements.
# Activation layout everywhere: rows (b, n), columns (t, f)   [lane-dense, (t,f)-major].
# ---------------------------------------------------------------------------
def astgcn_block_kernel(*refs, bt, n, t, ic, tc, oc, npred, final):
    if final:
        (xtf_ref, cxa_ref, pu1_ref, ptile_ref, attt_ref, attn_ref,
         wcheb_ref, wconvres_ref, meanmat_ref, row_ref, wf_ref,
         o_ref, pred_ref, tax_ref) = refs
    else:
        (xtf_ref, cxa_ref, pu1_ref, ptile_ref, attt_ref, attn_ref,
         wcheb_ref, wconvres_ref, meanmat_ref, row_ref,
         o_ref, tax_ref) = refs
        wf_ref = pred_ref = None

    xtf = xtf_ref[...]                                    # (bt*n, ic)

    # ----- batch-folded x-side contractions (M = bt*n rows on the MXU) -----
    rr = _dot(xtf, cxa_ref[:, 0:2 * t])                   # (bt*n, 2t): [sum_f U3*X | sum_f W3*X]
    a1 = _dot(pu1_ref[...], xtf)                          # (bt, ic)  : sum_n U1[n]*X[b,n,f,t']

    ptile = ptile_ref[...]                                # (t, ic):  delta_{t,t'} lane expander
    c_w2 = _rup(2 * t)
    c_u2 = c_w2 + _rup(t)
    w2rep = cxa_ref[:, c_w2:c_w2 + t]                     # (ic, t)
    u2rep = cxa_ref[:, c_u2:c_u2 + n]                     # (ic, n)
    ve = attt_ref[:, 0:t]
    be = attt_ref[:, _rup(t):_rup(t) + t]
    rn = _rup(n)
    vs = attn_ref[:, 0:n]
    bs = attn_ref[:, rn:rn + n]
    lhat = attn_ref[:, 2 * rn:2 * rn + n]
    eye_n = attn_ref[:, 3 * rn:3 * rn + n]
    w1 = row_ref[:, 0:t]

    # ----- per-batch attention: tiny (T,T)/(N,N) bilinear forms, trace-time unrolled -----
    for b in range(bt):
        r0, r1 = b * n, (b + 1) * n
        xb = xtf[r0:r1, :]                                # (n, ic)
        # temporal attention E (t, t)
        lhs_t = _dot(ptile * a1[b:b + 1, :], u2rep)       # (t, n)
        p_tt = _dot(lhs_t, rr[r0:r1, 0:t])                # (t, t)
        e = _softmax_axis0(_dot(ve, jax.nn.sigmoid(p_tt + be)))
        # spatial attention S (n, n) on X_TAt = X @ E (never materialized)
        ew1 = _dot1(w1, e)                                # (1, t):  (E @ W1)^T
        bvec = _dot(ew1, ptile)                           # (1, ic): broadcast over f
        lhs_s = _dot(xb * bvec, w2rep)                    # (n, t)
        rhs_s = _dot(rr[r0:r1, t:2 * t], e)               # (n, t)
        prod = _dot1(lhs_s, rhs_s)                        # (n, n)
        s = _softmax_axis0(_dot(vs, jax.nn.sigmoid(prod + bs)))
        # ChebConvAttention (K=2, sym) propagate inputs: T0 = diag(S) X, T1 = (L_hat .* S) T0
        sdiag = jnp.sum(s * eye_n, axis=1, keepdims=True)
        tax0 = xb * sdiag
        tax_ref[r0:r1, 0:ic] = tax0
        tax_ref[r0:r1, ic:2 * ic] = _dot(lhat * s, tax0)

    # ----- batch-folded Cheb weights / temporal + residual conv / LayerNorm / final conv -----
    o0 = _rup(t)
    chebb = row_ref[:, o0:o0 + tc]
    o0 += _rup(tc)
    btc = row_ref[:, o0:o0 + oc]
    o0 += _rup(oc)
    gamma = row_ref[:, o0:o0 + oc]
    o0 += _rup(oc)
    beta = row_ref[:, o0:o0 + oc]
    o0 += _rup(oc)

    cheb = jnp.maximum(_dot(tax_ref[...], wcheb_ref[...]) + chebb, 0.0)     # (bt*n, tc)
    z = jnp.maximum(_dot(cheb, wconvres_ref[0:tc, :])
                    + _dot(xtf, wconvres_ref[tc:tc + ic, :]) + btc, 0.0)    # (bt*n, oc)
    mu = _dot(z, meanmat_ref[...])                                          # LayerNorm(C_time)
    cen = z - mu
    var = _dot(cen * cen, meanmat_ref[...])
    out = cen * jax.lax.rsqrt(var + 1e-5) * gamma + beta
    o_ref[...] = out
    if final:
        pred_ref[...] = _dot(out, wf_ref[...]) + row_ref[:, o0:o0 + npred]


def _block_cost(b, bt, n, t, ic, tc, oc, npred, final):
    bn = b * n
    fl = 2 * bn * ic * 2 * t + 2 * b * bt * n * ic
    per_b = (2 * t * ic * n + 2 * t * n * t + 2 * t * t * t + 2 * t * t + 2 * t * ic
             + 2 * n * ic * t + 2 * n * t * t + 2 * n * t * n + 2 * n * n * n
             + 2 * n * n * ic)
    fl += b * per_b
    fl += 2 * bn * (2 * ic) * tc + 2 * bn * tc * oc + 2 * bn * ic * oc + 4 * bn * oc * oc
    if final:
        fl += 2 * bn * oc * npred
    transc = b * 2 * (t * t + n * n) + bn * oc
    return fl, transc


def run_block(xtf, consts, meta, bt, final):
    bn, ic = xtf.shape
    n, t, tc, oc, npred = meta["n"], meta["t"], meta["tc"], meta["oc"], meta["npred"]
    assert ic == meta["ic"] and bn % (bt * n) == 0
    grid = (bn // (bt * n),)

    in_specs = [pl.BlockSpec((bt * n, ic), lambda i: (i, 0))]
    in_specs += [pl.BlockSpec(a.shape, lambda i: (0, 0)) for a in consts]

    o_spec = pl.BlockSpec((bt * n, oc), lambda i: (i, 0))
    o_shape = jax.ShapeDtypeStruct((bn, oc), F32)
    if final:
        out_specs = (o_spec, pl.BlockSpec((bt * n, npred), lambda i: (i, 0)))
        out_shape = (o_shape, jax.ShapeDtypeStruct((bn, npred), F32))
    else:
        out_specs, out_shape = o_spec, o_shape

    kern = functools.partial(astgcn_block_kernel, bt=bt, n=n, t=t, ic=ic,
                             tc=tc, oc=oc, npred=npred, final=final)
    flops, transc = _block_cost(bn // n, bt, n, t, ic, tc, oc, npred, final)
    bytes_acc = 4 * (int(xtf.size) + sum(int(a.size) for a in consts)
                     + bn * oc + (bn * npred if final else 0))

    return pl.pallas_call(
        kern,
        grid=grid,
        in_specs=in_specs,
        out_specs=out_specs,
        out_shape=out_shape,
        scratch_shapes=[pltpu.VMEM((bt * n, 2 * ic), F32)],
        compiler_params=pltpu.CompilerParams(dimension_semantics=("parallel",)),
        cost_estimate=pl.CostEstimate(flops=int(flops), transcendentals=int(transc),
                                      bytes_accessed=int(bytes_acc)),
    )(xtf, *[jnp.asarray(a) for a in consts])


# ---------------------------------------------------------------------------
# Host-side (NumPy) preprocessing: graph Laplacian + packed per-block constants.
# ---------------------------------------------------------------------------
def build_scaled_laplacian(edge_index, num_nodes):
    # ChebConvAttention.__norm__('sym', edge_weight=None), lambda_max from
    # LaplacianLambdaMax(normalization=None) on the unit-weight graph:
    #   L_hat = (2 / lambda_max) * (I - D^-1/2 A D^-1/2) - I
    a = np.zeros((num_nodes, num_nodes), np.float64)
    row, col = np.asarray(edge_index)
    mask = row != col                                     # remove self loops
    a[row[mask], col[mask]] = 1.0
    deg = a.sum(axis=1)
    lam_max = float(np.max(np.linalg.eigvalsh(np.diag(deg) - a)))
    dinv = np.where(deg > 0.0, deg ** -0.5, 0.0)
    l_sym = np.eye(num_nodes) - dinv[:, None] * a * dinv[None, :]
    return ((2.0 / lam_max) * l_sym - np.eye(num_nodes)).astype(np.float32)


def _pack_cols(sections):
    """Concatenate equal-row sections along lanes, padding each to a multiple of 128."""
    rows = sections[0].shape[0]
    out = np.zeros((rows, sum(_rup(s.shape[1]) for s in sections)), np.float32)
    off = 0
    for s in sections:
        out[:, off:off + s.shape[1]] = s
        off += _rup(s.shape[1])
    return out


def prep_block_consts(pj, lhat, n, f, t, ts, ic, bt, wf=None, bf=None):
    """Build the packed, (t,f)-ordered constant slabs consumed by the fused block kernel."""
    p = {k: np.asarray(v, np.float32) for k, v in pj.items()}
    c = p["cheb_W"].shape[-1]
    ct = p["Wt"].shape[0]
    t_out = (t - 1) // ts + 1
    tf, tc = t * f, t * c
    assert ic >= tf
    oc = _rup(t_out * ct)
    if oc % ct:
        oc = t_out * ct                                   # keep LN groups clean
    eye_t = np.eye(t, dtype=np.float32)

    # x-side contraction slab (rows = (t, f) input columns, zero-padded to ic)
    ru3 = np.kron(eye_t, p["U3"].reshape(f, 1))
    rw3 = np.kron(eye_t, p["W3"].reshape(f, 1))
    cxa = _pack_cols([np.concatenate([ru3, rw3], axis=1),
                      np.tile(p["W2"], (t, 1)),
                      np.tile(p["U2"], (t, 1))])
    cxa = np.pad(cxa, ((0, ic - tf), (0, 0)))

    pu1 = np.kron(np.eye(bt, dtype=np.float32), p["U1"].reshape(1, n))       # (bt, bt*n)
    ptile = np.pad(np.kron(eye_t, np.ones((1, f), np.float32)),
                   ((0, 0), (0, ic - tf)))                                    # (t, ic)
    attt = _pack_cols([p["Ve"], p["be"]])                                     # (t, .)
    attn = _pack_cols([p["Vs"], p["bs"], lhat, np.eye(n, dtype=np.float32)])  # (n, .)

    wcheb = np.concatenate(
        [np.pad(np.kron(eye_t, p["cheb_W"][k]), ((0, ic - tf), (0, 0))) for k in range(2)],
        axis=0)                                                               # (2*ic, tc)

    # (1,3,stride) temporal conv + (1,1,stride) residual conv unrolled into one stacked weight
    wt = p["Wt"][:, :, 0, :]                                                  # (ct, c, 3)
    wconv = np.zeros((tc, oc), np.float32)
    for j in range(t_out):
        for k in range(3):
            tin = j * ts + k - 1
            if 0 <= tin < t:
                wconv[tin * c:(tin + 1) * c, j * ct:(j + 1) * ct] = wt[:, :, k].T
    wr = p["Wr"][:, :, 0, 0]                                                  # (ct, f)
    wres = np.zeros((ic, oc), np.float32)
    for j in range(t_out):
        wres[j * ts * f:(j * ts + 1) * f, j * ct:(j + 1) * ct] = wr.T
    wconvres = np.concatenate([wconv, wres], axis=0)                          # (tc+ic, oc)

    meanmat = np.kron(np.eye(oc // ct), np.full((ct, ct), 1.0 / ct)).astype(np.float32)

    def pad_oc(v):
        out = np.zeros((1, oc), np.float32)
        out[:, :t_out * ct] = np.tile(v.reshape(1, ct), (1, t_out))
        return out

    rows = [p["W1"].reshape(1, t),
            np.tile(p["cheb_b"].reshape(1, c), (1, t)),
            pad_oc(p["bt"] + p["br"]),
            pad_oc(p["gamma"]),
            pad_oc(p["beta"])]

    consts = [cxa, pu1, ptile, attt, attn, wcheb, wconvres, meanmat]
    npred = 0
    if wf is not None:
        wf = np.asarray(wf, np.float32)
        npred = wf.shape[0]
        wf_mat = np.zeros((oc, npred), np.float32)
        wf_mat[:t_out * ct, :] = np.transpose(wf[:, :, 0, :], (1, 2, 0)).reshape(t_out * ct, npred)
        rows.append(np.asarray(bf, np.float32).reshape(1, npred))
        consts += [_pack_cols(rows), wf_mat]
    else:
        consts += [_pack_cols(rows)]

    meta = dict(n=n, t=t, ic=ic, c=c, ct=ct, t_out=t_out, tc=tc, oc=oc, npred=npred)
    return consts, meta


def _pick_batch_tile(b):
    # Fold the whole (small) batch into one grid step; for large batches keep >= 8 grid
    # steps so each v7x TensorCore pipelines >= 4 steps.
    if b <= 8:
        return b
    for bt in range(b // 8, 0, -1):
        if b % bt == 0:
            return bt
    return 1


def t_astgcn_forward(x, edge_index, edge_weight, params):
    # edge_weight accepted for parity with T_ASTGCN.forward but unused (library semantics:
    # ASTGCN calls ChebConvAttention with edge_weight=None).
    del edge_weight
    b, n, f, t = x.shape
    lhat = build_scaled_laplacian(np.asarray(edge_index), n)
    bt = _pick_batch_tile(b)
    nb = len(params["blocks"])

    # canonical activation layout between blocks: (B*N, T*F), columns in (t, f) order
    xtf = jnp.transpose(x, (0, 1, 3, 2)).reshape(b * n, t * f)
    ic = t * f
    pred = None
    for bi, (blk, ts) in enumerate(zip(params["blocks"], params["time_strides"])):
        final = bi == nb - 1
        consts, meta = prep_block_consts(
            blk, lhat, n, f, t, ts, ic, bt,
            wf=params["Wf"] if final else None,
            bf=params["bf"] if final else None)
        out = run_block(xtf, consts, meta, bt=bt, final=final)
        if final:
            pred = out[1]                            # final conv fused into the last block
        else:
            xtf = out                                # consumed directly, no inter-block relayout
        t, f, ic = meta["t_out"], meta["ct"], meta["oc"]
    return pred.reshape(b, n, -1)                    # (B, N, num_for_predict)


def init_block_params(key, n, f, t, c_cheb, c_time):
    ks = jax.random.split(key, 16)
    r = lambda k, shp: jax.random.normal(k, shp, F32) * 0.1
    return dict(
        U1=r(ks[0], (1, n)), U2=r(ks[1], (f, n)), U3=r(ks[2], (1, f)),
        be=r(ks[3], (t, t)), Ve=r(ks[4], (t, t)),
        W1=r(ks[5], (1, t)), W2=r(ks[6], (f, t)), W3=r(ks[7], (1, f)),
        bs=r(ks[8], (n, n)), Vs=r(ks[9], (n, n)),
        cheb_W=r(ks[10], (2, f, c_cheb)), cheb_b=r(ks[11], (1, c_cheb)),
        Wt=r(ks[12], (c_time, c_cheb, 1, 3)), bt=r(ks[13], (1, c_time)),
        Wr=r(ks[14], (c_time, f, 1, 1)), br=r(ks[15], (1, c_time)),
        gamma=jnp.ones((1, c_time), F32), beta=jnp.zeros((1, c_time), F32),
    )


if __name__ == "__main__":
    # small but module-consistent shapes: d_d=7, d_e=14 (from the script), t_str=2
    BATCH, N_NODE, N_FEATURE, D_HIDE = 2, 16, 4, 32
    D_D, D_E, T_STR, N_BLOCK = 7, 14, 2, 2
    T2 = D_E // T_STR                                    # len_input // time_strides

    key = jax.random.PRNGKey(0)
    kx, kb1, kb2, kwf, kbf = jax.random.split(key, 5)
    x = jax.random.normal(kx, (BATCH, N_NODE, N_FEATURE, D_E), F32)

    # deterministic ring graph (symmetric); edge_weight unused by ASTGCN (see NOTE above)
    src = np.arange(N_NODE)
    dst = (src + 1) % N_NODE
    edge_index = jnp.asarray(
        np.stack([np.concatenate([src, dst]), np.concatenate([dst, src])]), jnp.int32)
    edge_weight = jnp.ones((edge_index.shape[1],), F32)

    blocks = [init_block_params(kb1, N_NODE, N_FEATURE, D_E, D_HIDE, D_HIDE)]
    for _ in range(N_BLOCK - 1):
        blocks.append(init_block_params(kb2, N_NODE, D_HIDE, T2, D_HIDE, D_HIDE))
    params = dict(
        blocks=blocks,
        time_strides=[T_STR] + [1] * (N_BLOCK - 1),
        Wf=jax.random.normal(kwf, (D_D, T2, 1, D_HIDE), F32) * 0.1,
        bf=jax.random.normal(kbf, (1, D_D), F32) * 0.1,
    )

    out = t_astgcn_forward(x, edge_index, edge_weight, params)
    out = jax.block_until_ready(out)
    assert out.shape == (BATCH, N_NODE, D_D), out.shape
    assert bool(jnp.all(jnp.isfinite(out)))
    print("KERNEL_OK")
</pallas_src>

<mosaic_0001>
module attributes {stable_mosaic.version = 11 : i64} {
  func.func @astgcn_block_kernel(%arg0: i32, %arg1: memref<32x56xf32, #tpu.memory_space<vmem>>, %arg2: memref<56x384xf32, #tpu.memory_space<vmem>>, %arg3: memref<2x32xf32, #tpu.memory_space<vmem>>, %arg4: memref<14x56xf32, #tpu.memory_space<vmem>>, %arg5: memref<14x256xf32, #tpu.memory_space<vmem>>, %arg6: memref<16x512xf32, #tpu.memory_space<vmem>>, %arg7: memref<112x448xf32, #tpu.memory_space<vmem>>, %arg8: memref<504x256xf32, #tpu.memory_space<vmem>>, %arg9: memref<256x256xf32, #tpu.memory_space<vmem>>, %arg10: memref<1x1408xf32, #tpu.memory_space<vmem>>, %arg11: memref<32x256xf32, #tpu.memory_space<vmem>>, %arg12: memref<32x112xf32, #tpu.memory_space<vmem>>) attributes {dimension_semantics = [#tpu.dimension_semantics<parallel>], iteration_bounds = array<i64: 1>, scalar_prefetch = 0 : i64, scratch_operands = 1 : i64, tpu.core_type = #tpu.core_type<tc>, window_params = [{transform_indices = @transform_0, window_bounds = array<i64: 32, 56>}, {pipeline_mode = #tpu.pipeline_mode<synchronous>, transform_indices = @transform_1, window_bounds = array<i64: 56, 384>}, {pipeline_mode = #tpu.pipeline_mode<synchronous>, transform_indices = @transform_2, window_bounds = array<i64: 2, 32>}, {pipeline_mode = #tpu.pipeline_mode<synchronous>, transform_indices = @transform_3, window_bounds = array<i64: 14, 56>}, {pipeline_mode = #tpu.pipeline_mode<synchronous>, transform_indices = @transform_4, window_bounds = array<i64: 14, 256>}, {pipeline_mode = #tpu.pipeline_mode<synchronous>, transform_indices = @transform_5, window_bounds = array<i64: 16, 512>}, {pipeline_mode = #tpu.pipeline_mode<synchronous>, transform_indices = @transform_6, window_bounds = array<i64: 112, 448>}, {pipeline_mode = #tpu.pipeline_mode<synchronous>, transform_indices = @transform_7, window_bounds = array<i64: 504, 256>}, {pipeline_mode = #tpu.pipeline_mode<synchronous>, transform_indices = @transform_8, window_bounds = array<i64: 256, 256>}, {pipeline_mode = #tpu.pipeline_mode<synchronous>, transform_indices = @transform_9, window_bounds = array<i64: 1, 1408>}, {transform_indices = @transform_10, window_bounds = array<i64: 32, 256>}]} {
    %c0 = arith.constant 0 : index
    %c0_0 = arith.constant 0 : index
    %0 = vector.load %arg1[%c0, %c0_0] : memref<32x56xf32, #tpu.memory_space<vmem>>, vector<32x56xf32>
    %c0_1 = arith.constant 0 : index
    %c0_2 = arith.constant 0 : index
    %1 = vector.load %arg2[%c0_1, %c0_2] : memref<56x384xf32, #tpu.memory_space<vmem>>, vector<56x28xf32>
    %cst = arith.constant dense<0.000000e+00> : vector<32x28xf32>
    %2 = tpu.matmul %0, %1, %cst {dimension_numbers = #tpu.dot_dimension_numbers<[1], [0], [0], [1], [0, 0, 1, 1], [], []>} : vector<32x56xf32>, vector<56x28xf32>, vector<32x28xf32> -> vector<32x28xf32>
    %c0_3 = arith.constant 0 : index
    %c0_4 = arith.constant 0 : index
    %3 = vector.load %arg3[%c0_3, %c0_4] : memref<2x32xf32, #tpu.memory_space<vmem>>, vector<2x32xf32>
    %cst_5 = arith.constant dense<0.000000e+00> : vector<2x56xf32>
    %4 = tpu.matmul %3, %0, %cst_5 {dimension_numbers = #tpu.dot_dimension_numbers<[1], [0], [0], [1], [0, 0, 1, 1], [], []>} : vector<2x32xf32>, vector<32x56xf32>, vector<2x56xf32> -> vector<2x56xf32>
    %c0_6 = arith.constant 0 : index
    %c0_7 = arith.constant 0 : index
    %5 = vector.load %arg4[%c0_6, %c0_7] : memref<14x56xf32, #tpu.memory_space<vmem>>, vector<14x56xf32>
    %c0_8 = arith.constant 0 : index
    %c128 = arith.constant 128 : index
    %6 = vector.load %arg2[%c0_8, %c128] : memref<56x384xf32, #tpu.memory_space<vmem>>, vector<56x14xf32>
    %c0_9 = arith.constant 0 : index
    %c256 = arith.constant 256 : index
    %7 = vector.load %arg2[%c0_9, %c256] : memref<56x384xf32, #tpu.memory_space<vmem>>, vector<56x16xf32>
    %c0_10 = arith.constant 0 : index
    %c0_11 = arith.constant 0 : index
    %8 = vector.load %arg5[%c0_10, %c0_11] : memref<14x256xf32, #tpu.memory_space<vmem>>, vector<14x14xf32>
    %c0_12 = arith.constant 0 : index
    %c128_13 = arith.constant 128 : index
    %9 = vector.load %arg5[%c0_12, %c128_13] : memref<14x256xf32, #tpu.memory_space<vmem>>, vector<14x14xf32>
    %c0_14 = arith.constant 0 : index
    %c0_15 = arith.constant 0 : index
    %10 = vector.load %arg6[%c0_14, %c0_15] : memref<16x512xf32, #tpu.memory_space<vmem>>, vector<16x16xf32>
    %c0_16 = arith.constant 0 : index
    %c128_17 = arith.constant 128 : index
    %11 = vector.load %arg6[%c0_16, %c128_17] : memref<16x512xf32, #tpu.memory_space<vmem>>, vector<16x16xf32>
    %c0_18 = arith.constant 0 : index
    %c256_19 = arith.constant 256 : index
    %12 = vector.load %arg6[%c0_18, %c256_19] : memref<16x512xf32, #tpu.memory_space<vmem>>, vector<16x16xf32>
    %c0_20 = arith.constant 0 : index
    %c384 = arith.constant 384 : index
    %13 = vector.load %arg6[%c0_20, %c384] : memref<16x512xf32, #tpu.memory_space<vmem>>, vector<16x16xf32>
    %c0_21 = arith.constant 0 : index
    %c0_22 = arith.constant 0 : index
    %14 = vector.load %arg10[%c0_21, %c0_22] : memref<1x1408xf32, #tpu.memory_space<vmem>>, vector<1x14xf32>
    %15 = vector.extract_strided_slice %0 {offsets = [0, 0], sizes = [16, 56], strides = [1, 1]} : vector<32x56xf32> to vector<16x56xf32>
    %16 = vector.extract_strided_slice %4 {offsets = [0, 0], sizes = [1, 56], strides = [1, 1]} : vector<2x56xf32> to vector<1x56xf32>
    %17 = vector.broadcast %16 : vector<1x56xf32> to vector<14x56xf32>
    %18 = arith.mulf %5, %17 : vector<14x56xf32>
    %cst_23 = arith.constant dense<0.000000e+00> : vector<14x16xf32>
    %19 = tpu.matmul %18, %7, %cst_23 {dimension_numbers = #tpu.dot_dimension_numbers<[1], [0], [0], [1], [0, 0, 1, 1], [], []>} : vector<14x56xf32>, vector<56x16xf32>, vector<14x16xf32> -> vector<14x16xf32>
    %20 = vector.extract_strided_slice %2 {offsets = [0, 0], sizes = [16, 14], strides = [1, 1]} : vector<32x28xf32> to vector<16x14xf32>
    %cst_24 = arith.constant dense<0.000000e+00> : vector<14x14xf32>
    %21 = tpu.matmul %19, %20, %cst_24 {dimension_numbers = #tpu.dot_dimension_numbers<[1], [0], [0], [1], [0, 0, 1, 1], [], []>} : vector<14x16xf32>, vector<16x14xf32>, vector<14x14xf32> -> vector<14x14xf32>
    %22 = arith.addf %21, %9 : vector<14x14xf32>
    %23 = arith.negf %22 : vector<14x14xf32>
    %24 = math.exp %23 : vector<14x14xf32>
    %cst_25 = arith.constant 1.000000e+00 : f32
    %25 = vector.broadcast %cst_25 : f32 to vector<14x14xf32>
    %26 = arith.addf %25, %24 : vector<14x14xf32>
    %27 = arith.divf %25, %26 : vector<14x14xf32>
    %cst_26 = arith.constant dense<0.000000e+00> : vector<14x14xf32>
    %28 = tpu.matmul %8, %27, %cst_26 {dimension_numbers = #tpu.dot_dimension_numbers<[1], [0], [0], [1], [0, 0, 1, 1], [], []>} : vector<14x14xf32>, vector<14x14xf32>, vector<14x14xf32> -> vector<14x14xf32>
    %cst_27 = arith.constant dense<0xFF800000> : vector<14xf32>
    %29 = vector.multi_reduction <maximumf>, %28, %cst_27 [0] : vector<14x14xf32> to vector<14xf32>
    %30 = vector.shape_cast %29 : vector<14xf32> to vector<1x14xf32>
    %31 = vector.broadcast %30 : vector<1x14xf32> to vector<14x14xf32>
    %32 = arith.subf %28, %31 : vector<14x14xf32>
    %33 = math.exp %32 : vector<14x14xf32>
    %cst_28 = arith.constant dense<0.000000e+00> : vector<14xf32>
    %34 = vector.multi_reduction <add>, %33, %cst_28 [0] : vector<14x14xf32> to vector<14xf32>
    %35 = vector.shape_cast %34 : vector<14xf32> to vector<1x14xf32>
    %36 = tpu.reciprocal %35 {approx = true} : vector<1x14xf32> -> vector<1x14xf32>
    %37 = vector.broadcast %36 : vector<1x14xf32> to vector<14x14xf32>
    %38 = arith.mulf %33, %37 : vector<14x14xf32>
    %cst_29 = arith.constant dense<0.000000e+00> : vector<1x14xf32>
    %39 = tpu.matmul %14, %38, %cst_29 {dimension_numbers = #tpu.dot_dimension_numbers<[1], [1], [0], [0], [0, 0, 1, 0], [], []>} : vector<1x14xf32>, vector<14x14xf32>, vector<1x14xf32> -> vector<1x14xf32>
    %cst_30 = arith.constant dense<0.000000e+00> : vector<1x56xf32>
    %40 = tpu.matmul %39, %5, %cst_30 {dimension_numbers = #tpu.dot_dimension_numbers<[1], [0], [0], [1], [0, 0, 1, 1], [], []>} : vector<1x14xf32>, vector<14x56xf32>, vector<1x56xf32> -> vector<1x56xf32>
    %41 = vector.broadcast %40 : vector<1x56xf32> to vector<16x56xf32>
    %42 = arith.mulf %15, %41 : vector<16x56xf32>
    %cst_31 = arith.constant dense<0.000000e+00> : vector<16x14xf32>
    %43 = tpu.matmul %42, %6, %cst_31 {dimension_numbers = #tpu.dot_dimension_numbers<[1], [0], [0], [1], [0, 0, 1, 1], [], []>} : vector<16x56xf32>, vector<56x14xf32>, vector<16x14xf32> -> vector<16x14xf32>
    %44 = vector.extract_strided_slice %2 {offsets = [0, 14], sizes = [16, 14], strides = [1, 1]} : vector<32x28xf32> to vector<16x14xf32>
    %cst_32 = arith.constant dense<0.000000e+00> : vector<16x14xf32>
    %45 = tpu.matmul %44, %38, %cst_32 {dimension_numbers = #tpu.dot_dimension_numbers<[1], [0], [0], [1], [0, 0, 1, 1], [], []>} : vector<16x14xf32>, vector<14x14xf32>, vector<16x14xf32> -> vector<16x14xf32>
    %cst_33 = arith.constant dense<0.000000e+00> : vector<16x16xf32>
    %46 = tpu.matmul %43, %45, %cst_33 {dimension_numbers = #tpu.dot_dimension_numbers<[1], [1], [0], [0], [0, 0, 1, 0], [], []>} : vector<16x14xf32>, vector<16x14xf32>, vector<16x16xf32> -> vector<16x16xf32>
    %47 = arith.addf %46, %11 : vector<16x16xf32>
    %48 = arith.negf %47 : vector<16x16xf32>
    %49 = math.exp %48 : vector<16x16xf32>
    %cst_34 = arith.constant 1.000000e+00 : f32
    %50 = vector.broadcast %cst_34 : f32 to vector<16x16xf32>
    %51 = arith.addf %50, %49 : vector<16x16xf32>
    %52 = arith.divf %50, %51 : vector<16x16xf32>
    %cst_35 = arith.constant dense<0.000000e+00> : vector<16x16xf32>
    %53 = tpu.matmul %10, %52, %cst_35 {dimension_numbers = #tpu.dot_dimension_numbers<[1], [0], [0], [1], [0, 0, 1, 1], [], []>} : vector<16x16xf32>, vector<16x16xf32>, vector<16x16xf32> -> vector<16x16xf32>
    %cst_36 = arith.constant dense<0xFF800000> : vector<16xf32>
    %54 = vector.multi_reduction <maximumf>, %53, %cst_36 [0] : vector<16x16xf32> to vector<16xf32>
    %55 = vector.shape_cast %54 : vector<16xf32> to vector<1x16xf32>
    %56 = vector.broadcast %55 : vector<1x16xf32> to vector<16x16xf32>
    %57 = arith.subf %53, %56 : vector<16x16xf32>
    %58 = math.exp %57 : vector<16x16xf32>
    %cst_37 = arith.constant dense<0.000000e+00> : vector<16xf32>
    %59 = vector.multi_reduction <add>, %58, %cst_37 [0] : vector<16x16xf32> to vector<16xf32>
    %60 = vector.shape_cast %59 : vector<16xf32> to vector<1x16xf32>
    %61 = tpu.reciprocal %60 {approx = true} : vector<1x16xf32> -> vector<1x16xf32>
    %62 = vector.broadcast %61 : vector<1x16xf32> to vector<16x16xf32>
    %63 = arith.mulf %58, %62 : vector<16x16xf32>
    %64 = arith.mulf %63, %13 : vector<16x16xf32>
    %cst_38 = arith.constant dense<0.000000e+00> : vector<16xf32>
    %65 = vector.multi_reduction <add>, %64, %cst_38 [1] : vector<16x16xf32> to vector<16xf32>
    %66 = vector.shape_cast %65 : vector<16xf32> to vector<16x1xf32>
    %67 = vector.broadcast %66 : vector<16x1xf32> to vector<16x56xf32>
    %68 = arith.mulf %15, %67 : vector<16x56xf32>
    %c0_39 = arith.constant 0 : index
    %c0_40 = arith.constant 0 : index
    %69 = vector.load %arg12[%c0_39, %c0_40] : memref<32x112xf32, #tpu.memory_space<vmem>>, vector<16x56xf32>
    tpu.vector_store %arg12[%c0_39, %c0_40], %68 {strides = array<i32>} : memref<32x112xf32, #tpu.memory_space<vmem>>, vector<16x56xf32>,
    %70 = arith.mulf %12, %63 : vector<16x16xf32>
    %cst_41 = arith.constant dense<0.000000e+00> : vector<16x56xf32>
    %71 = tpu.matmul %70, %68, %cst_41 {dimension_numbers = #tpu.dot_dimension_numbers<[1], [0], [0], [1], [0, 0, 1, 1], [], []>} : vector<16x16xf32>, vector<16x56xf32>, vector<16x56xf32> -> vector<16x56xf32>
    %c0_42 = arith.constant 0 : index
    %c56 = arith.constant 56 : index
    %72 = vector.load %arg12[%c0_42, %c56] : memref<32x112xf32, #tpu.memory_space<vmem>>, vector<16x56xf32>
    tpu.vector_store %arg12[%c0_42, %c56], %71 {strides = array<i32>} : memref<32x112xf32, #tpu.memory_space<vmem>>, vector<16x56xf32>,
    %73 = vector.extract_strided_slice %0 {offsets = [16, 0], sizes = [16, 56], strides = [1, 1]} : vector<32x56xf32> to vector<16x56xf32>
    %74 = vector.extract_strided_slice %4 {offsets = [1, 0], sizes = [1, 56], strides = [1, 1]} : vector<2x56xf32> to vector<1x56xf32>
    %75 = vector.broadcast %74 : vector<1x56xf32> to vector<14x56xf32>
    %76 = arith.mulf %5, %75 : vector<14x56xf32>
    %cst_43 = arith.constant dense<0.000000e+00> : vector<14x16xf32>
    %77 = tpu.matmul %76, %7, %cst_43 {dimension_numbers = #tpu.dot_dimension_numbers<[1], [0], [0], [1], [0, 0, 1, 1], [], []>} : vector<14x56xf32>, vector<56x16xf32>, vector<14x16xf32> -> vector<14x16xf32>
    %78 = vector.extract_strided_slice %2 {offsets = [16, 0], sizes = [16, 14], strides = [1, 1]} : vector<32x28xf32> to vector<16x14xf32>
    %cst_44 = arith.constant dense<0.000000e+00> : vector<14x14xf32>
    %79 = tpu.matmul %77, %78, %cst_44 {dimension_numbers = #tpu.dot_dimension_numbers<[1], [0], [0], [1], [0, 0, 1, 1], [], []>} : vector<14x16xf32>, vector<16x14xf32>, vector<14x14xf32> -> vector<14x14xf32>
    %80 = arith.addf %79, %9 : vector<14x14xf32>
    %81 = arith.negf %80 : vector<14x14xf32>
    %82 = math.exp %81 : vector<14x14xf32>
    %cst_45 = arith.constant 1.000000e+00 : f32
    %83 = vector.broadcast %cst_45 : f32 to vector<14x14xf32>
    %84 = arith.addf %83, %82 : vector<14x14xf32>
    %85 = arith.divf %83, %84 : vector<14x14xf32>
    %cst_46 = arith.constant dense<0.000000e+00> : vector<14x14xf32>
    %86 = tpu.matmul %8, %85, %cst_46 {dimension_numbers = #tpu.dot_dimension_numbers<[1], [0], [0], [1], [0, 0, 1, 1], [], []>} : vector<14x14xf32>, vector<14x14xf32>, vector<14x14xf32> -> vector<14x14xf32>
    %cst_47 = arith.constant dense<0xFF800000> : vector<14xf32>
    %87 = vector.multi_reduction <maximumf>, %86, %cst_47 [0] : vector<14x14xf32> to vector<14xf32>
    %88 = vector.shape_cast %87 : vector<14xf32> to vector<1x14xf32>
    %89 = vector.broadcast %88 : vector<1x14xf32> to vector<14x14xf32>
    %90 = arith.subf %86, %89 : vector<14x14xf32>
    %91 = math.exp %90 : vector<14x14xf32>
    %cst_48 = arith.constant dense<0.000000e+00> : vector<14xf32>
    %92 = vector.multi_reduction <add>, %91, %cst_48 [0] : vector<14x14xf32> to vector<14xf32>
    %93 = vector.shape_cast %92 : vector<14xf32> to vector<1x14xf32>
    %94 = tpu.reciprocal %93 {approx = true} : vector<1x14xf32> -> vector<1x14xf32>
    %95 = vector.broadcast %94 : vector<1x14xf32> to vector<14x14xf32>
    %96 = arith.mulf %91, %95 : vector<14x14xf32>
    %cst_49 = arith.constant dense<0.000000e+00> : vector<1x14xf32>
    %97 = tpu.matmul %14, %96, %cst_49 {dimension_numbers = #tpu.dot_dimension_numbers<[1], [1], [0], [0], [0, 0, 1, 0], [], []>} : vector<1x14xf32>, vector<14x14xf32>, vector<1x14xf32> -> vector<1x14xf32>
    %cst_50 = arith.constant dense<0.000000e+00> : vector<1x56xf32>
    %98 = tpu.matmul %97, %5, %cst_50 {dimension_numbers = #tpu.dot_dimension_numbers<[1], [0], [0], [1], [0, 0, 1, 1], [], []>} : vector<1x14xf32>, vector<14x56xf32>, vector<1x56xf32> -> vector<1x56xf32>
    %99 = vector.broadcast %98 : vector<1x56xf32> to vector<16x56xf32>
    %100 = arith.mulf %73, %99 : vector<16x56xf32>
    %cst_51 = arith.constant dense<0.000000e+00> : vector<16x14xf32>
    %101 = tpu.matmul %100, %6, %cst_51 {dimension_numbers = #tpu.dot_dimension_numbers<[1], [0], [0], [1], [0, 0, 1, 1], [], []>} : vector<16x56xf32>, vector<56x14xf32>, vector<16x14xf32> -> vector<16x14xf32>
    %102 = vector.extract_strided_slice %2 {offsets = [16, 14], sizes = [16, 14], strides = [1, 1]} : vector<32x28xf32> to vector<16x14xf32>
    %cst_52 = arith.constant dense<0.000000e+00> : vector<16x14xf32>
    %103 = tpu.matmul %102, %96, %cst_52 {dimension_numbers = #tpu.dot_dimension_numbers<[1], [0], [0], [1], [0, 0, 1, 1], [], []>} : vector<16x14xf32>, vector<14x14xf32>, vector<16x14xf32> -> vector<16x14xf32>
    %cst_53 = arith.constant dense<0.000000e+00> : vector<16x16xf32>
    %104 = tpu.matmul %101, %103, %cst_53 {dimension_numbers = #tpu.dot_dimension_numbers<[1], [1], [0], [0], [0, 0, 1, 0], [], []>} : vector<16x14xf32>, vector<16x14xf32>, vector<16x16xf32> -> vector<16x16xf32>
    %105 = arith.addf %104, %11 : vector<16x16xf32>
    %106 = arith.negf %105 : vector<16x16xf32>
    %107 = math.exp %106 : vector<16x16xf32>
    %cst_54 = arith.constant 1.000000e+00 : f32
    %108 = vector.broadcast %cst_54 : f32 to vector<16x16xf32>
    %109 = arith.addf %108, %107 : vector<16x16xf32>
    %110 = arith.divf %108, %109 : vector<16x16xf32>
    %cst_55 = arith.constant dense<0.000000e+00> : vector<16x16xf32>
    %111 = tpu.matmul %10, %110, %cst_55 {dimension_numbers = #tpu.dot_dimension_numbers<[1], [0], [0], [1], [0, 0, 1, 1], [], []>} : vector<16x16xf32>, vector<16x16xf32>, vector<16x16xf32> -> vector<16x16xf32>
    %cst_56 = arith.constant dense<0xFF800000> : vector<16xf32>
    %112 = vector.multi_reduction <maximumf>, %111, %cst_56 [0] : vector<16x16xf32> to vector<16xf32>
    %113 = vector.shape_cast %112 : vector<16xf32> to vector<1x16xf32>
    %114 = vector.broadcast %113 : vector<1x16xf32> to vector<16x16xf32>
    %115 = arith.subf %111, %114 : vector<16x16xf32>
    %116 = math.exp %115 : vector<16x16xf32>
    %cst_57 = arith.constant dense<0.000000e+00> : vector<16xf32>
    %117 = vector.multi_reduction <add>, %116, %cst_57 [0] : vector<16x16xf32> to vector<16xf32>
    %118 = vector.shape_cast %117 : vector<16xf32> to vector<1x16xf32>
    %119 = tpu.reciprocal %118 {approx = true} : vector<1x16xf32> -> vector<1x16xf32>
    %120 = vector.broadcast %119 : vector<1x16xf32> to vector<16x16xf32>
    %121 = arith.mulf %116, %120 : vector<16x16xf32>
    %122 = arith.mulf %121, %13 : vector<16x16xf32>
    %cst_58 = arith.constant dense<0.000000e+00> : vector<16xf32>
    %123 = vector.multi_reduction <add>, %122, %cst_58 [1] : vector<16x16xf32> to vector<16xf32>
    %124 = vector.shape_cast %123 : vector<16xf32> to vector<16x1xf32>
    %125 = vector.broadcast %124 : vector<16x1xf32> to vector<16x56xf32>
    %126 = arith.mulf %73, %125 : vector<16x56xf32>
    %c16 = arith.constant 16 : index
    %c0_59 = arith.constant 0 : index
    %127 = vector.load %arg12[%c16, %c0_59] : memref<32x112xf32, #tpu.memory_space<vmem>>, vector<16x56xf32>
    tpu.vector_store %arg12[%c16, %c0_59], %126 {strides = array<i32>} : memref<32x112xf32, #tpu.memory_space<vmem>>, vector<16x56xf32>,
    %128 = arith.mulf %12, %121 : vector<16x16xf32>
    %cst_60 = arith.constant dense<0.000000e+00> : vector<16x56xf32>
    %129 = tpu.matmul %128, %126, %cst_60 {dimension_numbers = #tpu.dot_dimension_numbers<[1], [0], [0], [1], [0, 0, 1, 1], [], []>} : vector<16x16xf32>, vector<16x56xf32>, vector<16x56xf32> -> vector<16x56xf32>
    %c16_61 = arith.constant 16 : index
    %c56_62 = arith.constant 56 : index
    %130 = vector.load %arg12[%c16_61, %c56_62] : memref<32x112xf32, #tpu.memory_space<vmem>>, vector<16x56xf32>
    tpu.vector_store %arg12[%c16_61, %c56_62], %129 {strides = array<i32>} : memref<32x112xf32, #tpu.memory_space<vmem>>, vector<16x56xf32>,
    %c0_63 = arith.constant 0 : index
    %c128_64 = arith.constant 128 : index
    %131 = vector.load %arg10[%c0_63, %c128_64] : memref<1x1408xf32, #tpu.memory_space<vmem>>, vector<1x448xf32>
    %c0_65 = arith.constant 0 : index
    %c640 = arith.constant 640 : index
    %132 = vector.load %arg10[%c0_65, %c640] : memref<1x1408xf32, #tpu.memory_space<vmem>>, vector<1x256xf32>
    %c0_66 = arith.constant 0 : index
    %c896 = arith.constant 896 : index
    %133 = vector.load %arg10[%c0_66, %c896] : memref<1x1408xf32, #tpu.memory_space<vmem>>, vector<1x256xf32>
    %c0_67 = arith.constant 0 : index
    %c1152 = arith.constant 1152 : index
    %134 = vector.load %arg10[%c0_67, %c1152] : memref<1x1408xf32, #tpu.memory_space<vmem>>, vector<1x256xf32>
    %c0_68 = arith.constant 0 : index
    %c0_69 = arith.constant 0 : index
    %135 = vector.load %arg12[%c0_68, %c0_69] : memref<32x112xf32, #tpu.memory_space<vmem>>, vector<32x112xf32>
    %c0_70 = arith.constant 0 : index
    %c0_71 = arith.constant 0 : index
    %136 = vector.load %arg7[%c0_70, %c0_71] : memref<112x448xf32, #tpu.memory_space<vmem>>, vector<112x448xf32>
    %cst_72 = arith.constant dense<0.000000e+00> : vector<32x448xf32>
    %137 = tpu.matmul %135, %136, %cst_72 {dimension_numbers = #tpu.dot_dimension_numbers<[1], [0], [0], [1], [0, 0, 1, 1], [], []>} : vector<32x112xf32>, vector<112x448xf32>, vector<32x448xf32> -> vector<32x448xf32>
    %138 = vector.broadcast %131 : vector<1x448xf32> to vector<32x448xf32>
    %139 = arith.addf %137, %138 : vector<32x448xf32>
    %cst_73 = arith.constant 0.000000e+00 : f32
    %140 = vector.broadcast %cst_73 : f32 to vector<32x448xf32>
    %141 = arith.maximumf %139, %140 : vector<32x448xf32>
    %c0_74 = arith.constant 0 : index
    %c0_75 = arith.constant 0 : index
    %142 = vector.load %arg8[%c0_74, %c0_75] : memref<504x256xf32, #tpu.memory_space<vmem>>, vector<448x256xf32>
    %cst_76 = arith.constant dense<0.000000e+00> : vector<32x256xf32>
    %143 = tpu.matmul %141, %142, %cst_76 {dimension_numbers = #tpu.dot_dimension_numbers<[1], [0], [0], [1], [0, 0, 1, 1], [], []>} : vector<32x448xf32>, vector<448x256xf32>, vector<32x256xf32> -> vector<32x256xf32>
    %c448 = arith.constant 448 : index
    %c0_77 = arith.constant 0 : index
    %144 = vector.load %arg8[%c448, %c0_77] : memref<504x256xf32, #tpu.memory_space<vmem>>, vector<56x256xf32>
    %cst_78 = arith.constant dense<0.000000e+00> : vector<32x256xf32>
    %145 = tpu.matmul %0, %144, %cst_78 {dimension_numbers = #tpu.dot_dimension_numbers<[1], [0], [0], [1], [0, 0, 1, 1], [], []>} : vector<32x56xf32>, vector<56x256xf32>, vector<32x256xf32> -> vector<32x256xf32>
    %146 = arith.addf %143, %145 : vector<32x256xf32>
    %147 = vector.broadcast %132 : vector<1x256xf32> to vector<32x256xf32>
    %148 = arith.addf %146, %147 : vector<32x256xf32>
    %cst_79 = arith.constant 0.000000e+00 : f32
    %149 = vector.broadcast %cst_79 : f32 to vector<32x256xf32>
    %150 = arith.maximumf %148, %149 : vector<32x256xf32>
    %c0_80 = arith.constant 0 : index
    %c0_81 = arith.constant 0 : index
    %151 = vector.load %arg9[%c0_80, %c0_81] : memref<256x256xf32, #tpu.memory_space<vmem>>, vector<256x256xf32>
    %cst_82 = arith.constant dense<0.000000e+00> : vector<32x256xf32>
    %152 = tpu.matmul %150, %151, %cst_82 {dimension_numbers = #tpu.dot_dimension_numbers<[1], [0], [0], [1], [0, 0, 1, 1], [], []>} : vector<32x256xf32>, vector<256x256xf32>, vector<32x256xf32> -> vector<32x256xf32>
    %153 = arith.subf %150, %152 : vector<32x256xf32>
    %154 = arith.mulf %153, %153 : vector<32x256xf32>
    %c0_83 = arith.constant 0 : index
    %c0_84 = arith.constant 0 : index
    %155 = vector.load %arg9[%c0_83, %c0_84] : memref<256x256xf32, #tpu.memory_space<vmem>>, vector<256x256xf32>
    %cst_85 = arith.constant dense<0.000000e+00> : vector<32x256xf32>
    %156 = tpu.matmul %154, %155, %cst_85 {dimension_numbers = #tpu.dot_dimension_numbers<[1], [0], [0], [1], [0, 0, 1, 1], [], []>} : vector<32x256xf32>, vector<256x256xf32>, vector<32x256xf32> -> vector<32x256xf32>
    %cst_86 = arith.constant 9.99999974E-6 : f32
    %157 = vector.broadcast %cst_86 : f32 to vector<32x256xf32>
    %158 = arith.addf %156, %157 : vector<32x256xf32>
    %159 = math.rsqrt %158 : vector<32x256xf32>
    %160 = arith.mulf %153, %159 : vector<32x256xf32>
    %161 = vector.broadcast %133 : vector<1x256xf32> to vector<32x256xf32>
    %162 = arith.mulf %160, %161 : vector<32x256xf32>
    %163 = vector.broadcast %134 : vector<1x256xf32> to vector<32x256xf32>
    %164 = arith.addf %162, %163 : vector<32x256xf32>
    %c0_87 = arith.constant 0 : index
    %c0_88 = arith.constant 0 : index
    %165 = vector.load %arg11[%c0_87, %c0_88] : memref<32x256xf32, #tpu.memory_space<vmem>>, vector<32x256xf32>
    tpu.vector_store %arg11[%c0_87, %c0_88], %164 {strides = array<i32>} : memref<32x256xf32, #tpu.memory_space<vmem>>, vector<32x256xf32>,
    return
  }
  func.func @transform_0(%arg0: i32) -> (i32, i32) {
    %c0_i32 = arith.constant 0 : i32
    %c0_i32_0 = arith.constant 0 : i32
    return %arg0, %c0_i32 : i32, i32
  }
  func.func @transform_1(%arg0: i32) -> (i32, i32) {
    %c0_i32 = arith.constant 0 : i32
    %c0_i32_0 = arith.constant 0 : i32
    %c0_i32_1 = arith.constant 0 : i32
    return %c0_i32, %c0_i32_0 : i32, i32
  }
  func.func @transform_2(%arg0: i32) -> (i32, i32) {
    %c0_i32 = arith.constant 0 : i32
    %c0_i32_0 = arith.constant 0 : i32
    %c0_i32_1 = arith.constant 0 : i32
    return %c0_i32, %c0_i32_0 : i32, i32
  }
  func.func @transform_3(%arg0: i32) -> (i32, i32) {
    %c0_i32 = arith.constant 0 : i32
    %c0_i32_0 = arith.constant 0 : i32
    %c0_i32_1 = arith.constant 0 : i32
    return %c0_i32, %c0_i32_0 : i32, i32
  }
  func.func @transform_4(%arg0: i32) -> (i32, i32) {
    %c0_i32 = arith.constant 0 : i32
    %c0_i32_0 = arith.constant 0 : i32
    %c0_i32_1 = arith.constant 0 : i32
    return %c0_i32, %c0_i32_0 : i32, i32
  }
  func.func @transform_5(%arg0: i32) -> (i32, i32) {
    %c0_i32 = arith.constant 0 : i32
    %c0_i32_0 = arith.constant 0 : i32
    %c0_i32_1 = arith.constant 0 : i32
    return %c0_i32, %c0_i32_0 : i32, i32
  }
  func.func @transform_6(%arg0: i32) -> (i32, i32) {
    %c0_i32 = arith.constant 0 : i32
    %c0_i32_0 = arith.constant 0 : i32
    %c0_i32_1 = arith.constant 0 : i32
    return %c0_i32, %c0_i32_0 : i32, i32
  }
  func.func @transform_7(%arg0: i32) -> (i32, i32) {
    %c0_i32 = arith.constant 0 : i32
    %c0_i32_0 = arith.constant 0 : i32
    %c0_i32_1 = arith.constant 0 : i32
    return %c0_i32, %c0_i32_0 : i32, i32
  }
  func.func @transform_8(%arg0: i32) -> (i32, i32) {
    %c0_i32 = arith.constant 0 : i32
    %c0_i32_0 = arith.constant 0 : i32
    %c0_i32_1 = arith.constant 0 : i32
    return %c0_i32, %c0_i32_0 : i32, i32
  }
  func.func @transform_9(%arg0: i32) -> (i32, i32) {
    %c0_i32 = arith.constant 0 : i32
    %c0_i32_0 = arith.constant 0 : i32
    %c0_i32_1 = arith.constant 0 : i32
    return %c0_i32, %c0_i32_0 : i32, i32
  }
  func.func @transform_10(%arg0: i32) -> (i32, i32) {
    %c0_i32 = arith.constant 0 : i32
    %c0_i32_0 = arith.constant 0 : i32
    return %arg0, %c0_i32 : i32, i32
  }
}

</mosaic_0001>

<llo_original>
// kernel: tpu_custom_call.1
$region0: #{tpu_custom_call.1}
  #allocation0 [shape = 'u32[]', space=smem, size = 0x4, offset = 0x4, fixed_abs, tag = 'smem constant byte address 0x4 - core index']
  #allocation1 [shape = 'u32[144,128]{1,0:T(1,128)}', space=vmem, size = 0x12000, scoped, tag = 'internal scratch']
  #allocation2 [shape = 'f32[32,112]{1,0:T(8,128)}', space=vmem, size = 0x4000, scoped, tag = 'scratch operand']
  %s0 = inlined_call_operand.hbm [shape: f32[32,56], index: 0, kind: input, shape index: {}]
  %s1 = inlined_call_operand.hbm [shape: f32[56,384], index: 1, kind: input, shape index: {}]
  %s2 = inlined_call_operand.vmem [shape: f32[2,32], index: 2, kind: input, shape index: {}]
  %s3 = inlined_call_operand.hbm [shape: f32[14,56], index: 3, kind: input, shape index: {}]
  %s4 = inlined_call_operand.hbm [shape: f32[14,256], index: 4, kind: input, shape index: {}]
  %s5 = inlined_call_operand.hbm [shape: f32[16,512], index: 5, kind: input, shape index: {}]
  %s6 = inlined_call_operand.hbm [shape: f32[112,448], index: 6, kind: input, shape index: {}]
  %s7 = inlined_call_operand.hbm [shape: f32[504,256], index: 7, kind: input, shape index: {}]
  %s8 = inlined_call_operand.hbm [shape: f32[256,256], index: 8, kind: input, shape index: {}]
  %s9 = inlined_call_operand.vmem [shape: f32[1,1408], index: 9, kind: input, shape index: {}]
  %s10 = inlined_call_operand.hbm [shape: f32[32,256], index: 10, kind: output, shape index: {}]
  %s11 = sld [smem:[#allocation0]]
  $region82: #{tpu_custom_call.1} parent=0
    _
  %s13 = ssub.s32 1, %s11
  %s14 = scalar_select 0, %s13, %s11
  $region1: #{tpu_custom_call.1} parent=0
    #allocation3 [shape = 'u8[16384]{0}', space=vmem, size = 0x4000, scoped, tag = 'input window, operand 0, single buffered']
    #allocation4 [shape = 's32[1]{0}', space=sflag, size = 0x4, scoped, tag = 'scoped memory for tpu_custom_call.1']
    #allocation5 [shape = 's32[1]{0}', space=sflag, size = 0x4, scoped, tag = 'scoped memory for tpu_custom_call.1']
    #allocation6 [shape = 'u8[86016]{0}', space=vmem, size = 0x15000, scoped, tag = 'input window, operand 1, single buffered']
    #allocation7 [shape = 's32[1]{0}', space=sflag, size = 0x4, scoped, tag = 'scoped memory for tpu_custom_call.1']
    #allocation8 [shape = 'u8[8192]{0}', space=vmem, size = 0x2000, scoped, tag = 'input window, operand 3, single buffered']
    #allocation9 [shape = 'u8[16384]{0}', space=vmem, size = 0x4000, scoped, tag = 'input window, operand 4, single buffered']
    #allocation10 [shape = 's32[1]{0}', space=sflag, size = 0x4, scoped, tag = 'scoped memory for tpu_custom_call.1']
    #allocation11 [shape = 'u8[32768]{0}', space=vmem, size = 0x8000, scoped, tag = 'input window, operand 5, single buffered']
    #allocation12 [shape = 'u8[229376]{0}', space=vmem, size = 0x38000, scoped, tag = 'input window, operand 6, single buffered']
    #allocation13 [shape = 's32[1]{0}', space=sflag, size = 0x4, scoped, tag = 'scoped memory for tpu_custom_call.1']
    #allocation14 [shape = 'u8[516096]{0}', space=vmem, size = 0x7e000, scoped, tag = 'input window, operand 7, single buffered']
    #allocation15 [shape = 'u8[262144]{0}', space=vmem, size = 0x40000, scoped, tag = 'input window, operand 8, single buffered']
    #allocation16 [shape = 's32[1]{0}', space=sflag, size = 0x4, scoped, tag = 'scoped memory for tpu_custom_call.1']
    #allocation17 [shape = 'u8[32768]{0}', space=vmem, size = 0x8000, scoped, tag = 'output window, operand 0, single buffered']
    %15 = vsyncpa [#allocation4], 0
    %16 = vsyncpa [#allocation7], 0
    %17 = vsyncpa [#allocation10], 0
    %18 = vsyncpa [#allocation13], 0
    %19 = vsyncpa [#allocation16], 0
    %20 = vsyncpa [#allocation5], 0
    // Predicated region
    $region2: #{tpu_custom_call.1} parent=1 // pred_check
      _
    $region3: #{tpu_custom_call.1} parent=1 // pred_check_branch
      %22 = sbr.rel (0) target = $region5
    $region4: #{tpu_custom_call.1} parent=1 // pred_region
      %s24 = ssub.s32 512, 512
      %25 = vsyncadd [#allocation4], %s24
      %s26 = sshll.u32 [#allocation3], 4
      %s27 = int_to_ptr.vmem [resolvable:$true] %s26
      %32 = dma.hbm_to_vmem [thread:$0]  %s0, 512, %s27, [#allocation4], 128, 128, 8
    $region5: #{tpu_custom_call.1} parent=1 // pred_fallthru
      _
    // Predicated region
    $region6: #{tpu_custom_call.1} parent=1 // pred_check
      _
    $region7: #{tpu_custom_call.1} parent=1 // pred_check_branch
      %34 = sbr.rel (0) target = $region9
    $region8: #{tpu_custom_call.1} parent=1 // pred_region
      %s36 = ssub.s32 2688, 2688
      %37 = vsyncadd [#allocation7], %s36
      %s38 = sshll.u32 [#allocation6], 4
      %s39 = int_to_ptr.vmem [resolvable:$true] %s38
      %44 = dma.hbm_to_vmem [thread:$0]  %s1, 2688, %s39, [#allocation7], 384, 384, 24
    $region9: #{tpu_custom_call.1} parent=1 // pred_fallthru
      _
    // Predicated region
    $region10: #{tpu_custom_call.1} parent=1 // pred_check
      _
    $region11: #{tpu_custom_call.1} parent=1 // pred_check_branch
      %46 = sbr.rel (0) target = $region13
    $region12: #{tpu_custom_call.1} parent=1 // pred_region
      _
    $region13: #{tpu_custom_call.1} parent=1 // pred_fallthru
      _
    // Predicated region
    $region14: #{tpu_custom_call.1} parent=1 // pred_check
      _
    $region15: #{tpu_custom_call.1} parent=1 // pred_check_branch
      %48 = sbr.rel (0) target = $region17
    $region16: #{tpu_custom_call.1} parent=1 // pred_region
      %s50 = ssub.s32 256, 256
      %51 = vsyncadd [#allocation7], %s50
      %s52 = sshll.u32 [#allocation8], 4
      %s53 = int_to_ptr.vmem [resolvable:$true] %s52
      %58 = dma.hbm_to_vmem [thread:$0]  %s3, 256, %s53, [#allocation7], 128, 128, 8
    $region17: #{tpu_custom_call.1} parent=1 // pred_fallthru
      _
    // Predicated region
    $region18: #{tpu_custom_call.1} parent=1 // pred_check
      _
    $region19: #{tpu_custom_call.1} parent=1 // pred_check_branch
      %60 = sbr.rel (0) target = $region21
    $region20: #{tpu_custom_call.1} parent=1 // pred_region
      %s62 = ssub.s32 512, 512
      %63 = vsyncadd [#allocation10], %s62
      %s64 = sshll.u32 [#allocation9], 4
      %s65 = int_to_ptr.vmem [resolvable:$true] %s64
      %70 = dma.hbm_to_vmem [thread:$0]  %s4, 512, %s65, [#allocation10], 256, 256, 16
    $region21: #{tpu_custom_call.1} parent=1 // pred_fallthru
      _
    // Predicated region
    $region22: #{tpu_custom_call.1} parent=1 // pred_check
      _
    $region23: #{tpu_custom_call.1} parent=1 // pred_check_branch
      %72 = sbr.rel (0) target = $region25
    $region24: #{tpu_custom_call.1} parent=1 // pred_region
      %s74 = ssub.s32 1024, 1024
      %75 = vsyncadd [#allocation10], %s74
      %s76 = sshll.u32 [#allocation11], 4
      %s77 = int_to_ptr.vmem [resolvable:$true] %s76
      %82 = dma.hbm_to_vmem [thread:$0]  %s5, 1024, %s77, [#allocation10], 512, 512, 32
    $region25: #{tpu_custom_call.1} parent=1 // pred_fallthru
      _
    // Predicated region
    $region26: #{tpu_custom_call.1} parent=1 // pred_check
      _
    $region27: #{tpu_custom_call.1} parent=1 // pred_check_branch
      %84 = sbr.rel (0) target = $region29
    $region28: #{tpu_custom_call.1} parent=1 // pred_region
      %s86 = ssub.s32 7168, 7168
      %87 = vsyncadd [#allocation13], %s86
      %s88 = sshll.u32 [#allocation12], 4
      %s89 = int_to_ptr.vmem [resolvable:$true] %s88
      %94 = dma.hbm_to_vmem [thread:$0]  %s6, 7168, %s89, [#allocation13], 512, 512, 32
    $region29: #{tpu_custom_call.1} parent=1 // pred_fallthru
      _
    // Predicated region
    $region30: #{tpu_custom_call.1} parent=1 // pred_check
      _
    $region31: #{tpu_custom_call.1} parent=1 // pred_check_branch
      %96 = sbr.rel (0) target = $region33
    $region32: #{tpu_custom_call.1} parent=1 // pred_region
      %s98 = ssub.s32 16128, 16128
      %99 = vsyncadd [#allocation13], %s98
      %s100 = sshll.u32 [#allocation14], 4
      %s101 = int_to_ptr.vmem [resolvable:$true] %s100
      %106 = dma.hbm_to_vmem [thread:$0]  %s7, 16128, %s101, [#allocation13], 256, 256, 16
    $region33: #{tpu_custom_call.1} parent=1 // pred_fallthru
      _
    // Predicated region
    $region34: #{tpu_custom_call.1} parent=1 // pred_check
      _
    $region35: #{tpu_custom_call.1} parent=1 // pred_check_branch
      %108 = sbr.rel (0) target = $region37
    $region36: #{tpu_custom_call.1} parent=1 // pred_region
      %s110 = ssub.s32 8192, 8192
      %111 = vsyncadd [#allocation16], %s110
      %s112 = sshll.u32 [#allocation15], 4
      %s113 = int_to_ptr.vmem [resolvable:$true] %s112
      %118 = dma.hbm_to_vmem [thread:$0]  %s8, 8192, %s113, [#allocation16], 256, 256, 16
    $region37: #{tpu_custom_call.1} parent=1 // pred_fallthru
      _
    // Predicated region
    $region38: #{tpu_custom_call.1} parent=1 // pred_check
      _
    $region39: #{tpu_custom_call.1} parent=1 // pred_check_branch
      %120 = sbr.rel (0) target = $region41
    $region40: #{tpu_custom_call.1} parent=1 // pred_region
      _
    $region41: #{tpu_custom_call.1} parent=1 // pred_fallthru
      _
    // Predicated region
    $region42: #{tpu_custom_call.1} parent=1 // pred_check
      _
    $region43: #{tpu_custom_call.1} parent=1 // pred_check_branch
      %122 = sbr.rel (0) target = $region45
    $region44: #{tpu_custom_call.1} parent=1 // pred_region
      %123 = dma.done [#allocation4], 512
    $region45: #{tpu_custom_call.1} parent=1 // pred_fallthru
      _
    // Predicated region
    $region46: #{tpu_custom_call.1} parent=1 // pred_check
      _
    $region47: #{tpu_custom_call.1} parent=1 // pred_check_branch
      %125 = sbr.rel (0) target = $region49
    $region48: #{tpu_custom_call.1} parent=1 // pred_region
      %126 = dma.done [#allocation7], 2688
    $region49: #{tpu_custom_call.1} parent=1 // pred_fallthru
      _
    // Predicated region
    $region50: #{tpu_custom_call.1} parent=1 // pred_check
      _
    $region51: #{tpu_custom_call.1} parent=1 // pred_check_branch
      %128 = sbr.rel (0) target = $region53
    $region52: #{tpu_custom_call.1} parent=1 // pred_region
      %129 = dma.done [#allocation7], 256
    $region53: #{tpu_custom_call.1} parent=1 // pred_fallthru
      _
    // Predicated region
    $region54: #{tpu_custom_call.1} parent=1 // pred_check
      _
    $region55: #{tpu_custom_call.1} parent=1 // pred_check_branch
      %131 = sbr.rel (0) target = $region57
    $region56: #{tpu_custom_call.1} parent=1 // pred_region
      %132 = dma.done [#allocation10], 512
    $region57: #{tpu_custom_call.1} parent=1 // pred_fallthru
      _
    // Predicated region
    $region58: #{tpu_custom_call.1} parent=1 // pred_check
      _
    $region59: #{tpu_custom_call.1} parent=1 // pred_check_branch
      %134 = sbr.rel (0) target = $region61
    $region60: #{tpu_custom_call.1} parent=1 // pred_region
      %135 = dma.done [#allocation10], 1024
    $region61: #{tpu_custom_call.1} parent=1 // pred_fallthru
      _
    // Predicated region
    $region62: #{tpu_custom_call.1} parent=1 // pred_check
      _
    $region63: #{tpu_custom_call.1} parent=1 // pred_check_branch
      %137 = sbr.rel (0) target = $region65
    $region64: #{tpu_custom_call.1} parent=1 // pred_region
      %138 = dma.done [#allocation13], 7168
    $region65: #{tpu_custom_call.1} parent=1 // pred_fallthru
      _
    // Predicated region
    $region66: #{tpu_custom_call.1} parent=1 // pred_check
      _
    $region67: #{tpu_custom_call.1} parent=1 // pred_check_branch
      %140 = sbr.rel (0) target = $region69
    $region68: #{tpu_custom_call.1} parent=1 // pred_region
      %141 = dma.done [#allocation13], 16128
    $region69: #{tpu_custom_call.1} parent=1 // pred_fallthru
      _
    // Predicated region
    $region70: #{tpu_custom_call.1} parent=1 // pred_check
      _
    $region71: #{tpu_custom_call.1} parent=1 // pred_check_branch
      %143 = sbr.rel (0) target = $region73
    $region72: #{tpu_custom_call.1} parent=1 // pred_region
      %144 = dma.done [#allocation16], 8192
    $region73: #{tpu_custom_call.1} parent=1 // pred_fallthru
      _
    %v145 = vld [vmem:[#allocation3] sm:$0xff]
    %v146 = vld [vmem:[#allocation3 + $0x8] sm:$0xff]
    %v147 = vld [vmem:[#allocation3 + $0x10] sm:$0xff]
    %v148 = vld [vmem:[#allocation3 + $0x18] sm:$0xff]
    %v149 = vld [vmem:[#allocation6] sm:$0xff]
    %v150 = vld [vmem:[#allocation6 + $0x18] sm:$0xff]
    %v151 = vld [vmem:[#allocation6 + $0x30] sm:$0xff]
    %v152 = vld [vmem:[#allocation6 + $0x48] sm:$0xff]
    %v153 = vld [vmem:[#allocation6 + $0x60] sm:$0xff]
    %v154 = vld [vmem:[#allocation6 + $0x78] sm:$0xff]
    %v155 = vld [vmem:[#allocation6 + $0x90] sm:$0xff]
    %vm156 = vcmask 457728
    %v158 = vsel %vm156, %v145, 0
    %v161 = vsel %vm156, %v146, 0
    %v164 = vsel %vm156, %v147, 0
    %v167 = vsel %vm156, %v148, 0
    %169 = vmatprep.subr.mxu0 0.0
    %170 = vmatpush1.msra.mxu0 %v149
    %171 = vmatprep.subr.mxu0 0.0
    %172 = vmatpush1.msra.mxu0 %v150
    %173 = vmatprep.subr.mxu0 0.0
    %174 = vmatpush1.msra.mxu0 %v151
    %175 = vmatprep.subr.mxu0 0.0
    %176 = vmatpush1.msra.mxu0 %v152
    %177 = vmatprep.subr.mxu0 0.0
    %178 = vmatpush1.msra.mxu0 %v153
    %179 = vmatprep.subr.mxu0 0.0
    %180 = vmatpush1.msra.mxu0 %v154
    %181 = vmatprep.subr.mxu0 0.0
    %182 = vmatpush1.msra.mxu0 %v155
    %183 = vmatprep.subr.mxu0 0.0
    %184 = vmatpush1.msra.mxu0 0.0
    %185 = vmatprep.subr.mxu0 0.0
    %186 = vmatpush1.msra.mxu0 0.0
    %187 = vmatprep.subr.mxu0 0.0
    %188 = vmatpush1.msra.mxu0 0.0
    %189 = vmatprep.subr.mxu0 0.0
    %190 = vmatpush1.msra.mxu0 0.0
    %191 = vmatprep.subr.mxu0 0.0
    %192 = vmatpush1.msra.mxu0 0.0
    %193 = vmatprep.subr.mxu0 0.0
    %194 = vmatpush1.msra.mxu0 0.0
    %195 = vmatprep.subr.mxu0 0.0
    %196 = vmatpush1.msra.mxu0 0.0
    %197 = vmatprep.subr.mxu0 0.0
    %198 = vmatpush1.msra.mxu0 0.0
    %199 = vmatprep.subr.mxu0 0.0
    %200 = vmatpush1.msra.mxu0 0.0
    %201 = vmatprep.subr.mxu0 0.0
    %202 = vmatpush1.msra.mxu0 0.0
    %203 = vmatprep.subr.mxu0 0.0
    %204 = vmatpush1.msra.mxu0 0.0
    %205 = vmatprep.subr.mxu0 0.0
    %206 = vmatpush1.msra.mxu0 0.0
    %207 = vmatprep.subr.mxu0 0.0
    %208 = vmatpush1.msra.mxu0 0.0
    %209 = vmatprep.subr.mxu0 0.0
    %210 = vmatpush1.msra.mxu0 0.0
    %211 = vmatprep.subr.mxu0 0.0
    %212 = vmatpush1.msra.mxu0 0.0
    %213 = vmatprep.subr.mxu0 0.0
    %214 = vmatpush1.msra.mxu0 0.0
    %215 = vmatprep.subr.mxu0 0.0
    %216 = vmatpush1.msra.mxu0 0.0
    %217 = vmatprep.subr.mxu0 0.0
    %218 = vmatpush1.msra.mxu0 0.0
    %219 = vmatprep.subr.mxu0 0.0
    %220 = vmatpush1.msra.mxu0 0.0
    %221 = vmatprep.subr.mxu0 0.0
    %222 = vmatpush1.msra.mxu0 0.0
    %223 = vmatprep.subr.mxu0 0.0
    %224 = vmatpush1.msra.mxu0 0.0
    %225 = vmatprep.subr.mxu0 0.0
    %226 = vmatpush1.msra.mxu0 0.0
    %227 = vmatprep.subr.mxu0 0.0
    %228 = vmatpush1.msra.mxu0 0.0
    %229 = vmatprep.subr.mxu0 0.0
    %230 = vmatpush1.msra.mxu0 0.0
    %231 = vmatprep.subr.mxu0 0.0
    %232 = vmatpush1.msra.mxu0 0.0
    %233 = vmatprep.mubr.f32.mxu0 0.0
    %234 = vmatmul.mubr.f32.gmra.mrb[0].mxu0 %v158
    %v235 = vpop.f32.mrb[0].mxu0
    %v236 = vadd.f32 0.0, %v235
    %v237 = vpop.f32.mrb[0].mxu0
    %238 = vmatprep.mubr.f32.mxu0 0.0
    %239 = vmatmul.mubr.f32.gmra.mrb[0].mxu0 %v161
    %v240 = vpop.f32.mrb[0].mxu0
    %v241 = vadd.f32 0.0, %v240
    %v242 = vpop.f32.mrb[0].mxu0
    %243 = vmatprep.mubr.f32.mxu0 0.0
    %244 = vmatmul.mubr.f32.gmra.mrb[0].mxu0 %v164
    %v245 = vpop.f32.mrb[0].mxu0
    %v246 = vadd.f32 0.0, %v245
    %v247 = vpop.f32.mrb[0].mxu0
    %248 = vmatprep.mubr.f32.mxu0 0.0
    %249 = vmatmul.mubr.f32.gmra.mrb[0].mxu0 %v167
    %v250 = vpop.f32.mrb[0].mxu0
    %v251 = vadd.f32 0.0, %v250
    %v252 = vpop.f32.mrb[0].mxu0
    %253 = vdwg.mxu0
    %v254 = vld [vmem:[%s2] sm:$0x3]
    %vm255 = vcmask 261120
    %v257 = vsel %vm255, %v254, 0
    %259 = vmatprep.subr.mxu0 0.0
    %260 = vmatpush1.msra.mxu0 %v145
    %261 = vmatprep.subr.mxu0 0.0
    %262 = vmatpush1.msra.mxu0 %v146
    %263 = vmatprep.subr.mxu0 0.0
    %264 = vmatpush1.msra.mxu0 %v147
    %265 = vmatprep.subr.mxu0 0.0
    %266 = vmatpush1.msra.mxu0 %v148
    %267 = vmatprep.subr.mxu0 0.0
    %268 = vmatpush1.msra.mxu0 0.0
    %269 = vmatprep.subr.mxu0 0.0
    %270 = vmatpush1.msra.mxu0 0.0
    %271 = vmatprep.subr.mxu0 0.0
    %272 = vmatpush1.msra.mxu0 0.0
    %273 = vmatprep.subr.mxu0 0.0
    %274 = vmatpush1.msra.mxu0 0.0
    %275 = vmatprep.subr.mxu0 0.0
    %276 = vmatpush1.msra.mxu0 0.0
    %277 = vmatprep.subr.mxu0 0.0
    %278 = vmatpush1.msra.mxu0 0.0
    %279 = vmatprep.subr.mxu0 0.0
    %280 = vmatpush1.msra.mxu0 0.0
    %281 = vmatprep.subr.mxu0 0.0
    %282 = vmatpush1.msra.mxu0 0.0
    %283 = vmatprep.subr.mxu0 0.0
    %284 = vmatpush1.msra.mxu0 0.0
    %285 = vmatprep.subr.mxu0 0.0
    %286 = vmatpush1.msra.mxu0 0.0
    %287 = vmatprep.subr.mxu0 0.0
    %288 = vmatpush1.msra.mxu0 0.0
    %289 = vmatprep.subr.mxu0 0.0
    %290 = vmatpush1.msra.mxu0 0.0
    %291 = vmatprep.subr.mxu0 0.0
    %292 = vmatpush1.msra.mxu0 0.0
    %293 = vmatprep.subr.mxu0 0.0
    %294 = vmatpush1.msra.mxu0 0.0
    %295 = vmatprep.subr.mxu0 0.0
    %296 = vmatpush1.msra.mxu0 0.0
    %297 = vmatprep.subr.mxu0 0.0
    %298 = vmatpush1.msra.mxu0 0.0
    %299 = vmatprep.subr.mxu0 0.0
    %300 = vmatpush1.msra.mxu0 0.0
    %301 = vmatprep.subr.mxu0 0.0
    %302 = vmatpush1.msra.mxu0 0.0
    %303 = vmatprep.subr.mxu0 0.0
    %304 = vmatpush1.msra.mxu0 0.0
    %305 = vmatprep.subr.mxu0 0.0
    %306 = vmatpush1.msra.mxu0 0.0
    %307 = vmatprep.subr.mxu0 0.0
    %308 = vmatpush1.msra.mxu0 0.0
    %309 = vmatprep.subr.mxu0 0.0
    %310 = vmatpush1.msra.mxu0 0.0
    %311 = vmatprep.subr.mxu0 0.0
    %312 = vmatpush1.msra.mxu0 0.0
    %313 = vmatprep.subr.mxu0 0.0
    %314 = vmatpush1.msra.mxu0 0.0
    %315 = vmatprep.subr.mxu0 0.0
    %316 = vmatpush1.msra.mxu0 0.0
    %317 = vmatprep.subr.mxu0 0.0
    %318 = vmatpush1.msra.mxu0 0.0
    %319 = vmatprep.subr.mxu0 0.0
    %320 = vmatpush1.msra.mxu0 0.0
    %321 = vmatprep.subr.mxu0 0.0
    %322 = vmatpush1.msra.mxu0 0.0
    %323 = vmatprep.mubr.f32.mxu0 0.0
    %324 = vmatmul.mubr.f32.gmra.mrb[0].mxu0 %v257
    %v325 = vpop.f32.mrb[0].mxu0
    %v326 = vadd.f32 0.0, %v325
    %v327 = vpop.f32.mrb[0].mxu0
    %328 = vdwg.mxu0
    %v329 = vld [vmem:[#allocation8] sm:$0xff]
    %v330 = vld [vmem:[#allocation8 + $0x8] sm:$0x3f]
    %v331 = vld [vmem:[#allocation6 + $0x8] sm:$0xff]
    %v332 = vld [vmem:[#allocation6 + $0x20] sm:$0xff]
    %v333 = vld [vmem:[#allocation6 + $0x38] sm:$0xff]
    %v334 = vld [vmem:[#allocation6 + $0x50] sm:$0xff]
    %v335 = vld [vmem:[#allocation6 + $0x68] sm:$0xff]
    %v336 = vld [vmem:[#allocation6 + $0x80] sm:$0xff]
    %v337 = vld [vmem:[#allocation6 + $0x98] sm:$0xff]
    %v338 = vld [vmem:[#allocation6 + $0x10] sm:$0xff]
    %v339 = vld [vmem:[#allocation6 + $0x28] sm:$0xff]
    %v340 = vld [vmem:[#allocation6 + $0x40] sm:$0xff]
    %v341 = vld [vmem:[#allocation6 + $0x58] sm:$0xff]
    %v342 = vld [vmem:[#allocation6 + $0x70] sm:$0xff]
    %v343 = vld [vmem:[#allocation6 + $0x88] sm:$0xff]
    %v344 = vld [vmem:[#allocation6 + $0xa0] sm:$0xff]
    %v345 = vld [vmem:[#allocation9] sm:$0xff]
    %v346 = vld [vmem:[#allocation9 + $0x10] sm:$0x3f]
    %v347 = vld [vmem:[#allocation9 + $0x8] sm:$0xff]
    %v348 = vld [vmem:[#allocation9 + $0x18] sm:$0x3f]
    %v349 = vld [vmem:[#allocation11] sm:$0xff]
    %v350 = vld [vmem:[#allocation11 + $0x20] sm:$0xff]
    %v351 = vld [vmem:[#allocation11 + $0x8] sm:$0xff]
    %v352 = vld [vmem:[#allocation11 + $0x28] sm:$0xff]
    %v353 = vld [vmem:[#allocation11 + $0x10] sm:$0xff]
    %v354 = vld [vmem:[#allocation11 + $0x30] sm:$0xff]
    %v355 = vld [vmem:[#allocation11 + $0x18] sm:$0xff]
    %v356 = vld [vmem:[#allocation11 + $0x38] sm:$0xff]
    %v357 = vld [vmem:[%s9] sm:$0x1]
    %v358 = vlaneseq
    %v359 = vshrl.u32 %v358, 7
    %v360 = vsub.s32 0, %v359
    %v361 = vrot.slane %v326, %v360
    %v362 = vmul.f32 %v329, %v361
    %v363 = vmul.f32 %v330, %v361
    %v365 = vsel %vm156, %v362, 0
    %v368 = vsel %vm156, %v363, 0
    %370 = vmatprep.subr.mxu0 0.0
    %371 = vmatpush1.msra.mxu0 %v338
    %372 = vmatprep.subr.mxu0 0.0
    %373 = vmatpush1.msra.mxu0 %v339
    %374 = vmatprep.subr.mxu0 0.0
    %375 = vmatpush1.msra.mxu0 %v340
    %376 = vmatprep.subr.mxu0 0.0
    %377 = vmatpush1.msra.mxu0 %v341
    %378 = vmatprep.subr.mxu0 0.0
    %379 = vmatpush1.msra.mxu0 %v342
    %380 = vmatprep.subr.mxu0 0.0
    %381 = vmatpush1.msra.mxu0 %v343
    %382 = vmatprep.subr.mxu0 0.0
    %383 = vmatpush1.msra.mxu0 %v344
    %384 = vmatprep.subr.mxu0 0.0
    %385 = vmatpush1.msra.mxu0 0.0
    %386 = vmatprep.subr.mxu0 0.0
    %387 = vmatpush1.msra.mxu0 0.0
    %388 = vmatprep.subr.mxu0 0.0
    %389 = vmatpush1.msra.mxu0 0.0
    %390 = vmatprep.subr.mxu0 0.0
    %391 = vmatpush1.msra.mxu0 0.0
    %392 = vmatprep.subr.mxu0 0.0
    %393 = vmatpush1.msra.mxu0 0.0
    %394 = vmatprep.subr.mxu0 0.0
    %395 = vmatpush1.msra.mxu0 0.0
    %396 = vmatprep.subr.mxu0 0.0
    %397 = vmatpush1.msra.mxu0 0.0
    %398 = vmatprep.subr.mxu0 0.0
    %399 = vmatpush1.msra.mxu0 0.0
    %400 = vmatprep.subr.mxu0 0.0
    %401 = vmatpush1.msra.mxu0 0.0
    %402 = vmatprep.subr.mxu0 0.0
    %403 = vmatpush1.msra.mxu0 0.0
    %404 = vmatprep.subr.mxu0 0.0
    %405 = vmatpush1.msra.mxu0 0.0
    %406 = vmatprep.subr.mxu0 0.0
    %407 = vmatpush1.msra.mxu0 0.0
    %408 = vmatprep.subr.mxu0 0.0
    %409 = vmatpush1.msra.mxu0 0.0
    %410 = vmatprep.subr.mxu0 0.0
    %411 = vmatpush1.msra.mxu0 0.0
    %412 = vmatprep.subr.mxu0 0.0
    %413 = vmatpush1.msra.mxu0 0.0
    %414 = vmatprep.subr.mxu0 0.0
    %415 = vmatpush1.msra.mxu0 0.0
    %416 = vmatprep.subr.mxu0 0.0
    %417 = vmatpush1.msra.mxu0 0.0
    %418 = vmatprep.subr.mxu0 0.0
    %419 = vmatpush1.msra.mxu0 0.0
    %420 = vmatprep.subr.mxu0 0.0
    %421 = vmatpush1.msra.mxu0 0.0
    %422 = vmatprep.subr.mxu0 0.0
    %423 = vmatpush1.msra.mxu0 0.0
    %424 = vmatprep.subr.mxu0 0.0
    %425 = vmatpush1.msra.mxu0 0.0
    %426 = vmatprep.subr.mxu0 0.0
    %427 = vmatpush1.msra.mxu0 0.0
    %428 = vmatprep.subr.mxu0 0.0
    %429 = vmatpush1.msra.mxu0 0.0
    %430 = vmatprep.subr.mxu0 0.0
    %431 = vmatpush1.msra.mxu0 0.0
    %432 = vmatprep.subr.mxu0 0.0
    %433 = vmatpush1.msra.mxu0 0.0
    %434 = vmatprep.mubr.f32.mxu0 0.0
    %435 = vmatmul.mubr.f32.gmra.mrb[0].mxu0 %v365
    %v436 = vpop.f32.mrb[0].mxu0
    %v437 = vadd.f32 0.0, %v436
    %v438 = vpop.f32.mrb[0].mxu0
    %439 = vmatprep.mubr.f32.mxu0 0.0
    %440 = vmatmul.mubr.f32.gmra.mrb[0].mxu0 %v368
    %v441 = vpop.f32.mrb[0].mxu0
    %v442 = vadd.f32 0.0, %v441
    %v443 = vpop.f32.mrb[0].mxu0
    %444 = vdwg.mxu0
    %vm445 = vcmask 130048
    %v447 = vsel %vm445, %v437, 0
    %v450 = vsel %vm445, %v442, 0
    %452 = vmatprep.subr.mxu0 0.0
    %453 = vmatpush1.msra.mxu0 %v236
    %454 = vmatprep.subr.mxu0 0.0
    %455 = vmatpush1.msra.mxu0 %v241
    %456 = vmatprep.subr.mxu0 0.0
    %457 = vmatpush1.msra.mxu0 0.0
    %458 = vmatprep.subr.mxu0 0.0
    %459 = vmatpush1.msra.mxu0 0.0
    %460 = vmatprep.subr.mxu0 0.0
    %461 = vmatpush1.msra.mxu0 0.0
    %462 = vmatprep.subr.mxu0 0.0
    %463 = vmatpush1.msra.mxu0 0.0
    %464 = vmatprep.subr.mxu0 0.0
    %465 = vmatpush1.msra.mxu0 0.0
    %466 = vmatprep.subr.mxu0 0.0
    %467 = vmatpush1.msra.mxu0 0.0
    %468 = vmatprep.subr.mxu0 0.0
    %469 = vmatpush1.msra.mxu0 0.0
    %470 = vmatprep.subr.mxu0 0.0
    %471 = vmatpush1.msra.mxu0 0.0
    %472 = vmatprep.subr.mxu0 0.0
    %473 = vmatpush1.msra.mxu0 0.0
    %474 = vmatprep.subr.mxu0 0.0
    %475 = vmatpush1.msra.mxu0 0.0
    %476 = vmatprep.subr.mxu0 0.0
    %477 = vmatpush1.msra.mxu0 0.0
    %478 = vmatprep.subr.mxu0 0.0
    %479 = vmatpush1.msra.mxu0 0.0
    %480 = vmatprep.subr.mxu0 0.0
    %481 = vmatpush1.msra.mxu0 0.0
    %482 = vmatprep.subr.mxu0 0.0
    %483 = vmatpush1.msra.mxu0 0.0
    %484 = vmatprep.subr.mxu0 0.0
    %485 = vmatpush1.msra.mxu0 0.0
    %486 = vmatprep.subr.mxu0 0.0
    %487 = vmatpush1.msra.mxu0 0.0
    %488 = vmatprep.subr.mxu0 0.0
    %489 = vmatpush1.msra.mxu0 0.0
    %490 = vmatprep.subr.mxu0 0.0
    %491 = vmatpush1.msra.mxu0 0.0
    %492 = vmatprep.subr.mxu0 0.0
    %493 = vmatpush1.msra.mxu0 0.0
    %494 = vmatprep.subr.mxu0 0.0
    %495 = vmatpush1.msra.mxu0 0.0
    %496 = vmatprep.subr.mxu0 0.0
    %497 = vmatpush1.msra.mxu0 0.0
    %498 = vmatprep.subr.mxu0 0.0
    %499 = vmatpush1.msra.mxu0 0.0
    %500 = vmatprep.subr.mxu0 0.0
    %501 = vmatpush1.msra.mxu0 0.0
    %502 = vmatprep.subr.mxu0 0.0
    %503 = vmatpush1.msra.mxu0 0.0
    %504 = vmatprep.subr.mxu0 0.0
    %505 = vmatpush1.msra.mxu0 0.0
    %506 = vmatprep.subr.mxu0 0.0
    %507 = vmatpush1.msra.mxu0 0.0
    %508 = vmatprep.subr.mxu0 0.0
    %509 = vmatpush1.msra.mxu0 0.0
    %510 = vmatprep.subr.mxu0 0.0
    %511 = vmatpush1.msra.mxu0 0.0
    %512 = vmatprep.subr.mxu0 0.0
    %513 = vmatpush1.msra.mxu0 0.0
    %514 = vmatprep.subr.mxu0 0.0
    %515 = vmatpush1.msra.mxu0 0.0
    %516 = vmatprep.mubr.f32.mxu0 0.0
    %517 = vmatmul.mubr.f32.gmra.mrb[0].mxu0 %v447
    %v518 = vpop.f32.mrb[0].mxu0
    %v519 = vadd.f32 %v347, %v518
    %v520 = vpop.f32.mrb[0].mxu0
    %521 = vmatprep.mubr.f32.mxu0 0.0
    %522 = vmatmul.mubr.f32.gmra.mrb[0].mxu0 %v450
    %v523 = vpop.f32.mrb[0].mxu0
    %v524 = vadd.f32 %v348, %v523
    %v525 = vpop.f32.mrb[0].mxu0
    %526 = vdwg.mxu0
    %v527 = vxor.u32 %v519, 2147483648
    %v528 = vxor.u32 %v524, 2147483648
    %v529 = vmul.f32 %v527, 1.442695
    %v530 = vpow.pop %v529
    %v531 = vmul.f32 %v528, 1.442695
    %v532 = vpow.pop %v531
    %v533 = vadd.f32 %v530, 1.0
    %v534 = vadd.f32 %v532, 1.0
    %v535 = vrcp.pop %v533
    %v536 = vmul.f32 1.0, %v535
    %v537 = vrcp.pop %v534
    %v538 = vmul.f32 1.0, %v537
    %vm539 = vcmask 113664
    %v541 = vsel %vm539, %v345, 0
    %v544 = vsel %vm539, %v346, 0
    %vm546 = vcmask 1045504
    %v548 = vsel %vm546, %v538, 0
    %550 = vmatprep.subr.mxu0 0.0
    %551 = vmatpush1.msra.mxu0 %v536
    %552 = vmatprep.subr.mxu0 0.0
    %553 = vmatpush1.msra.mxu0 %v548
    %554 = vmatprep.subr.mxu0 0.0
    %555 = vmatpush1.msra.mxu0 0.0
    %556 = vmatprep.subr.mxu0 0.0
    %557 = vmatpush1.msra.mxu0 0.0
    %558 = vmatprep.subr.mxu0 0.0
    %559 = vmatpush1.msra.mxu0 0.0
    %560 = vmatprep.subr.mxu0 0.0
    %561 = vmatpush1.msra.mxu0 0.0
    %562 = vmatprep.subr.mxu0 0.0
    %563 = vmatpush1.msra.mxu0 0.0
    %564 = vmatprep.subr.mxu0 0.0
    %565 = vmatpush1.msra.mxu0 0.0
    %566 = vmatprep.subr.mxu0 0.0
    %567 = vmatpush1.msra.mxu0 0.0
    %568 = vmatprep.subr.mxu0 0.0
    %569 = vmatpush1.msra.mxu0 0.0
    %570 = vmatprep.subr.mxu0 0.0
    %571 = vmatpush1.msra.mxu0 0.0
    %572 = vmatprep.subr.mxu0 0.0
    %573 = vmatpush1.msra.mxu0 0.0
    %574 = vmatprep.subr.mxu0 0.0
    %575 = vmatpush1.msra.mxu0 0.0
    %576 = vmatprep.subr.mxu0 0.0
    %577 = vmatpush1.msra.mxu0 0.0
    %578 = vmatprep.subr.mxu0 0.0
    %579 = vmatpush1.msra.mxu0 0.0
    %580 = vmatprep.subr.mxu0 0.0
    %581 = vmatpush1.msra.mxu0 0.0
    %582 = vmatprep.subr.mxu0 0.0
    %583 = vmatpush1.msra.mxu0 0.0
    %584 = vmatprep.subr.mxu0 0.0
    %585 = vmatpush1.msra.mxu0 0.0
    %586 = vmatprep.subr.mxu0 0.0
    %587 = vmatpush1.msra.mxu0 0.0
    %588 = vmatprep.subr.mxu0 0.0
    %589 = vmatpush1.msra.mxu0 0.0
    %590 = vmatprep.subr.mxu0 0.0
    %591 = vmatpush1.msra.mxu0 0.0
    %592 = vmatprep.subr.mxu0 0.0
    %593 = vmatpush1.msra.mxu0 0.0
    %594 = vmatprep.subr.mxu0 0.0
    %595 = vmatpush1.msra.mxu0 0.0
    %596 = vmatprep.subr.mxu0 0.0
    %597 = vmatpush1.msra.mxu0 0.0
    %598 = vmatprep.subr.mxu0 0.0
    %599 = vmatpush1.msra.mxu0 0.0
    %600 = vmatprep.subr.mxu0 0.0
    %601 = vmatpush1.msra.mxu0 0.0
    %602 = vmatprep.subr.mxu0 0.0
    %603 = vmatpush1.msra.mxu0 0.0
    %604 = vmatprep.subr.mxu0 0.0
    %605 = vmatpush1.msra.mxu0 0.0
    %606 = vmatprep.subr.mxu0 0.0
    %607 = vmatpush1.msra.mxu0 0.0
    %608 = vmatprep.subr.mxu0 0.0
    %609 = vmatpush1.msra.mxu0 0.0
    %610 = vmatprep.subr.mxu0 0.0
    %611 = vmatpush1.msra.mxu0 0.0
    %612 = vmatprep.subr.mxu0 0.0
    %613 = vmatpush1.msra.mxu0 0.0
    %614 = vmatprep.mubr.f32.mxu0 0.0
    %615 = vmatmul.mubr.f32.gmra.mrb[0].mxu0 %v541
    %v616 = vpop.f32.mrb[0].mxu0
    %v617 = vadd.f32 0.0, %v616
    %v618 = vpop.f32.mrb[0].mxu0
    %619 = vmatprep.mubr.f32.mxu0 0.0
    %620 = vmatmul.mubr.f32.gmra.mrb[0].mxu0 %v544
    %v621 = vpop.f32.mrb[0].mxu0
    %v622 = vadd.f32 0.0, %v621
    %v623 = vpop.f32.mrb[0].mxu0
    %624 = vdwg.mxu0
    %v625 = vsel %vm539, %v617, -inf
    %vm626 = vcmask 111616
    %v627 = vsel %vm626, %v622, -inf
    %v628 = vmax.f32 %v625, %v627
    %v629 = vrot.slane %v628, 4
    %v630 = vmax.f32 %v628, %v629
    %v631 = vrot.slane %v630, 2
    %v632 = vmax.f32 %v630, %v631
    %v633 = vrot.slane %v632, 1
    %v634 = vmax.f32 %v632, %v633
    %v635 = vsub.f32 %v617, %v634
    %v636 = vsub.f32 %v622, %v634
    %v637 = vmul.f32 %v635, 1.442695
    %v638 = vpow.pop %v637
    %v639 = vmul.f32 %v636, 1.442695
    %v640 = vpow.pop %v639
    %v641 = vsel %vm539, %v638, 0.0
    %v642 = vsel %vm626, %v640, 0.0
    %v643 = vadd.f32 %v641, %v642
    %v644 = vrot.slane %v643, 4
    %v645 = vadd.f32 %v643, %v644
    %v646 = vrot.slane %v645, 2
    %v647 = vadd.f32 %v645, %v646
    %v648 = vrot.slane %v647, 1
    %v649 = vadd.f32 %v647, %v648
    %v650 = vrcp.pop %v649
    %v651 = vmul.f32 %v638, %v650
    %v652 = vmul.f32 %v640, %v650
    %v654 = vsel %vm539, %v357, 0
    %v657 = vsel %vm539, %v651, 0
    %v660 = vsel %vm539, %v652, 0
    %662 = vmatprep.subr.mxu0 0.0
    %663 = vmatpush1.xpose.msra.mxu0 %v657
    %664 = vmatprep.subr.mxu0 0.0
    %665 = vmatpush1.xpose.msra.mxu0 %v660
    %666 = vmatprep.subr.mxu0 0.0
    %667 = vmatpush1.xpose.msra.mxu0 0.0
    %668 = vmatprep.subr.mxu0 0.0
    %669 = vmatpush1.xpose.msra.mxu0 0.0
    %670 = vmatprep.subr.mxu0 0.0
    %671 = vmatpush1.xpose.msra.mxu0 0.0
    %672 = vmatprep.subr.mxu0 0.0
    %673 = vmatpush1.xpose.msra.mxu0 0.0
    %674 = vmatprep.subr.mxu0 0.0
    %675 = vmatpush1.xpose.msra.mxu0 0.0
    %676 = vmatprep.subr.mxu0 0.0
    %677 = vmatpush1.xpose.msra.mxu0 0.0
    %678 = vmatprep.subr.mxu0 0.0
    %679 = vmatpush1.xpose.msra.mxu0 0.0
    %680 = vmatprep.subr.mxu0 0.0
    %681 = vmatpush1.xpose.msra.mxu0 0.0
    %682 = vmatprep.subr.mxu0 0.0
    %683 = vmatpush1.xpose.msra.mxu0 0.0
    %684 = vmatprep.subr.mxu0 0.0
    %685 = vmatpush1.xpose.msra.mxu0 0.0
    %686 = vmatprep.subr.mxu0 0.0
    %687 = vmatpush1.xpose.msra.mxu0 0.0
    %688 = vmatprep.subr.mxu0 0.0
    %689 = vmatpush1.xpose.msra.mxu0 0.0
    %690 = vmatprep.subr.mxu0 0.0
    %691 = vmatpush1.xpose.msra.mxu0 0.0
    %692 = vmatprep.subr.mxu0 0.0
    %693 = vmatpush1.xpose.msra.mxu0 0.0
    %694 = vmatprep.subr.mxu0 0.0
    %695 = vmatpush1.xpose.msra.mxu0 0.0
    %696 = vmatprep.subr.mxu0 0.0
    %697 = vmatpush1.xpose.msra.mxu0 0.0
    %698 = vmatprep.subr.mxu0 0.0
    %699 = vmatpush1.xpose.msra.mxu0 0.0
    %700 = vmatprep.subr.mxu0 0.0
    %701 = vmatpush1.xpose.msra.mxu0 0.0
    %702 = vmatprep.subr.mxu0 0.0
    %703 = vmatpush1.xpose.msra.mxu0 0.0
    %704 = vmatprep.subr.mxu0 0.0
    %705 = vmatpush1.xpose.msra.mxu0 0.0
    %706 = vmatprep.subr.mxu0 0.0
    %707 = vmatpush1.xpose.msra.mxu0 0.0
    %708 = vmatprep.subr.mxu0 0.0
    %709 = vmatpush1.xpose.msra.mxu0 0.0
    %710 = vmatprep.subr.mxu0 0.0
    %711 = vmatpush1.xpose.msra.mxu0 0.0
    %712 = vmatprep.subr.mxu0 0.0
    %713 = vmatpush1.xpose.msra.mxu0 0.0
    %714 = vmatprep.subr.mxu0 0.0
    %715 = vmatpush1.xpose.msra.mxu0 0.0
    %716 = vmatprep.subr.mxu0 0.0
    %717 = vmatpush1.xpose.msra.mxu0 0.0
    %718 = vmatprep.subr.mxu0 0.0
    %719 = vmatpush1.xpose.msra.mxu0 0.0
    %720 = vmatprep.subr.mxu0 0.0
    %721 = vmatpush1.xpose.msra.mxu0 0.0
    %722 = vmatprep.subr.mxu0 0.0
    %723 = vmatpush1.xpose.msra.mxu0 0.0
    %724 = vmatprep.subr.mxu0 0.0
    %725 = vmatpush1.xpose.msra.mxu0 0.0
    %726 = vmatprep.mubr.f32.mxu0 0.0
    %727 = vmatmul.mubr.f32.gmra.mrb[0].mxu0 %v654
    %v728 = vpop.f32.mrb[0].mxu0
    %v729 = vadd.f32 0.0, %v728
    %v730 = vpop.f32.mrb[0].mxu0
    %731 = vdwg.mxu0
    %v733 = vsel %vm539, %v729, 0
    %v736 = vsel %vm546, %v330, 0
    %738 = vmatprep.subr.mxu0 0.0
    %739 = vmatpush1.msra.mxu0 %v329
    %740 = vmatprep.subr.mxu0 0.0
    %741 = vmatpush1.msra.mxu0 %v736
    %742 = vmatprep.subr.mxu0 0.0
    %743 = vmatpush1.msra.mxu0 0.0
    %744 = vmatprep.subr.mxu0 0.0
    %745 = vmatpush1.msra.mxu0 0.0
    %746 = vmatprep.subr.mxu0 0.0
    %747 = vmatpush1.msra.mxu0 0.0
    %748 = vmatprep.subr.mxu0 0.0
    %749 = vmatpush1.msra.mxu0 0.0
    %750 = vmatprep.subr.mxu0 0.0
    %751 = vmatpush1.msra.mxu0 0.0
    %752 = vmatprep.subr.mxu0 0.0
    %753 = vmatpush1.msra.mxu0 0.0
    %754 = vmatprep.subr.mxu0 0.0
    %755 = vmatpush1.msra.mxu0 0.0
    %756 = vmatprep.subr.mxu0 0.0
    %757 = vmatpush1.msra.mxu0 0.0
    %758 = vmatprep.subr.mxu0 0.0
    %759 = vmatpush1.msra.mxu0 0.0
    %760 = vmatprep.subr.mxu0 0.0
    %761 = vmatpush1.msra.mxu0 0.0
    %762 = vmatprep.subr.mxu0 0.0
    %763 = vmatpush1.msra.mxu0 0.0
    %764 = vmatprep.subr.mxu0 0.0
    %765 = vmatpush1.msra.mxu0 0.0
    %766 = vmatprep.subr.mxu0 0.0
    %767 = vmatpush1.msra.mxu0 0.0
    %768 = vmatprep.subr.mxu0 0.0
    %769 = vmatpush1.msra.mxu0 0.0
    %770 = vmatprep.subr.mxu0 0.0
    %771 = vmatpush1.msra.mxu0 0.0
    %772 = vmatprep.subr.mxu0 0.0
    %773 = vmatpush1.msra.mxu0 0.0
    %774 = vmatprep.subr.mxu0 0.0
    %775 = vmatpush1.msra.mxu0 0.0
    %776 = vmatprep.subr.mxu0 0.0
    %777 = vmatpush1.msra.mxu0 0.0
    %778 = vmatprep.subr.mxu0 0.0
    %779 = vmatpush1.msra.mxu0 0.0
    %780 = vmatprep.subr.mxu0 0.0
    %781 = vmatpush1.msra.mxu0 0.0
    %782 = vmatprep.subr.mxu0 0.0
    %783 = vmatpush1.msra.mxu0 0.0
    %784 = vmatprep.subr.mxu0 0.0
    %785 = vmatpush1.msra.mxu0 0.0
    %786 = vmatprep.subr.mxu0 0.0
    %787 = vmatpush1.msra.mxu0 0.0
    %788 = vmatprep.subr.mxu0 0.0
    %789 = vmatpush1.msra.mxu0 0.0
    %790 = vmatprep.subr.mxu0 0.0
    %791 = vmatpush1.msra.mxu0 0.0
    %792 = vmatprep.subr.mxu0 0.0
    %793 = vmatpush1.msra.mxu0 0.0
    %794 = vmatprep.subr.mxu0 0.0
    %795 = vmatpush1.msra.mxu0 0.0
    %796 = vmatprep.subr.mxu0 0.0
    %797 = vmatpush1.msra.mxu0 0.0
    %798 = vmatprep.subr.mxu0 0.0
    %799 = vmatpush1.msra.mxu0 0.0
    %800 = vmatprep.subr.mxu0 0.0
    %801 = vmatpush1.msra.mxu0 0.0
    %802 = vmatprep.mubr.f32.mxu0 0.0
    %803 = vmatmul.mubr.f32.gmra.mrb[0].mxu0 %v733
    %v804 = vpop.f32.mrb[0].mxu0
    %v805 = vadd.f32 0.0, %v804
    %v806 = vpop.f32.mrb[0].mxu0
    %807 = vdwg.mxu0
    %v808 = vlaneseq
    %v809 = vshrl.u32 %v808, 7
    %v810 = vsub.s32 0, %v809
    %v811 = vrot.slane %v805, %v810
    %v812 = vmul.f32 %v145, %v811
    %v813 = vmul.f32 %v146, %v811
    %v815 = vsel %vm156, %v812, 0
    %v818 = vsel %vm156, %v813, 0
    %820 = vmatprep.subr.mxu0 0.0
    %821 = vmatpush1.msra.mxu0 %v331
    %822 = vmatprep.subr.mxu0 0.0
    %823 = vmatpush1.msra.mxu0 %v332
    %824 = vmatprep.subr.mxu0 0.0
    %825 = vmatpush1.msra.mxu0 %v333
    %826 = vmatprep.subr.mxu0 0.0
    %827 = vmatpush1.msra.mxu0 %v334
    %828 = vmatprep.subr.mxu0 0.0
    %829 = vmatpush1.msra.mxu0 %v335
    %830 = vmatprep.subr.mxu0 0.0
    %831 = vmatpush1.msra.mxu0 %v336
    %832 = vmatprep.subr.mxu0 0.0
    %833 = vmatpush1.msra.mxu0 %v337
    %834 = vmatprep.subr.mxu0 0.0
    %835 = vmatpush1.msra.mxu0 0.0
    %836 = vmatprep.subr.mxu0 0.0
    %837 = vmatpush1.msra.mxu0 0.0
    %838 = vmatprep.subr.mxu0 0.0
    %839 = vmatpush1.msra.mxu0 0.0
    %840 = vmatprep.subr.mxu0 0.0
    %841 = vmatpush1.msra.mxu0 0.0
    %842 = vmatprep.subr.mxu0 0.0
    %843 = vmatpush1.msra.mxu0 0.0
    %844 = vmatprep.subr.mxu0 0.0
    %845 = vmatpush1.msra.mxu0 0.0
    %846 = vmatprep.subr.mxu0 0.0
    %847 = vmatpush1.msra.mxu0 0.0
    %848 = vmatprep.subr.mxu0 0.0
    %849 = vmatpush1.msra.mxu0 0.0
    %850 = vmatprep.subr.mxu0 0.0
    %851 = vmatpush1.msra.mxu0 0.0
    %852 = vmatprep.subr.mxu0 0.0
    %853 = vmatpush1.msra.mxu0 0.0
    %854 = vmatprep.subr.mxu0 0.0
    %855 = vmatpush1.msra.mxu0 0.0
    %856 = vmatprep.subr.mxu0 0.0
    %857 = vmatpush1.msra.mxu0 0.0
    %858 = vmatprep.subr.mxu0 0.0
    %859 = vmatpush1.msra.mxu0 0.0
    %860 = vmatprep.subr.mxu0 0.0
    %861 = vmatpush1.msra.mxu0 0.0
    %862 = vmatprep.subr.mxu0 0.0
    %863 = vmatpush1.msra.mxu0 0.0
    %864 = vmatprep.subr.mxu0 0.0
    %865 = vmatpush1.msra.mxu0 0.0
    %866 = vmatprep.subr.mxu0 0.0
    %867 = vmatpush1.msra.mxu0 0.0
    %868 = vmatprep.subr.mxu0 0.0
    %869 = vmatpush1.msra.mxu0 0.0
    %870 = vmatprep.subr.mxu0 0.0
    %871 = vmatpush1.msra.mxu0 0.0
    %872 = vmatprep.subr.mxu0 0.0
    %873 = vmatpush1.msra.mxu0 0.0
    %874 = vmatprep.subr.mxu0 0.0
    %875 = vmatpush1.msra.mxu0 0.0
    %876 = vmatprep.subr.mxu0 0.0
    %877 = vmatpush1.msra.mxu0 0.0
    %878 = vmatprep.subr.mxu0 0.0
    %879 = vmatpush1.msra.mxu0 0.0
    %880 = vmatprep.subr.mxu0 0.0
    %881 = vmatpush1.msra.mxu0 0.0
    %882 = vmatprep.subr.mxu0 0.0
    %883 = vmatpush1.msra.mxu0 0.0
    %884 = vmatprep.mubr.f32.mxu0 0.0
    %885 = vmatmul.mubr.f32.gmra.mrb[0].mxu0 %v815
    %v886 = vpop.f32.mrb[0].mxu0
    %v887 = vadd.f32 0.0, %v886
    %v888 = vpop.f32.mrb[0].mxu0
    %889 = vmatprep.mubr.f32.mxu0 0.0
    %890 = vmatmul.mubr.f32.gmra.mrb[0].mxu0 %v818
    %v891 = vpop.f32.mrb[0].mxu0
    %v892 = vadd.f32 0.0, %v891
    %v893 = vpop.f32.mrb[0].mxu0
    %894 = vdwg.mxu0
    %897 = vrot.lane.b32.xlu0 %v236, 114
    %v898 = vpop.permute.xlu0 %897
    %899 = vrot.lane.b32.xlu0 %v241, 114
    %v900 = vpop.permute.xlu0 %899
    %v901 = vsel %vm539, %v898, 0
    %v903 = vsel %vm539, %v900, 0
    %v905 = vsel %vm546, %v652, 0
    %907 = vmatprep.subr.mxu0 0.0
    %908 = vmatpush1.msra.mxu0 %v651
    %909 = vmatprep.subr.mxu0 0.0
    %910 = vmatpush1.msra.mxu0 %v905
    %911 = vmatprep.subr.mxu0 0.0
    %912 = vmatpush1.msra.mxu0 0.0
    %913 = vmatprep.subr.mxu0 0.0
    %914 = vmatpush1.msra.mxu0 0.0
    %915 = vmatprep.subr.mxu0 0.0
    %916 = vmatpush1.msra.mxu0 0.0
    %917 = vmatprep.subr.mxu0 0.0
    %918 = vmatpush1.msra.mxu0 0.0
    %919 = vmatprep.subr.mxu0 0.0
    %920 = vmatpush1.msra.mxu0 0.0
    %921 = vmatprep.subr.mxu0 0.0
    %922 = vmatpush1.msra.mxu0 0.0
    %923 = vmatprep.subr.mxu0 0.0
    %924 = vmatpush1.msra.mxu0 0.0
    %925 = vmatprep.subr.mxu0 0.0
    %926 = vmatpush1.msra.mxu0 0.0
    %927 = vmatprep.subr.mxu0 0.0
    %928 = vmatpush1.msra.mxu0 0.0
    %929 = vmatprep.subr.mxu0 0.0
    %930 = vmatpush1.msra.mxu0 0.0
    %931 = vmatprep.subr.mxu0 0.0
    %932 = vmatpush1.msra.mxu0 0.0
    %933 = vmatprep.subr.mxu0 0.0
    %934 = vmatpush1.msra.mxu0 0.0
    %935 = vmatprep.subr.mxu0 0.0
    %936 = vmatpush1.msra.mxu0 0.0
    %937 = vmatprep.subr.mxu0 0.0
    %938 = vmatpush1.msra.mxu0 0.0
    %939 = vmatprep.subr.mxu0 0.0
    %940 = vmatpush1.msra.mxu0 0.0
    %941 = vmatprep.subr.mxu0 0.0
    %942 = vmatpush1.msra.mxu0 0.0
    %943 = vmatprep.subr.mxu0 0.0
    %944 = vmatpush1.msra.mxu0 0.0
    %945 = vmatprep.subr.mxu0 0.0
    %946 = vmatpush1.msra.mxu0 0.0
    %947 = vmatprep.subr.mxu0 0.0
    %948 = vmatpush1.msra.mxu0 0.0
    %949 = vmatprep.subr.mxu0 0.0
    %950 = vmatpush1.msra.mxu0 0.0
    %951 = vmatprep.subr.mxu0 0.0
    %952 = vmatpush1.msra.mxu0 0.0
    %953 = vmatprep.subr.mxu0 0.0
    %954 = vmatpush1.msra.mxu0 0.0
    %955 = vmatprep.subr.mxu0 0.0
    %956 = vmatpush1.msra.mxu0 0.0
    %957 = vmatprep.subr.mxu0 0.0
    %958 = vmatpush1.msra.mxu0 0.0
    %959 = vmatprep.subr.mxu0 0.0
    %960 = vmatpush1.msra.mxu0 0.0
    %961 = vmatprep.subr.mxu0 0.0
    %962 = vmatpush1.msra.mxu0 0.0
    %963 = vmatprep.subr.mxu0 0.0
    %964 = vmatpush1.msra.mxu0 0.0
    %965 = vmatprep.subr.mxu0 0.0
    %966 = vmatpush1.msra.mxu0 0.0
    %967 = vmatprep.subr.mxu0 0.0
    %968 = vmatpush1.msra.mxu0 0.0
    %969 = vmatprep.subr.mxu0 0.0
    %970 = vmatpush1.msra.mxu0 0.0
    %971 = vmatprep.mubr.f32.mxu0 0.0
    %972 = vmatmul.mubr.f32.gmra.mrb[0].mxu0 %v901
    %v973 = vpop.f32.mrb[0].mxu0
    %v974 = vadd.f32 0.0, %v973
    %v975 = vpop.f32.mrb[0].mxu0
    %976 = vmatprep.mubr.f32.mxu0 0.0
    %977 = vmatmul.mubr.f32.gmra.mrb[0].mxu0 %v903
    %v978 = vpop.f32.mrb[0].mxu0
    %v979 = vadd.f32 0.0, %v978
    %v980 = vpop.f32.mrb[0].mxu0
    %981 = vdwg.mxu0
    %v983 = vsel %vm539, %v887, 0
    %v986 = vsel %vm539, %v892, 0
    %v989 = vsel %vm539, %v974, 0
    %v992 = vsel %vm539, %v979, 0
    %994 = vmatprep.subr.mxu0 0.0
    %995 = vmatpush1.xpose.msra.mxu0 %v989
    %996 = vmatprep.subr.mxu0 0.0
    %997 = vmatpush1.xpose.msra.mxu0 %v992
    %998 = vmatprep.subr.mxu0 0.0
    %999 = vmatpush1.xpose.msra.mxu0 0.0
    %1000 = vmatprep.subr.mxu0 0.0
    %1001 = vmatpush1.xpose.msra.mxu0 0.0
    %1002 = vmatprep.subr.mxu0 0.0
    %1003 = vmatpush1.xpose.msra.mxu0 0.0
    %1004 = vmatprep.subr.mxu0 0.0
    %1005 = vmatpush1.xpose.msra.mxu0 0.0
    %1006 = vmatprep.subr.mxu0 0.0
    %1007 = vmatpush1.xpose.msra.mxu0 0.0
    %1008 = vmatprep.subr.mxu0 0.0
    %1009 = vmatpush1.xpose.msra.mxu0 0.0
    %1010 = vmatprep.subr.mxu0 0.0
    %1011 = vmatpush1.xpose.msra.mxu0 0.0
    %1012 = vmatprep.subr.mxu0 0.0
    %1013 = vmatpush1.xpose.msra.mxu0 0.0
    %1014 = vmatprep.subr.mxu0 0.0
    %1015 = vmatpush1.xpose.msra.mxu0 0.0
    %1016 = vmatprep.subr.mxu0 0.0
    %1017 = vmatpush1.xpose.msra.mxu0 0.0
    %1018 = vmatprep.subr.mxu0 0.0
    %1019 = vmatpush1.xpose.msra.mxu0 0.0
    %1020 = vmatprep.subr.mxu0 0.0
    %1021 = vmatpush1.xpose.msra.mxu0 0.0
    %1022 = vmatprep.subr.mxu0 0.0
    %1023 = vmatpush1.xpose.msra.mxu0 0.0
    %1024 = vmatprep.subr.mxu0 0.0
    %1025 = vmatpush1.xpose.msra.mxu0 0.0
    %1026 = vmatprep.subr.mxu0 0.0
    %1027 = vmatpush1.xpose.msra.mxu0 0.0
    %1028 = vmatprep.subr.mxu0 0.0
    %1029 = vmatpush1.xpose.msra.mxu0 0.0
    %1030 = vmatprep.subr.mxu0 0.0
    %1031 = vmatpush1.xpose.msra.mxu0 0.0
    %1032 = vmatprep.subr.mxu0 0.0
    %1033 = vmatpush1.xpose.msra.mxu0 0.0
    %1034 = vmatprep.subr.mxu0 0.0
    %1035 = vmatpush1.xpose.msra.mxu0 0.0
    %1036 = vmatprep.subr.mxu0 0.0
    %1037 = vmatpush1.xpose.msra.mxu0 0.0
    %1038 = vmatprep.subr.mxu0 0.0
    %1039 = vmatpush1.xpose.msra.mxu0 0.0
    %1040 = vmatprep.subr.mxu0 0.0
    %1041 = vmatpush1.xpose.msra.mxu0 0.0
    %1042 = vmatprep.subr.mxu0 0.0
    %1043 = vmatpush1.xpose.msra.mxu0 0.0
    %1044 = vmatprep.subr.mxu0 0.0
    %1045 = vmatpush1.xpose.msra.mxu0 0.0
    %1046 = vmatprep.subr.mxu0 0.0
    %1047 = vmatpush1.xpose.msra.mxu0 0.0
    %1048 = vmatprep.subr.mxu0 0.0
    %1049 = vmatpush1.xpose.msra.mxu0 0.0
    %1050 = vmatprep.subr.mxu0 0.0
    %1051 = vmatpush1.xpose.msra.mxu0 0.0
    %1052 = vmatprep.subr.mxu0 0.0
    %1053 = vmatpush1.xpose.msra.mxu0 0.0
    %1054 = vmatprep.subr.mxu0 0.0
    %1055 = vmatpush1.xpose.msra.mxu0 0.0
    %1056 = vmatprep.subr.mxu0 0.0
    %1057 = vmatpush1.xpose.msra.mxu0 0.0
    %1058 = vmatprep.mubr.f32.mxu0 0.0
    %1059 = vmatmul.mubr.f32.gmra.mrb[0].mxu0 %v983
    %v1060 = vpop.f32.mrb[0].mxu0
    %v1061 = vadd.f32 %v351, %v1060
    %v1062 = vpop.f32.mrb[0].mxu0
    %1063 = vmatprep.mubr.f32.mxu0 0.0
    %1064 = vmatmul.mubr.f32.gmra.mrb[0].mxu0 %v986
    %v1065 = vpop.f32.mrb[0].mxu0
    %v1066 = vadd.f32 %v352, %v1065
    %v1067 = vpop.f32.mrb[0].mxu0
    %1068 = vdwg.mxu0
    %v1069 = vxor.u32 %v1061, 2147483648
    %v1070 = vxor.u32 %v1066, 2147483648
    %v1071 = vmul.f32 %v1069, 1.442695
    %v1072 = vpow.pop %v1071
    %v1073 = vmul.f32 %v1070, 1.442695
    %v1074 = vpow.pop %v1073
    %v1075 = vadd.f32 %v1072, 1.0
    %v1076 = vadd.f32 %v1074, 1.0
    %v1077 = vrcp.pop %v1075
    %v1078 = vmul.f32 1.0, %v1077
    %v1079 = vrcp.pop %v1076
    %v1080 = vmul.f32 1.0, %v1079
    %v1082 = vsel %vm445, %v349, 0
    %v1085 = vsel %vm445, %v350, 0
    %1087 = vmatprep.subr.mxu0 0.0
    %1088 = vmatpush1.msra.mxu0 %v1078
    %1089 = vmatprep.subr.mxu0 0.0
    %1090 = vmatpush1.msra.mxu0 %v1080
    %1091 = vmatprep.subr.mxu0 0.0
    %1092 = vmatpush1.msra.mxu0 0.0
    %1093 = vmatprep.subr.mxu0 0.0
    %1094 = vmatpush1.msra.mxu0 0.0
    %1095 = vmatprep.subr.mxu0 0.0
    %1096 = vmatpush1.msra.mxu0 0.0
    %1097 = vmatprep.subr.mxu0 0.0
    %1098 = vmatpush1.msra.mxu0 0.0
    %1099 = vmatprep.subr.mxu0 0.0
    %1100 = vmatpush1.msra.mxu0 0.0
    %1101 = vmatprep.subr.mxu0 0.0
    %1102 = vmatpush1.msra.mxu0 0.0
    %1103 = vmatprep.subr.mxu0 0.0
    %1104 = vmatpush1.msra.mxu0 0.0
    %1105 = vmatprep.subr.mxu0 0.0
    %1106 = vmatpush1.msra.mxu0 0.0
    %1107 = vmatprep.subr.mxu0 0.0
    %1108 = vmatpush1.msra.mxu0 0.0
    %1109 = vmatprep.subr.mxu0 0.0
    %1110 = vmatpush1.msra.mxu0 0.0
    %1111 = vmatprep.subr.mxu0 0.0
    %1112 = vmatpush1.msra.mxu0 0.0
    %1113 = vmatprep.subr.mxu0 0.0
    %1114 = vmatpush1.msra.mxu0 0.0
    %1115 = vmatprep.subr.mxu0 0.0
    %1116 = vmatpush1.msra.mxu0 0.0
    %1117 = vmatprep.subr.mxu0 0.0
    %1118 = vmatpush1.msra.mxu0 0.0
    %1119 = vmatprep.subr.mxu0 0.0
    %1120 = vmatpush1.msra.mxu0 0.0
    %1121 = vmatprep.subr.mxu0 0.0
    %1122 = vmatpush1.msra.mxu0 0.0
    %1123 = vmatprep.subr.mxu0 0.0
    %1124 = vmatpush1.msra.mxu0 0.0
    %1125 = vmatprep.subr.mxu0 0.0
    %1126 = vmatpush1.msra.mxu0 0.0
    %1127 = vmatprep.subr.mxu0 0.0
    %1128 = vmatpush1.msra.mxu0 0.0
    %1129 = vmatprep.subr.mxu0 0.0
    %1130 = vmatpush1.msra.mxu0 0.0
    %1131 = vmatprep.subr.mxu0 0.0
    %1132 = vmatpush1.msra.mxu0 0.0
    %1133 = vmatprep.subr.mxu0 0.0
    %1134 = vmatpush1.msra.mxu0 0.0
    %1135 = vmatprep.subr.mxu0 0.0
    %1136 = vmatpush1.msra.mxu0 0.0
    %1137 = vmatprep.subr.mxu0 0.0
    %1138 = vmatpush1.msra.mxu0 0.0
    %1139 = vmatprep.subr.mxu0 0.0
    %1140 = vmatpush1.msra.mxu0 0.0
    %1141 = vmatprep.subr.mxu0 0.0
    %1142 = vmatpush1.msra.mxu0 0.0
    %1143 = vmatprep.subr.mxu0 0.0
    %1144 = vmatpush1.msra.mxu0 0.0
    %1145 = vmatprep.subr.mxu0 0.0
    %1146 = vmatpush1.msra.mxu0 0.0
    %1147 = vmatprep.subr.mxu0 0.0
    %1148 = vmatpush1.msra.mxu0 0.0
    %1149 = vmatprep.subr.mxu0 0.0
    %1150 = vmatpush1.msra.mxu0 0.0
    %1151 = vmatprep.mubr.f32.mxu0 0.0
    %1152 = vmatmul.mubr.f32.gmra.mrb[0].mxu0 %v1082
    %v1153 = vpop.f32.mrb[0].mxu0
    %v1154 = vadd.f32 0.0, %v1153
    %v1155 = vpop.f32.mrb[0].mxu0
    %1156 = vmatprep.mubr.f32.mxu0 0.0
    %1157 = vmatmul.mubr.f32.gmra.mrb[0].mxu0 %v1085
    %v1158 = vpop.f32.mrb[0].mxu0
    %v1159 = vadd.f32 0.0, %v1158
    %v1160 = vpop.f32.mrb[0].mxu0
    %1161 = vdwg.mxu0
    %v1162 = vsel %vm445, %v1154, -inf
    %v1163 = vsel %vm445, %v1159, -inf
    %v1164 = vmax.f32 %v1162, %v1163
    %v1165 = vrot.slane %v1164, 4
    %v1166 = vmax.f32 %v1164, %v1165
    %v1167 = vrot.slane %v1166, 2
    %v1168 = vmax.f32 %v1166, %v1167
    %v1169 = vrot.slane %v1168, 1
    %v1170 = vmax.f32 %v1168, %v1169
    %v1171 = vsub.f32 %v1154, %v1170
    %v1172 = vsub.f32 %v1159, %v1170
    %v1173 = vmul.f32 %v1171, 1.442695
    %v1174 = vpow.pop %v1173
    %v1175 = vmul.f32 %v1172, 1.442695
    %v1176 = vpow.pop %v1175
    %v1177 = vsel %vm445, %v1174, 0.0
    %v1178 = vsel %vm445, %v1176, 0.0
    %v1179 = vadd.f32 %v1177, %v1178
    %v1180 = vrot.slane %v1179, 4
    %v1181 = vadd.f32 %v1179, %v1180
    %v1182 = vrot.slane %v1181, 2
    %v1183 = vadd.f32 %v1181, %v1182
    %v1184 = vrot.slane %v1183, 1
    %v1185 = vadd.f32 %v1183, %v1184
    %v1186 = vrcp.pop %v1185
    %v1187 = vmul.f32 %v1174, %v1186
    %v1188 = vmul.f32 %v1176, %v1186
    %v1189 = vmul.f32 %v1187, %v355
    %v1190 = vmul.f32 %v1188, %v356
    %v1191 = vsel %vm445, %v1189, 0.0
    %1192 = vadd.xlane.f32.xlu0 %v1191
    %v1193 = vpop.xlane.xlu0 %1192
    %v1194 = vsel %vm445, %v1190, 0.0
    %1195 = vadd.xlane.f32.xlu0 %v1194
    %v1196 = vpop.xlane.xlu0 %1195
    %v1197 = vmul.f32 %v145, %v1193
    %v1198 = vmul.f32 %v146, %v1196
    %1199 = vst.msk [vmem:[#allocation2] sm:$0xff] %vm156, %v1197
    %1200 = vst.msk [vmem:[#allocation2 + $0x8] sm:$0xff] %vm156, %v1198
    %v1201 = vmul.f32 %v353, %v1187
    %v1202 = vmul.f32 %v354, %v1188
    %v1204 = vsel %vm445, %v1201, 0
    %v1207 = vsel %vm445, %v1202, 0
    %1209 = vmatprep.subr.mxu0 0.0
    %1210 = vmatpush1.msra.mxu0 %v1197
    %1211 = vmatprep.subr.mxu0 0.0
    %1212 = vmatpush1.msra.mxu0 %v1198
    %1213 = vmatprep.subr.mxu0 0.0
    %1214 = vmatpush1.msra.mxu0 0.0
    %1215 = vmatprep.subr.mxu0 0.0
    %1216 = vmatpush1.msra.mxu0 0.0
    %1217 = vmatprep.subr.mxu0 0.0
    %1218 = vmatpush1.msra.mxu0 0.0
    %1219 = vmatprep.subr.mxu0 0.0
    %1220 = vmatpush1.msra.mxu0 0.0
    %1221 = vmatprep.subr.mxu0 0.0
    %1222 = vmatpush1.msra.mxu0 0.0
    %1223 = vmatprep.subr.mxu0 0.0
    %1224 = vmatpush1.msra.mxu0 0.0
    %1225 = vmatprep.subr.mxu0 0.0
    %1226 = vmatpush1.msra.mxu0 0.0
    %1227 = vmatprep.subr.mxu0 0.0
    %1228 = vmatpush1.msra.mxu0 0.0
    %1229 = vmatprep.subr.mxu0 0.0
    %1230 = vmatpush1.msra.mxu0 0.0
    %1231 = vmatprep.subr.mxu0 0.0
    %1232 = vmatpush1.msra.mxu0 0.0
    %1233 = vmatprep.subr.mxu0 0.0
    %1234 = vmatpush1.msra.mxu0 0.0
    %1235 = vmatprep.subr.mxu0 0.0
    %1236 = vmatpush1.msra.mxu0 0.0
    %1237 = vmatprep.subr.mxu0 0.0
    %1238 = vmatpush1.msra.mxu0 0.0
    %1239 = vmatprep.subr.mxu0 0.0
    %1240 = vmatpush1.msra.mxu0 0.0
    %1241 = vmatprep.subr.mxu0 0.0
    %1242 = vmatpush1.msra.mxu0 0.0
    %1243 = vmatprep.subr.mxu0 0.0
    %1244 = vmatpush1.msra.mxu0 0.0
    %1245 = vmatprep.subr.mxu0 0.0
    %1246 = vmatpush1.msra.mxu0 0.0
    %1247 = vmatprep.subr.mxu0 0.0
    %1248 = vmatpush1.msra.mxu0 0.0
    %1249 = vmatprep.subr.mxu0 0.0
    %1250 = vmatpush1.msra.mxu0 0.0
    %1251 = vmatprep.subr.mxu0 0.0
    %1252 = vmatpush1.msra.mxu0 0.0
    %1253 = vmatprep.subr.mxu0 0.0
    %1254 = vmatpush1.msra.mxu0 0.0
    %1255 = vmatprep.subr.mxu0 0.0
    %1256 = vmatpush1.msra.mxu0 0.0
    %1257 = vmatprep.subr.mxu0 0.0
    %1258 = vmatpush1.msra.mxu0 0.0
    %1259 = vmatprep.subr.mxu0 0.0
    %1260 = vmatpush1.msra.mxu0 0.0
    %1261 = vmatprep.subr.mxu0 0.0
    %1262 = vmatpush1.msra.mxu0 0.0
    %1263 = vmatprep.subr.mxu0 0.0
    %1264 = vmatpush1.msra.mxu0 0.0
    %1265 = vmatprep.subr.mxu0 0.0
    %1266 = vmatpush1.msra.mxu0 0.0
    %1267 = vmatprep.subr.mxu0 0.0
    %1268 = vmatpush1.msra.mxu0 0.0
    %1269 = vmatprep.subr.mxu0 0.0
    %1270 = vmatpush1.msra.mxu0 0.0
    %1271 = vmatprep.subr.mxu0 0.0
    %1272 = vmatpush1.msra.mxu0 0.0
    %1273 = vmatprep.mubr.f32.mxu0 0.0
    %1274 = vmatmul.mubr.f32.gmra.mrb[0].mxu0 %v1204
    %v1275 = vpop.f32.mrb[0].mxu0
    %v1276 = vadd.f32 0.0, %v1275
    %v1277 = vpop.f32.mrb[0].mxu0
    %1278 = vmatprep.mubr.f32.mxu0 0.0
    %1279 = vmatmul.mubr.f32.gmra.mrb[0].mxu0 %v1207
    %v1280 = vpop.f32.mrb[0].mxu0
    %v1281 = vadd.f32 0.0, %v1280
    %v1282 = vpop.f32.mrb[0].mxu0
    %1283 = vdwg.mxu0
    %1286 = vrot.lane.b32.xlu0 %v1276, 56
    %v1287 = vpop.permute.xlu0 %1286
    %1288 = vrot.lane.b32.xlu0 %v1281, 56
    %v1289 = vpop.permute.xlu0 %1288
    %vm1292 = vcmask 916928
    %1293 = vst.msk [vmem:[#allocation2] sm:$0xff] %vm1292, %v1287
    %1294 = vst.msk [vmem:[#allocation2 + $0x8] sm:$0xff] %vm1292, %v1289
    %v1295 = vlaneseq
    %v1296 = vshrl.u32 %v1295, 7
    %v1297 = vsub.s32 1, %v1296
    %v1298 = vrot.slane %v326, %v1297
    %v1299 = vmul.f32 %v329, %v1298
    %v1300 = vmul.f32 %v330, %v1298
    %v1302 = vsel %vm156, %v1299, 0
    %v1305 = vsel %vm156, %v1300, 0
    %1307 = vmatprep.subr.mxu0 0.0
    %1308 = vmatpush1.msra.mxu0 %v338
    %1309 = vmatprep.subr.mxu0 0.0
    %1310 = vmatpush1.msra.mxu0 %v339
    %1311 = vmatprep.subr.mxu0 0.0
    %1312 = vmatpush1.msra.mxu0 %v340
    %1313 = vmatprep.subr.mxu0 0.0
    %1314 = vmatpush1.msra.mxu0 %v341
    %1315 = vmatprep.subr.mxu0 0.0
    %1316 = vmatpush1.msra.mxu0 %v342
    %1317 = vmatprep.subr.mxu0 0.0
    %1318 = vmatpush1.msra.mxu0 %v343
    %1319 = vmatprep.subr.mxu0 0.0
    %1320 = vmatpush1.msra.mxu0 %v344
    %1321 = vmatprep.subr.mxu0 0.0
    %1322 = vmatpush1.msra.mxu0 0.0
    %1323 = vmatprep.subr.mxu0 0.0
    %1324 = vmatpush1.msra.mxu0 0.0
    %1325 = vmatprep.subr.mxu0 0.0
    %1326 = vmatpush1.msra.mxu0 0.0
    %1327 = vmatprep.subr.mxu0 0.0
    %1328 = vmatpush1.msra.mxu0 0.0
    %1329 = vmatprep.subr.mxu0 0.0
    %1330 = vmatpush1.msra.mxu0 0.0
    %1331 = vmatprep.subr.mxu0 0.0
    %1332 = vmatpush1.msra.mxu0 0.0
    %1333 = vmatprep.subr.mxu0 0.0
    %1334 = vmatpush1.msra.mxu0 0.0
    %1335 = vmatprep.subr.mxu0 0.0
    %1336 = vmatpush1.msra.mxu0 0.0
    %1337 = vmatprep.subr.mxu0 0.0
    %1338 = vmatpush1.msra.mxu0 0.0
    %1339 = vmatprep.subr.mxu0 0.0
    %1340 = vmatpush1.msra.mxu0 0.0
    %1341 = vmatprep.subr.mxu0 0.0
    %1342 = vmatpush1.msra.mxu0 0.0
    %1343 = vmatprep.subr.mxu0 0.0
    %1344 = vmatpush1.msra.mxu0 0.0
    %1345 = vmatprep.subr.mxu0 0.0
    %1346 = vmatpush1.msra.mxu0 0.0
    %1347 = vmatprep.subr.mxu0 0.0
    %1348 = vmatpush1.msra.mxu0 0.0
    %1349 = vmatprep.subr.mxu0 0.0
    %1350 = vmatpush1.msra.mxu0 0.0
    %1351 = vmatprep.subr.mxu0 0.0
    %1352 = vmatpush1.msra.mxu0 0.0
    %1353 = vmatprep.subr.mxu0 0.0
    %1354 = vmatpush1.msra.mxu0 0.0
    %1355 = vmatprep.subr.mxu0 0.0
    %1356 = vmatpush1.msra.mxu0 0.0
    %1357 = vmatprep.subr.mxu0 0.0
    %1358 = vmatpush1.msra.mxu0 0.0
    %1359 = vmatprep.subr.mxu0 0.0
    %1360 = vmatpush1.msra.mxu0 0.0
    %1361 = vmatprep.subr.mxu0 0.0
    %1362 = vmatpush1.msra.mxu0 0.0
    %1363 = vmatprep.subr.mxu0 0.0
    %1364 = vmatpush1.msra.mxu0 0.0
    %1365 = vmatprep.subr.mxu0 0.0
    %1366 = vmatpush1.msra.mxu0 0.0
    %1367 = vmatprep.subr.mxu0 0.0
    %1368 = vmatpush1.msra.mxu0 0.0
    %1369 = vmatprep.subr.mxu0 0.0
    %1370 = vmatpush1.msra.mxu0 0.0
    %1371 = vmatprep.mubr.f32.mxu0 0.0
    %1372 = vmatmul.mubr.f32.gmra.mrb[0].mxu0 %v1302
    %v1373 = vpop.f32.mrb[0].mxu0
    %v1374 = vadd.f32 0.0, %v1373
    %v1375 = vpop.f32.mrb[0].mxu0
    %1376 = vmatprep.mubr.f32.mxu0 0.0
    %1377 = vmatmul.mubr.f32.gmra.mrb[0].mxu0 %v1305
    %v1378 = vpop.f32.mrb[0].mxu0
    %v1379 = vadd.f32 0.0, %v1378
    %v1380 = vpop.f32.mrb[0].mxu0
    %1381 = vdwg.mxu0
    %v1383 = vsel %vm445, %v1374, 0
    %v1386 = vsel %vm445, %v1379, 0
    %1388 = vmatprep.subr.mxu0 0.0
    %1389 = vmatpush1.msra.mxu0 %v246
    %1390 = vmatprep.subr.mxu0 0.0
    %1391 = vmatpush1.msra.mxu0 %v251
    %1392 = vmatprep.subr.mxu0 0.0
    %1393 = vmatpush1.msra.mxu0 0.0
    %1394 = vmatprep.subr.mxu0 0.0
    %1395 = vmatpush1.msra.mxu0 0.0
    %1396 = vmatprep.subr.mxu0 0.0
    %1397 = vmatpush1.msra.mxu0 0.0
    %1398 = vmatprep.subr.mxu0 0.0
    %1399 = vmatpush1.msra.mxu0 0.0
    %1400 = vmatprep.subr.mxu0 0.0
    %1401 = vmatpush1.msra.mxu0 0.0
    %1402 = vmatprep.subr.mxu0 0.0
    %1403 = vmatpush1.msra.mxu0 0.0
    %1404 = vmatprep.subr.mxu0 0.0
    %1405 = vmatpush1.msra.mxu0 0.0
    %1406 = vmatprep.subr.mxu0 0.0
    %1407 = vmatpush1.msra.mxu0 0.0
    %1408 = vmatprep.subr.mxu0 0.0
    %1409 = vmatpush1.msra.mxu0 0.0
    %1410 = vmatprep.subr.mxu0 0.0
    %1411 = vmatpush1.msra.mxu0 0.0
    %1412 = vmatprep.subr.mxu0 0.0
    %1413 = vmatpush1.msra.mxu0 0.0
    %1414 = vmatprep.subr.mxu0 0.0
    %1415 = vmatpush1.msra.mxu0 0.0
    %1416 = vmatprep.subr.mxu0 0.0
    %1417 = vmatpush1.msra.mxu0 0.0
    %1418 = vmatprep.subr.mxu0 0.0
    %1419 = vmatpush1.msra.mxu0 0.0
    %1420 = vmatprep.subr.mxu0 0.0
    %1421 = vmatpush1.msra.mxu0 0.0
    %1422 = vmatprep.subr.mxu0 0.0
    %1423 = vmatpush1.msra.mxu0 0.0
    %1424 = vmatprep.subr.mxu0 0.0
    %1425 = vmatpush1.msra.mxu0 0.0
    %1426 = vmatprep.subr.mxu0 0.0
    %1427 = vmatpush1.msra.mxu0 0.0
    %1428 = vmatprep.subr.mxu0 0.0
    %1429 = vmatpush1.msra.mxu0 0.0
    %1430 = vmatprep.subr.mxu0 0.0
    %1431 = vmatpush1.msra.mxu0 0.0
    %1432 = vmatprep.subr.mxu0 0.0
    %1433 = vmatpush1.msra.mxu0 0.0
    %1434 = vmatprep.subr.mxu0 0.0
    %1435 = vmatpush1.msra.mxu0 0.0
    %1436 = vmatprep.subr.mxu0 0.0
    %1437 = vmatpush1.msra.mxu0 0.0
    %1438 = vmatprep.subr.mxu0 0.0
    %1439 = vmatpush1.msra.mxu0 0.0
    %1440 = vmatprep.subr.mxu0 0.0
    %1441 = vmatpush1.msra.mxu0 0.0
    %1442 = vmatprep.subr.mxu0 0.0
    %1443 = vmatpush1.msra.mxu0 0.0
    %1444 = vmatprep.subr.mxu0 0.0
    %1445 = vmatpush1.msra.mxu0 0.0
    %1446 = vmatprep.subr.mxu0 0.0
    %1447 = vmatpush1.msra.mxu0 0.0
    %1448 = vmatprep.subr.mxu0 0.0
    %1449 = vmatpush1.msra.mxu0 0.0
    %1450 = vmatprep.subr.mxu0 0.0
    %1451 = vmatpush1.msra.mxu0 0.0
    %1452 = vmatprep.mubr.f32.mxu0 0.0
    %1453 = vmatmul.mubr.f32.gmra.mrb[0].mxu0 %v1383
    %v1454 = vpop.f32.mrb[0].mxu0
    %v1455 = vadd.f32 %v347, %v1454
    %v1456 = vpop.f32.mrb[0].mxu0
    %1457 = vmatprep.mubr.f32.mxu0 0.0
    %1458 = vmatmul.mubr.f32.gmra.mrb[0].mxu0 %v1386
    %v1459 = vpop.f32.mrb[0].mxu0
    %v1460 = vadd.f32 %v348, %v1459
    %v1461 = vpop.f32.mrb[0].mxu0
    %1462 = vdwg.mxu0
    %v1463 = vxor.u32 %v1455, 2147483648
    %v1464 = vxor.u32 %v1460, 2147483648
    %v1465 = vmul.f32 %v1463, 1.442695
    %v1466 = vpow.pop %v1465
    %v1467 = vmul.f32 %v1464, 1.442695
    %v1468 = vpow.pop %v1467
    %v1469 = vadd.f32 %v1466, 1.0
    %v1470 = vadd.f32 %v1468, 1.0
    %v1471 = vrcp.pop %v1469
    %v1472 = vmul.f32 1.0, %v1471
    %v1473 = vrcp.pop %v1470
    %v1474 = vmul.f32 1.0, %v1473
    %v1476 = vsel %vm546, %v1474, 0
    %1478 = vmatprep.subr.mxu0 0.0
    %1479 = vmatpush1.msra.mxu0 %v1472
    %1480 = vmatprep.subr.mxu0 0.0
    %1481 = vmatpush1.msra.mxu0 %v1476
    %1482 = vmatprep.subr.mxu0 0.0
    %1483 = vmatpush1.msra.mxu0 0.0
    %1484 = vmatprep.subr.mxu0 0.0
    %1485 = vmatpush1.msra.mxu0 0.0
    %1486 = vmatprep.subr.mxu0 0.0
    %1487 = vmatpush1.msra.mxu0 0.0
    %1488 = vmatprep.subr.mxu0 0.0
    %1489 = vmatpush1.msra.mxu0 0.0
    %1490 = vmatprep.subr.mxu0 0.0
    %1491 = vmatpush1.msra.mxu0 0.0
    %1492 = vmatprep.subr.mxu0 0.0
    %1493 = vmatpush1.msra.mxu0 0.0
    %1494 = vmatprep.subr.mxu0 0.0
    %1495 = vmatpush1.msra.mxu0 0.0
    %1496 = vmatprep.subr.mxu0 0.0
    %1497 = vmatpush1.msra.mxu0 0.0
    %1498 = vmatprep.subr.mxu0 0.0
    %1499 = vmatpush1.msra.mxu0 0.0
    %1500 = vmatprep.subr.mxu0 0.0
    %1501 = vmatpush1.msra.mxu0 0.0
    %1502 = vmatprep.subr.mxu0 0.0
    %1503 = vmatpush1.msra.mxu0 0.0
    %1504 = vmatprep.subr.mxu0 0.0
    %1505 = vmatpush1.msra.mxu0 0.0
    %1506 = vmatprep.subr.mxu0 0.0
    %1507 = vmatpush1.msra.mxu0 0.0
    %1508 = vmatprep.subr.mxu0 0.0
    %1509 = vmatpush1.msra.mxu0 0.0
    %1510 = vmatprep.subr.mxu0 0.0
    %1511 = vmatpush1.msra.mxu0 0.0
    %1512 = vmatprep.subr.mxu0 0.0
    %1513 = vmatpush1.msra.mxu0 0.0
    %1514 = vmatprep.subr.mxu0 0.0
    %1515 = vmatpush1.msra.mxu0 0.0
    %1516 = vmatprep.subr.mxu0 0.0
    %1517 = vmatpush1.msra.mxu0 0.0
    %1518 = vmatprep.subr.mxu0 0.0
    %1519 = vmatpush1.msra.mxu0 0.0
    %1520 = vmatprep.subr.mxu0 0.0
    %1521 = vmatpush1.msra.mxu0 0.0
    %1522 = vmatprep.subr.mxu0 0.0
    %1523 = vmatpush1.msra.mxu0 0.0
    %1524 = vmatprep.subr.mxu0 0.0
    %1525 = vmatpush1.msra.mxu0 0.0
    %1526 = vmatprep.subr.mxu0 0.0
    %1527 = vmatpush1.msra.mxu0 0.0
    %1528 = vmatprep.subr.mxu0 0.0
    %1529 = vmatpush1.msra.mxu0 0.0
    %1530 = vmatprep.subr.mxu0 0.0
    %1531 = vmatpush1.msra.mxu0 0.0
    %1532 = vmatprep.subr.mxu0 0.0
    %1533 = vmatpush1.msra.mxu0 0.0
    %1534 = vmatprep.subr.mxu0 0.0
    %1535 = vmatpush1.msra.mxu0 0.0
    %1536 = vmatprep.subr.mxu0 0.0
    %1537 = vmatpush1.msra.mxu0 0.0
    %1538 = vmatprep.subr.mxu0 0.0
    %1539 = vmatpush1.msra.mxu0 0.0
    %1540 = vmatprep.subr.mxu0 0.0
    %1541 = vmatpush1.msra.mxu0 0.0
    %1542 = vmatprep.mubr.f32.mxu0 0.0
    %1543 = vmatmul.mubr.f32.gmra.mrb[0].mxu0 %v541
    %v1544 = vpop.f32.mrb[0].mxu0
    %v1545 = vadd.f32 0.0, %v1544
    %v1546 = vpop.f32.mrb[0].mxu0
    %1547 = vmatprep.mubr.f32.mxu0 0.0
    %1548 = vmatmul.mubr.f32.gmra.mrb[0].mxu0 %v544
    %v1549 = vpop.f32.mrb[0].mxu0
    %v1550 = vadd.f32 0.0, %v1549
    %v1551 = vpop.f32.mrb[0].mxu0
    %1552 = vdwg.mxu0
    %v1553 = vsel %vm539, %v1545, -inf
    %v1554 = vsel %vm626, %v1550, -inf
    %v1555 = vmax.f32 %v1553, %v1554
    %v1556 = vrot.slane %v1555, 4
    %v1557 = vmax.f32 %v1555, %v1556
    %v1558 = vrot.slane %v1557, 2
    %v1559 = vmax.f32 %v1557, %v1558
    %v1560 = vrot.slane %v1559, 1
    %v1561 = vmax.f32 %v1559, %v1560
    %v1562 = vsub.f32 %v1545, %v1561
    %v1563 = vsub.f32 %v1550, %v1561
    %v1564 = vmul.f32 %v1562, 1.442695
    %v1565 = vpow.pop %v1564
    %v1566 = vmul.f32 %v1563, 1.442695
    %v1567 = vpow.pop %v1566
    %v1568 = vsel %vm539, %v1565, 0.0
    %v1569 = vsel %vm626, %v1567, 0.0
    %v1570 = vadd.f32 %v1568, %v1569
    %v1571 = vrot.slane %v1570, 4
    %v1572 = vadd.f32 %v1570, %v1571
    %v1573 = vrot.slane %v1572, 2
    %v1574 = vadd.f32 %v1572, %v1573
    %v1575 = vrot.slane %v1574, 1
    %v1576 = vadd.f32 %v1574, %v1575
    %v1577 = vrcp.pop %v1576
    %v1578 = vmul.f32 %v1565, %v1577
    %v1579 = vmul.f32 %v1567, %v1577
    %v1581 = vsel %vm539, %v1578, 0
    %v1584 = vsel %vm539, %v1579, 0
    %1586 = vmatprep.subr.mxu0 0.0
    %1587 = vmatpush1.xpose.msra.mxu0 %v1581
    %1588 = vmatprep.subr.mxu0 0.0
    %1589 = vmatpush1.xpose.msra.mxu0 %v1584
    %1590 = vmatprep.subr.mxu0 0.0
    %1591 = vmatpush1.xpose.msra.mxu0 0.0
    %1592 = vmatprep.subr.mxu0 0.0
    %1593 = vmatpush1.xpose.msra.mxu0 0.0
    %1594 = vmatprep.subr.mxu0 0.0
    %1595 = vmatpush1.xpose.msra.mxu0 0.0
    %1596 = vmatprep.subr.mxu0 0.0
    %1597 = vmatpush1.xpose.msra.mxu0 0.0
    %1598 = vmatprep.subr.mxu0 0.0
    %1599 = vmatpush1.xpose.msra.mxu0 0.0
    %1600 = vmatprep.subr.mxu0 0.0
    %1601 = vmatpush1.xpose.msra.mxu0 0.0
    %1602 = vmatprep.subr.mxu0 0.0
    %1603 = vmatpush1.xpose.msra.mxu0 0.0
    %1604 = vmatprep.subr.mxu0 0.0
    %1605 = vmatpush1.xpose.msra.mxu0 0.0
    %1606 = vmatprep.subr.mxu0 0.0
    %1607 = vmatpush1.xpose.msra.mxu0 0.0
    %1608 = vmatprep.subr.mxu0 0.0
    %1609 = vmatpush1.xpose.msra.mxu0 0.0
    %1610 = vmatprep.subr.mxu0 0.0
    %1611 = vmatpush1.xpose.msra.mxu0 0.0
    %1612 = vmatprep.subr.mxu0 0.0
    %1613 = vmatpush1.xpose.msra.mxu0 0.0
    %1614 = vmatprep.subr.mxu0 0.0
    %1615 = vmatpush1.xpose.msra.mxu0 0.0
    %1616 = vmatprep.subr.mxu0 0.0
    %1617 = vmatpush1.xpose.msra.mxu0 0.0
    %1618 = vmatprep.subr.mxu0 0.0
    %1619 = vmatpush1.xpose.msra.mxu0 0.0
    %1620 = vmatprep.subr.mxu0 0.0
    %1621 = vmatpush1.xpose.msra.mxu0 0.0
    %1622 = vmatprep.subr.mxu0 0.0
    %1623 = vmatpush1.xpose.msra.mxu0 0.0
    %1624 = vmatprep.subr.mxu0 0.0
    %1625 = vmatpush1.xpose.msra.mxu0 0.0
    %1626 = vmatprep.subr.mxu0 0.0
    %1627 = vmatpush1.xpose.msra.mxu0 0.0
    %1628 = vmatprep.subr.mxu0 0.0
    %1629 = vmatpush1.xpose.msra.mxu0 0.0
    %1630 = vmatprep.subr.mxu0 0.0
    %1631 = vmatpush1.xpose.msra.mxu0 0.0
    %1632 = vmatprep.subr.mxu0 0.0
    %1633 = vmatpush1.xpose.msra.mxu0 0.0
    %1634 = vmatprep.subr.mxu0 0.0
    %1635 = vmatpush1.xpose.msra.mxu0 0.0
    %1636 = vmatprep.subr.mxu0 0.0
    %1637 = vmatpush1.xpose.msra.mxu0 0.0
    %1638 = vmatprep.subr.mxu0 0.0
    %1639 = vmatpush1.xpose.msra.mxu0 0.0
    %1640 = vmatprep.subr.mxu0 0.0
    %1641 = vmatpush1.xpose.msra.mxu0 0.0
    %1642 = vmatprep.subr.mxu0 0.0
    %1643 = vmatpush1.xpose.msra.mxu0 0.0
    %1644 = vmatprep.subr.mxu0 0.0
    %1645 = vmatpush1.xpose.msra.mxu0 0.0
    %1646 = vmatprep.subr.mxu0 0.0
    %1647 = vmatpush1.xpose.msra.mxu0 0.0
    %1648 = vmatprep.subr.mxu0 0.0
    %1649 = vmatpush1.xpose.msra.mxu0 0.0
    %1650 = vmatprep.mubr.f32.mxu0 0.0
    %1651 = vmatmul.mubr.f32.gmra.mrb[0].mxu0 %v654
    %v1652 = vpop.f32.mrb[0].mxu0
    %v1653 = vadd.f32 0.0, %v1652
    %v1654 = vpop.f32.mrb[0].mxu0
    %1655 = vdwg.mxu0
    %v1657 = vsel %vm539, %v1653, 0
    %1659 = vmatprep.subr.mxu0 0.0
    %1660 = vmatpush1.msra.mxu0 %v329
    %1661 = vmatprep.subr.mxu0 0.0
    %1662 = vmatpush1.msra.mxu0 %v736
    %1663 = vmatprep.subr.mxu0 0.0
    %1664 = vmatpush1.msra.mxu0 0.0
    %1665 = vmatprep.subr.mxu0 0.0
    %1666 = vmatpush1.msra.mxu0 0.0
    %1667 = vmatprep.subr.mxu0 0.0
    %1668 = vmatpush1.msra.mxu0 0.0
    %1669 = vmatprep.subr.mxu0 0.0
    %1670 = vmatpush1.msra.mxu0 0.0
    %1671 = vmatprep.subr.mxu0 0.0
    %1672 = vmatpush1.msra.mxu0 0.0
    %1673 = vmatprep.subr.mxu0 0.0
    %1674 = vmatpush1.msra.mxu0 0.0
    %1675 = vmatprep.subr.mxu0 0.0
    %1676 = vmatpush1.msra.mxu0 0.0
    %1677 = vmatprep.subr.mxu0 0.0
    %1678 = vmatpush1.msra.mxu0 0.0
    %1679 = vmatprep.subr.mxu0 0.0
    %1680 = vmatpush1.msra.mxu0 0.0
    %1681 = vmatprep.subr.mxu0 0.0
    %1682 = vmatpush1.msra.mxu0 0.0
    %1683 = vmatprep.subr.mxu0 0.0
    %1684 = vmatpush1.msra.mxu0 0.0
    %1685 = vmatprep.subr.mxu0 0.0
    %1686 = vmatpush1.msra.mxu0 0.0
    %1687 = vmatprep.subr.mxu0 0.0
    %1688 = vmatpush1.msra.mxu0 0.0
    %1689 = vmatprep.subr.mxu0 0.0
    %1690 = vmatpush1.msra.mxu0 0.0
    %1691 = vmatprep.subr.mxu0 0.0
    %1692 = vmatpush1.msra.mxu0 0.0
    %1693 = vmatprep.subr.mxu0 0.0
    %1694 = vmatpush1.msra.mxu0 0.0
    %1695 = vmatprep.subr.mxu0 0.0
    %1696 = vmatpush1.msra.mxu0 0.0
    %1697 = vmatprep.subr.mxu0 0.0
    %1698 = vmatpush1.msra.mxu0 0.0
    %1699 = vmatprep.subr.mxu0 0.0
    %1700 = vmatpush1.msra.mxu0 0.0
    %1701 = vmatprep.subr.mxu0 0.0
    %1702 = vmatpush1.msra.mxu0 0.0
    %1703 = vmatprep.subr.mxu0 0.0
    %1704 = vmatpush1.msra.mxu0 0.0
    %1705 = vmatprep.subr.mxu0 0.0
    %1706 = vmatpush1.msra.mxu0 0.0
    %1707 = vmatprep.subr.mxu0 0.0
    %1708 = vmatpush1.msra.mxu0 0.0
    %1709 = vmatprep.subr.mxu0 0.0
    %1710 = vmatpush1.msra.mxu0 0.0
    %1711 = vmatprep.subr.mxu0 0.0
    %1712 = vmatpush1.msra.mxu0 0.0
    %1713 = vmatprep.subr.mxu0 0.0
    %1714 = vmatpush1.msra.mxu0 0.0
    %1715 = vmatprep.subr.mxu0 0.0
    %1716 = vmatpush1.msra.mxu0 0.0
    %1717 = vmatprep.subr.mxu0 0.0
    %1718 = vmatpush1.msra.mxu0 0.0
    %1719 = vmatprep.subr.mxu0 0.0
    %1720 = vmatpush1.msra.mxu0 0.0
    %1721 = vmatprep.subr.mxu0 0.0
    %1722 = vmatpush1.msra.mxu0 0.0
    %1723 = vmatprep.mubr.f32.mxu0 0.0
    %1724 = vmatmul.mubr.f32.gmra.mrb[0].mxu0 %v1657
    %v1725 = vpop.f32.mrb[0].mxu0
    %v1726 = vadd.f32 0.0, %v1725
    %v1727 = vpop.f32.mrb[0].mxu0
    %1728 = vdwg.mxu0
    %v1729 = vlaneseq
    %v1730 = vshrl.u32 %v1729, 7
    %v1731 = vsub.s32 0, %v1730
    %v1732 = vrot.slane %v1726, %v1731
    %v1733 = vmul.f32 %v147, %v1732
    %v1734 = vmul.f32 %v148, %v1732
    %v1736 = vsel %vm156, %v1733, 0
    %v1739 = vsel %vm156, %v1734, 0
    %1741 = vmatprep.subr.mxu0 0.0
    %1742 = vmatpush1.msra.mxu0 %v331
    %1743 = vmatprep.subr.mxu0 0.0
    %1744 = vmatpush1.msra.mxu0 %v332
    %1745 = vmatprep.subr.mxu0 0.0
    %1746 = vmatpush1.msra.mxu0 %v333
    %1747 = vmatprep.subr.mxu0 0.0
    %1748 = vmatpush1.msra.mxu0 %v334
    %1749 = vmatprep.subr.mxu0 0.0
    %1750 = vmatpush1.msra.mxu0 %v335
    %1751 = vmatprep.subr.mxu0 0.0
    %1752 = vmatpush1.msra.mxu0 %v336
    %1753 = vmatprep.subr.mxu0 0.0
    %1754 = vmatpush1.msra.mxu0 %v337
    %1755 = vmatprep.subr.mxu0 0.0
    %1756 = vmatpush1.msra.mxu0 0.0
    %1757 = vmatprep.subr.mxu0 0.0
    %1758 = vmatpush1.msra.mxu0 0.0
    %1759 = vmatprep.subr.mxu0 0.0
    %1760 = vmatpush1.msra.mxu0 0.0
    %1761 = vmatprep.subr.mxu0 0.0
    %1762 = vmatpush1.msra.mxu0 0.0
    %1763 = vmatprep.subr.mxu0 0.0
    %1764 = vmatpush1.msra.mxu0 0.0
    %1765 = vmatprep.subr.mxu0 0.0
    %1766 = vmatpush1.msra.mxu0 0.0
    %1767 = vmatprep.subr.mxu0 0.0
    %1768 = vmatpush1.msra.mxu0 0.0
    %1769 = vmatprep.subr.mxu0 0.0
    %1770 = vmatpush1.msra.mxu0 0.0
    %1771 = vmatprep.subr.mxu0 0.0
    %1772 = vmatpush1.msra.mxu0 0.0
    %1773 = vmatprep.subr.mxu0 0.0
    %1774 = vmatpush1.msra.mxu0 0.0
    %1775 = vmatprep.subr.mxu0 0.0
    %1776 = vmatpush1.msra.mxu0 0.0
    %1777 = vmatprep.subr.mxu0 0.0
    %1778 = vmatpush1.msra.mxu0 0.0
    %1779 = vmatprep.subr.mxu0 0.0
    %1780 = vmatpush1.msra.mxu0 0.0
    %1781 = vmatprep.subr.mxu0 0.0
    %1782 = vmatpush1.msra.mxu0 0.0
    %1783 = vmatprep.subr.mxu0 0.0
    %1784 = vmatpush1.msra.mxu0 0.0
    %1785 = vmatprep.subr.mxu0 0.0
    %1786 = vmatpush1.msra.mxu0 0.0
    %1787 = vmatprep.subr.mxu0 0.0
    %1788 = vmatpush1.msra.mxu0 0.0
    %1789 = vmatprep.subr.mxu0 0.0
    %1790 = vmatpush1.msra.mxu0 0.0
    %1791 = vmatprep.subr.mxu0 0.0
    %1792 = vmatpush1.msra.mxu0 0.0
    %1793 = vmatprep.subr.mxu0 0.0
    %1794 = vmatpush1.msra.mxu0 0.0
    %1795 = vmatprep.subr.mxu0 0.0
    %1796 = vmatpush1.msra.mxu0 0.0
    %1797 = vmatprep.subr.mxu0 0.0
    %1798 = vmatpush1.msra.mxu0 0.0
    %1799 = vmatprep.subr.mxu0 0.0
    %1800 = vmatpush1.msra.mxu0 0.0
    %1801 = vmatprep.subr.mxu0 0.0
    %1802 = vmatpush1.msra.mxu0 0.0
    %1803 = vmatprep.subr.mxu0 0.0
    %1804 = vmatpush1.msra.mxu0 0.0
    %1805 = vmatprep.mubr.f32.mxu0 0.0
    %1806 = vmatmul.mubr.f32.gmra.mrb[0].mxu0 %v1736
    %v1807 = vpop.f32.mrb[0].mxu0
    %v1808 = vadd.f32 0.0, %v1807
    %v1809 = vpop.f32.mrb[0].mxu0
    %1810 = vmatprep.mubr.f32.mxu0 0.0
    %1811 = vmatmul.mubr.f32.gmra.mrb[0].mxu0 %v1739
    %v1812 = vpop.f32.mrb[0].mxu0
    %v1813 = vadd.f32 0.0, %v1812
    %v1814 = vpop.f32.mrb[0].mxu0
    %1815 = vdwg.mxu0
    %1818 = vrot.lane.b32.xlu0 %v246, 114
    %v1819 = vpop.permute.xlu0 %1818
    %1820 = vrot.lane.b32.xlu0 %v251, 114
    %v1821 = vpop.permute.xlu0 %1820
    %v1822 = vsel %vm539, %v1819, 0
    %v1824 = vsel %vm539, %v1821, 0
    %v1826 = vsel %vm546, %v1579, 0
    %1828 = vmatprep.subr.mxu0 0.0
    %1829 = vmatpush1.msra.mxu0 %v1578
    %1830 = vmatprep.subr.mxu0 0.0
    %1831 = vmatpush1.msra.mxu0 %v1826
    %1832 = vmatprep.subr.mxu0 0.0
    %1833 = vmatpush1.msra.mxu0 0.0
    %1834 = vmatprep.subr.mxu0 0.0
    %1835 = vmatpush1.msra.mxu0 0.0
    %1836 = vmatprep.subr.mxu0 0.0
    %1837 = vmatpush1.msra.mxu0 0.0
    %1838 = vmatprep.subr.mxu0 0.0
    %1839 = vmatpush1.msra.mxu0 0.0
    %1840 = vmatprep.subr.mxu0 0.0
    %1841 = vmatpush1.msra.mxu0 0.0
    %1842 = vmatprep.subr.mxu0 0.0
    %1843 = vmatpush1.msra.mxu0 0.0
    %1844 = vmatprep.subr.mxu0 0.0
    %1845 = vmatpush1.msra.mxu0 0.0
    %1846 = vmatprep.subr.mxu0 0.0
    %1847 = vmatpush1.msra.mxu0 0.0
    %1848 = vmatprep.subr.mxu0 0.0
    %1849 = vmatpush1.msra.mxu0 0.0
    %1850 = vmatprep.subr.mxu0 0.0
    %1851 = vmatpush1.msra.mxu0 0.0
    %1852 = vmatprep.subr.mxu0 0.0
    %1853 = vmatpush1.msra.mxu0 0.0
    %1854 = vmatprep.subr.mxu0 0.0
    %1855 = vmatpush1.msra.mxu0 0.0
    %1856 = vmatprep.subr.mxu0 0.0
    %1857 = vmatpush1.msra.mxu0 0.0
    %1858 = vmatprep.subr.mxu0 0.0
    %1859 = vmatpush1.msra.mxu0 0.0
    %1860 = vmatprep.subr.mxu0 0.0
    %1861 = vmatpush1.msra.mxu0 0.0
    %1862 = vmatprep.subr.mxu0 0.0
    %1863 = vmatpush1.msra.mxu0 0.0
    %1864 = vmatprep.subr.mxu0 0.0
    %1865 = vmatpush1.msra.mxu0 0.0
    %1866 = vmatprep.subr.mxu0 0.0
    %1867 = vmatpush1.msra.mxu0 0.0
    %1868 = vmatprep.subr.mxu0 0.0
    %1869 = vmatpush1.msra.mxu0 0.0
    %1870 = vmatprep.subr.mxu0 0.0
    %1871 = vmatpush1.msra.mxu0 0.0
    %1872 = vmatprep.subr.mxu0 0.0
    %1873 = vmatpush1.msra.mxu0 0.0
    %1874 = vmatprep.subr.mxu0 0.0
    %1875 = vmatpush1.msra.mxu0 0.0
    %1876 = vmatprep.subr.mxu0 0.0
    %1877 = vmatpush1.msra.mxu0 0.0
    %1878 = vmatprep.subr.mxu0 0.0
    %1879 = vmatpush1.msra.mxu0 0.0
    %1880 = vmatprep.subr.mxu0 0.0
    %1881 = vmatpush1.msra.mxu0 0.0
    %1882 = vmatprep.subr.mxu0 0.0
    %1883 = vmatpush1.msra.mxu0 0.0
    %1884 = vmatprep.subr.mxu0 0.0
    %1885 = vmatpush1.msra.mxu0 0.0
    %1886 = vmatprep.subr.mxu0 0.0
    %1887 = vmatpush1.msra.mxu0 0.0
    %1888 = vmatprep.subr.mxu0 0.0
    %1889 = vmatpush1.msra.mxu0 0.0
    %1890 = vmatprep.subr.mxu0 0.0
    %1891 = vmatpush1.msra.mxu0 0.0
    %1892 = vmatprep.mubr.f32.mxu0 0.0
    %1893 = vmatmul.mubr.f32.gmra.mrb[0].mxu0 %v1822
    %v1894 = vpop.f32.mrb[0].mxu0
    %v1895 = vadd.f32 0.0, %v1894
    %v1896 = vpop.f32.mrb[0].mxu0
    %1897 = vmatprep.mubr.f32.mxu0 0.0
    %1898 = vmatmul.mubr.f32.gmra.mrb[0].mxu0 %v1824
    %v1899 = vpop.f32.mrb[0].mxu0
    %v1900 = vadd.f32 0.0, %v1899
    %v1901 = vpop.f32.mrb[0].mxu0
    %1902 = vdwg.mxu0
    %v1904 = vsel %vm539, %v1808, 0
    %v1907 = vsel %vm539, %v1813, 0
    %v1910 = vsel %vm539, %v1895, 0
    %v1913 = vsel %vm539, %v1900, 0
    %1915 = vmatprep.subr.mxu0 0.0
    %1916 = vmatpush1.xpose.msra.mxu0 %v1910
    %1917 = vmatprep.subr.mxu0 0.0
    %1918 = vmatpush1.xpose.msra.mxu0 %v1913
    %1919 = vmatprep.subr.mxu0 0.0
    %1920 = vmatpush1.xpose.msra.mxu0 0.0
    %1921 = vmatprep.subr.mxu0 0.0
    %1922 = vmatpush1.xpose.msra.mxu0 0.0
    %1923 = vmatprep.subr.mxu0 0.0
    %1924 = vmatpush1.xpose.msra.mxu0 0.0
    %1925 = vmatprep.subr.mxu0 0.0
    %1926 = vmatpush1.xpose.msra.mxu0 0.0
    %1927 = vmatprep.subr.mxu0 0.0
    %1928 = vmatpush1.xpose.msra.mxu0 0.0
    %1929 = vmatprep.subr.mxu0 0.0
    %1930 = vmatpush1.xpose.msra.mxu0 0.0
    %1931 = vmatprep.subr.mxu0 0.0
    %1932 = vmatpush1.xpose.msra.mxu0 0.0
    %1933 = vmatprep.subr.mxu0 0.0
    %1934 = vmatpush1.xpose.msra.mxu0 0.0
    %1935 = vmatprep.subr.mxu0 0.0
    %1936 = vmatpush1.xpose.msra.mxu0 0.0
    %1937 = vmatprep.subr.mxu0 0.0
    %1938 = vmatpush1.xpose.msra.mxu0 0.0
    %1939 = vmatprep.subr.mxu0 0.0
    %1940 = vmatpush1.xpose.msra.mxu0 0.0
    %1941 = vmatprep.subr.mxu0 0.0
    %1942 = vmatpush1.xpose.msra.mxu0 0.0
    %1943 = vmatprep.subr.mxu0 0.0
    %1944 = vmatpush1.xpose.msra.mxu0 0.0
    %1945 = vmatprep.subr.mxu0 0.0
    %1946 = vmatpush1.xpose.msra.mxu0 0.0
    %1947 = vmatprep.subr.mxu0 0.0
    %1948 = vmatpush1.xpose.msra.mxu0 0.0
    %1949 = vmatprep.subr.mxu0 0.0
    %1950 = vmatpush1.xpose.msra.mxu0 0.0
    %1951 = vmatprep.subr.mxu0 0.0
    %1952 = vmatpush1.xpose.msra.mxu0 0.0
    %1953 = vmatprep.subr.mxu0 0.0
    %1954 = vmatpush1.xpose.msra.mxu0 0.0
    %1955 = vmatprep.subr.mxu0 0.0
    %1956 = vmatpush1.xpose.msra.mxu0 0.0
    %1957 = vmatprep.subr.mxu0 0.0
    %1958 = vmatpush1.xpose.msra.mxu0 0.0
    %1959 = vmatprep.subr.mxu0 0.0
    %1960 = vmatpush1.xpose.msra.mxu0 0.0
    %1961 = vmatprep.subr.mxu0 0.0
    %1962 = vmatpush1.xpose.msra.mxu0 0.0
    %1963 = vmatprep.subr.mxu0 0.0
    %1964 = vmatpush1.xpose.msra.mxu0 0.0
    %1965 = vmatprep.subr.mxu0 0.0
    %1966 = vmatpush1.xpose.msra.mxu0 0.0
    %1967 = vmatprep.subr.mxu0 0.0
    %1968 = vmatpush1.xpose.msra.mxu0 0.0
    %1969 = vmatprep.subr.mxu0 0.0
    %1970 = vmatpush1.xpose.msra.mxu0 0.0
    %1971 = vmatprep.subr.mxu0 0.0
    %1972 = vmatpush1.xpose.msra.mxu0 0.0
    %1973 = vmatprep.subr.mxu0 0.0
    %1974 = vmatpush1.xpose.msra.mxu0 0.0
    %1975 = vmatprep.subr.mxu0 0.0
    %1976 = vmatpush1.xpose.msra.mxu0 0.0
    %1977 = vmatprep.subr.mxu0 0.0
    %1978 = vmatpush1.xpose.msra.mxu0 0.0
    %1979 = vmatprep.mubr.f32.mxu0 0.0
    %1980 = vmatmul.mubr.f32.gmra.mrb[0].mxu0 %v1904
    %v1981 = vpop.f32.mrb[0].mxu0
    %v1982 = vadd.f32 %v351, %v1981
    %v1983 = vpop.f32.mrb[0].mxu0
    %1984 = vmatprep.mubr.f32.mxu0 0.0
    %1985 = vmatmul.mubr.f32.gmra.mrb[0].mxu0 %v1907
    %v1986 = vpop.f32.mrb[0].mxu0
    %v1987 = vadd.f32 %v352, %v1986
    %v1988 = vpop.f32.mrb[0].mxu0
    %1989 = vdwg.mxu0
    %v1990 = vxor.u32 %v1982, 2147483648
    %v1991 = vxor.u32 %v1987, 2147483648
    %v1992 = vmul.f32 %v1990, 1.442695
    %v1993 = vpow.pop %v1992
    %v1994 = vmul.f32 %v1991, 1.442695
    %v1995 = vpow.pop %v1994
    %v1996 = vadd.f32 %v1993, 1.0
    %v1997 = vadd.f32 %v1995, 1.0
    %v1998 = vrcp.pop %v1996
    %v1999 = vmul.f32 1.0, %v1998
    %v2000 = vrcp.pop %v1997
    %v2001 = vmul.f32 1.0, %v2000
    %2002 = vmatprep.subr.mxu0 0.0
    %2003 = vmatpush1.msra.mxu0 %v1999
    %2004 = vmatprep.subr.mxu0 0.0
    %2005 = vmatpush1.msra.mxu0 %v2001
    %2006 = vmatprep.subr.mxu0 0.0
    %2007 = vmatpush1.msra.mxu0 0.0
    %2008 = vmatprep.subr.mxu0 0.0
    %2009 = vmatpush1.msra.mxu0 0.0
    %2010 = vmatprep.subr.mxu0 0.0
    %2011 = vmatpush1.msra.mxu0 0.0
    %2012 = vmatprep.subr.mxu0 0.0
    %2013 = vmatpush1.msra.mxu0 0.0
    %2014 = vmatprep.subr.mxu0 0.0
    %2015 = vmatpush1.msra.mxu0 0.0
    %2016 = vmatprep.subr.mxu0 0.0
    %2017 = vmatpush1.msra.mxu0 0.0
    %2018 = vmatprep.subr.mxu0 0.0
    %2019 = vmatpush1.msra.mxu0 0.0
    %2020 = vmatprep.subr.mxu0 0.0
    %2021 = vmatpush1.msra.mxu0 0.0
    %2022 = vmatprep.subr.mxu0 0.0
    %2023 = vmatpush1.msra.mxu0 0.0
    %2024 = vmatprep.subr.mxu0 0.0
    %2025 = vmatpush1.msra.mxu0 0.0
    %2026 = vmatprep.subr.mxu0 0.0
    %2027 = vmatpush1.msra.mxu0 0.0
    %2028 = vmatprep.subr.mxu0 0.0
    %2029 = vmatpush1.msra.mxu0 0.0
    %2030 = vmatprep.subr.mxu0 0.0
    %2031 = vmatpush1.msra.mxu0 0.0
    %2032 = vmatprep.subr.mxu0 0.0
    %2033 = vmatpush1.msra.mxu0 0.0
    %2034 = vmatprep.subr.mxu0 0.0
    %2035 = vmatpush1.msra.mxu0 0.0
    %2036 = vmatprep.subr.mxu0 0.0
    %2037 = vmatpush1.msra.mxu0 0.0
    %2038 = vmatprep.subr.mxu0 0.0
    %2039 = vmatpush1.msra.mxu0 0.0
    %2040 = vmatprep.subr.mxu0 0.0
    %2041 = vmatpush1.msra.mxu0 0.0
    %2042 = vmatprep.subr.mxu0 0.0
    %2043 = vmatpush1.msra.mxu0 0.0
    %2044 = vmatprep.subr.mxu0 0.0
    %2045 = vmatpush1.msra.mxu0 0.0
    %2046 = vmatprep.subr.mxu0 0.0
    %2047 = vmatpush1.msra.mxu0 0.0
    %2048 = vmatprep.subr.mxu0 0.0
    %2049 = vmatpush1.msra.mxu0 0.0
    %2050 = vmatprep.subr.mxu0 0.0
    %2051 = vmatpush1.msra.mxu0 0.0
    %2052 = vmatprep.subr.mxu0 0.0
    %2053 = vmatpush1.msra.mxu0 0.0
    %2054 = vmatprep.subr.mxu0 0.0
    %2055 = vmatpush1.msra.mxu0 0.0
    %2056 = vmatprep.subr.mxu0 0.0
    %2057 = vmatpush1.msra.mxu0 0.0
    %2058 = vmatprep.subr.mxu0 0.0
    %2059 = vmatpush1.msra.mxu0 0.0
    %2060 = vmatprep.subr.mxu0 0.0
    %2061 = vmatpush1.msra.mxu0 0.0
    %2062 = vmatprep.subr.mxu0 0.0
    %2063 = vmatpush1.msra.mxu0 0.0
    %2064 = vmatprep.subr.mxu0 0.0
    %2065 = vmatpush1.msra.mxu0 0.0
    %2066 = vmatprep.mubr.f32.mxu0 0.0
    %2067 = vmatmul.mubr.f32.gmra.mrb[0].mxu0 %v1082
    %v2068 = vpop.f32.mrb[0].mxu0
    %v2069 = vadd.f32 0.0, %v2068
    %v2070 = vpop.f32.mrb[0].mxu0
    %2071 = vmatprep.mubr.f32.mxu0 0.0
    %2072 = vmatmul.mubr.f32.gmra.mrb[0].mxu0 %v1085
    %v2073 = vpop.f32.mrb[0].mxu0
    %v2074 = vadd.f32 0.0, %v2073
    %v2075 = vpop.f32.mrb[0].mxu0
    %2076 = vdwg.mxu0
    %v2077 = vsel %vm445, %v2069, -inf
    %v2078 = vsel %vm445, %v2074, -inf
    %v2079 = vmax.f32 %v2077, %v2078
    %v2080 = vrot.slane %v2079, 4
    %v2081 = vmax.f32 %v2079, %v2080
    %v2082 = vrot.slane %v2081, 2
    %v2083 = vmax.f32 %v2081, %v2082
    %v2084 = vrot.slane %v2083, 1
    %v2085 = vmax.f32 %v2083, %v2084
    %v2086 = vsub.f32 %v2069, %v2085
    %v2087 = vsub.f32 %v2074, %v2085
    %v2088 = vmul.f32 %v2086, 1.442695
    %v2089 = vpow.pop %v2088
    %v2090 = vmul.f32 %v2087, 1.442695
    %v2091 = vpow.pop %v2090
    %v2092 = vsel %vm445, %v2089, 0.0
    %v2093 = vsel %vm445, %v2091, 0.0
    %v2094 = vadd.f32 %v2092, %v2093
    %v2095 = vrot.slane %v2094, 4
    %v2096 = vadd.f32 %v2094, %v2095
    %v2097 = vrot.slane %v2096, 2
    %v2098 = vadd.f32 %v2096, %v2097
    %v2099 = vrot.slane %v2098, 1
    %v2100 = vadd.f32 %v2098, %v2099
    %v2101 = vrcp.pop %v2100
    %v2102 = vmul.f32 %v2089, %v2101
    %v2103 = vmul.f32 %v2091, %v2101
    %v2104 = vmul.f32 %v2102, %v355
    %v2105 = vmul.f32 %v2103, %v356
    %v2106 = vsel %vm445, %v2104, 0.0
    %2107 = vadd.xlane.f32.xlu0 %v2106
    %v2108 = vpop.xlane.xlu0 %2107
    %v2109 = vsel %vm445, %v2105, 0.0
    %2110 = vadd.xlane.f32.xlu0 %v2109
    %v2111 = vpop.xlane.xlu0 %2110
    %v2112 = vmul.f32 %v147, %v2108
    %v2113 = vmul.f32 %v148, %v2111
    %2114 = vst.msk [vmem:[#allocation2 + $0x10] sm:$0xff] %vm156, %v2112
    %2115 = vst.msk [vmem:[#allocation2 + $0x18] sm:$0xff] %vm156, %v2113
    %v2116 = vmul.f32 %v353, %v2102
    %v2117 = vmul.f32 %v354, %v2103
    %v2119 = vsel %vm445, %v2116, 0
    %v2122 = vsel %vm445, %v2117, 0
    %2124 = vmatprep.subr.mxu0 0.0
    %2125 = vmatpush1.msra.mxu0 %v2112
    %2126 = vmatprep.subr.mxu0 0.0
    %2127 = vmatpush1.msra.mxu0 %v2113
    %2128 = vmatprep.subr.mxu0 0.0
    %2129 = vmatpush1.msra.mxu0 0.0
    %2130 = vmatprep.subr.mxu0 0.0
    %2131 = vmatpush1.msra.mxu0 0.0
    %2132 = vmatprep.subr.mxu0 0.0
    %2133 = vmatpush1.msra.mxu0 0.0
    %2134 = vmatprep.subr.mxu0 0.0
    %2135 = vmatpush1.msra.mxu0 0.0
    %2136 = vmatprep.subr.mxu0 0.0
    %2137 = vmatpush1.msra.mxu0 0.0
    %2138 = vmatprep.subr.mxu0 0.0
    %2139 = vmatpush1.msra.mxu0 0.0
    %2140 = vmatprep.subr.mxu0 0.0
    %2141 = vmatpush1.msra.mxu0 0.0
    %2142 = vmatprep.subr.mxu0 0.0
    %2143 = vmatpush1.msra.mxu0 0.0
    %2144 = vmatprep.subr.mxu0 0.0
    %2145 = vmatpush1.msra.mxu0 0.0
    %2146 = vmatprep.subr.mxu0 0.0
    %2147 = vmatpush1.msra.mxu0 0.0
    %2148 = vmatprep.subr.mxu0 0.0
    %2149 = vmatpush1.msra.mxu0 0.0
    %2150 = vmatprep.subr.mxu0 0.0
    %2151 = vmatpush1.msra.mxu0 0.0
    %2152 = vmatprep.subr.mxu0 0.0
    %2153 = vmatpush1.msra.mxu0 0.0
    %2154 = vmatprep.subr.mxu0 0.0
    %2155 = vmatpush1.msra.mxu0 0.0
    %2156 = vmatprep.subr.mxu0 0.0
    %2157 = vmatpush1.msra.mxu0 0.0
    %2158 = vmatprep.subr.mxu0 0.0
    %2159 = vmatpush1.msra.mxu0 0.0
    %2160 = vmatprep.subr.mxu0 0.0
    %2161 = vmatpush1.msra.mxu0 0.0
    %2162 = vmatprep.subr.mxu0 0.0
    %2163 = vmatpush1.msra.mxu0 0.0
    %2164 = vmatprep.subr.mxu0 0.0
    %2165 = vmatpush1.msra.mxu0 0.0
    %2166 = vmatprep.subr.mxu0 0.0
    %2167 = vmatpush1.msra.mxu0 0.0
    %2168 = vmatprep.subr.mxu0 0.0
    %2169 = vmatpush1.msra.mxu0 0.0
    %2170 = vmatprep.subr.mxu0 0.0
    %2171 = vmatpush1.msra.mxu0 0.0
    %2172 = vmatprep.subr.mxu0 0.0
    %2173 = vmatpush1.msra.mxu0 0.0
    %2174 = vmatprep.subr.mxu0 0.0
    %2175 = vmatpush1.msra.mxu0 0.0
    %2176 = vmatprep.subr.mxu0 0.0
    %2177 = vmatpush1.msra.mxu0 0.0
    %2178 = vmatprep.subr.mxu0 0.0
    %2179 = vmatpush1.msra.mxu0 0.0
    %2180 = vmatprep.subr.mxu0 0.0
    %2181 = vmatpush1.msra.mxu0 0.0
    %2182 = vmatprep.subr.mxu0 0.0
    %2183 = vmatpush1.msra.mxu0 0.0
    %2184 = vmatprep.subr.mxu0 0.0
    %2185 = vmatpush1.msra.mxu0 0.0
    %2186 = vmatprep.subr.mxu0 0.0
    %2187 = vmatpush1.msra.mxu0 0.0
    %2188 = vmatprep.mubr.f32.mxu0 0.0
    %2189 = vmatmul.mubr.f32.gmra.mrb[0].mxu0 %v2119
    %v2190 = vpop.f32.mrb[0].mxu0
    %v2191 = vadd.f32 0.0, %v2190
    %v2192 = vpop.f32.mrb[0].mxu0
    %2193 = vmatprep.mubr.f32.mxu0 0.0
    %2194 = vmatmul.mubr.f32.gmra.mrb[0].mxu0 %v2122
    %v2195 = vpop.f32.mrb[0].mxu0
    %v2196 = vadd.f32 0.0, %v2195
    %v2197 = vpop.f32.mrb[0].mxu0
    %2198 = vdwg.mxu0
    %2201 = vrot.lane.b32.xlu0 %v2191, 56
    %v2202 = vpop.permute.xlu0 %2201
    %2203 = vrot.lane.b32.xlu0 %v2196, 56
    %v2204 = vpop.permute.xlu0 %2203
    %2207 = vst.msk [vmem:[#allocation2 + $0x10] sm:$0xff] %vm1292, %v2202
    %2208 = vst.msk [vmem:[#allocation2 + $0x18] sm:$0xff] %vm1292, %v2204
    %v2209 = vld [vmem:[%s9 + $0x1] sm:$0xf]
    %v2210 = vld [vmem:[%s9 + $0x5] sm:$0x3]
    %v2211 = vld [vmem:[%s9 + $0x7] sm:$0x3]
    %v2212 = vld [vmem:[%s9 + $0x9] sm:$0x3]
    %v2213 = vld [vmem:[#allocation2] sm:$0xff]
    %v2214 = vld [vmem:[#allocation2 + $0x8] sm:$0xff]
    %v2215 = vld [vmem:[#allocation2 + $0x10] sm:$0xff]
    %v2216 = vld [vmem:[#allocation2 + $0x18] sm:$0xff]
    %v2217 = vld [vmem:[#allocation12] sm:$0xff]
    %v2218 = vld [vmem:[#allocation12 + $0x8] sm:$0xff]
    %v2219 = vld [vmem:[#allocation12 + $0x10] sm:$0xff]
    %v2220 = vld [vmem:[#allocation12 + $0x18] sm:$0xff]
    %v2221 = vld [vmem:[#allocation12 + $0x20] sm:$0xff]
    %v2222 = vld [vmem:[#allocation12 + $0x28] sm:$0xff]
    %v2223 = vld [vmem:[#allocation12 + $0x30] sm:$0xff]
    %v2224 = vld [vmem:[#allocation12 + $0x38] sm:$0xff]
    %v2225 = vld [vmem:[#allocation12 + $0x40] sm:$0xff]
    %v2226 = vld [vmem:[#allocation12 + $0x48] sm:$0xff]
    %v2227 = vld [vmem:[#allocation12 + $0x50] sm:$0xff]
    %v2228 = vld [vmem:[#allocation12 + $0x58] sm:$0xff]
    %v2229 = vld [vmem:[#allocation12 + $0x60] sm:$0xff]
    %v2230 = vld [vmem:[#allocation12 + $0x68] sm:$0xff]
    %v2231 = vld [vmem:[#allocation12 + $0x70] sm:$0xff]
    %v2232 = vld [vmem:[#allocation12 + $0x78] sm:$0xff]
    %v2233 = vld [vmem:[#allocation12 + $0x80] sm:$0xff]
    %v2234 = vld [vmem:[#allocation12 + $0x88] sm:$0xff]
    %v2235 = vld [vmem:[#allocation12 + $0x90] sm:$0xff]
    %v2236 = vld [vmem:[#allocation12 + $0x98] sm:$0xff]
    %v2237 = vld [vmem:[#allocation12 + $0xa0] sm:$0xff]
    %v2238 = vld [vmem:[#allocation12 + $0xa8] sm:$0xff]
    %v2239 = vld [vmem:[#allocation12 + $0xb0] sm:$0xff]
    %v2240 = vld [vmem:[#allocation12 + $0xb8] sm:$0xff]
    %v2241 = vld [vmem:[#allocation12 + $0xc0] sm:$0xff]
    %v2242 = vld [vmem:[#allocation12 + $0xc8] sm:$0xff]
    %v2243 = vld [vmem:[#allocation12 + $0xd0] sm:$0xff]
    %v2244 = vld [vmem:[#allocation12 + $0xd8] sm:$0xff]
    %v2245 = vld [vmem:[#allocation12 + $0xe0] sm:$0xff]
    %v2246 = vld [vmem:[#allocation12 + $0xe8] sm:$0xff]
    %v2247 = vld [vmem:[#allocation12 + $0xf0] sm:$0xff]
    %v2248 = vld [vmem:[#allocation12 + $0xf8] sm:$0xff]
    %v2249 = vld [vmem:[#allocation12 + $0x100] sm:$0xff]
    %v2250 = vld [vmem:[#allocation12 + $0x108] sm:$0xff]
    %v2251 = vld [vmem:[#allocation12 + $0x110] sm:$0xff]
    %v2252 = vld [vmem:[#allocation12 + $0x118] sm:$0xff]
    %v2253 = vld [vmem:[#allocation12 + $0x120] sm:$0xff]
    %v2254 = vld [vmem:[#allocation12 + $0x128] sm:$0xff]
    %v2255 = vld [vmem:[#allocation12 + $0x130] sm:$0xff]
    %v2256 = vld [vmem:[#allocation12 + $0x138] sm:$0xff]
    %v2257 = vld [vmem:[#allocation12 + $0x140] sm:$0xff]
    %v2258 = vld [vmem:[#allocation12 + $0x148] sm:$0xff]
    %v2259 = vld [vmem:[#allocation12 + $0x150] sm:$0xff]
    %v2260 = vld [vmem:[#allocation12 + $0x158] sm:$0xff]
    %v2261 = vld [vmem:[#allocation12 + $0x160] sm:$0xff]
    %v2262 = vld [vmem:[#allocation12 + $0x168] sm:$0xff]
    %v2263 = vld [vmem:[#allocation12 + $0x170] sm:$0xff]
    %v2264 = vld [vmem:[#allocation12 + $0x178] sm:$0xff]
    %v2265 = vld [vmem:[#allocation12 + $0x180] sm:$0xff]
    %v2266 = vld [vmem:[#allocation12 + $0x188] sm:$0xff]
    %v2267 = vld [vmem:[#allocation12 + $0x190] sm:$0xff]
    %v2268 = vld [vmem:[#allocation12 + $0x198] sm:$0xff]
    %v2269 = vld [vmem:[#allocation12 + $0x1a0] sm:$0xff]
    %v2270 = vld [vmem:[#allocation12 + $0x1a8] sm:$0xff]
    %v2271 = vld [vmem:[#allocation12 + $0x1b0] sm:$0xff]
    %v2272 = vld [vmem:[#allocation12 + $0x1b8] sm:$0xff]
    %v2274 = vlaneseq
    %v2275 = vshrl.u32 %v2274, 7
    %v2276 = vsub.s32 0, %v2275
    %v2277 = vrot.slane %v2209, %v2276
    %v2278 = vlaneseq
    %v2279 = vshrl.u32 %v2278, 7
    %v2280 = vsub.s32 1, %v2279
    %v2281 = vrot.slane %v2209, %v2280
    %v2282 = vlaneseq
    %v2283 = vshrl.u32 %v2282, 7
    %v2284 = vsub.s32 2, %v2283
    %v2285 = vrot.slane %v2209, %v2284
    %v2286 = vlaneseq
    %v2287 = vshrl.u32 %v2286, 7
    %v2288 = vsub.s32 3, %v2287
    %v2289 = vrot.slane %v2209, %v2288
    %vm2294 = vcmask 916480
    %v2296 = vsel %vm2294, %v2213, 0
    %v2299 = vsel %vm2294, %v2214, 0
    %v2302 = vsel %vm2294, %v2215, 0
    %v2305 = vsel %vm2294, %v2216, 0
    %2307 = vmatprep.subr.mxu0 %v2218
    %2308 = vmatpush1.msra.mxu0 %v2217
    %2309 = vmatprep.subr.mxu0 %v2222
    %2310 = vmatpush1.msra.mxu0 %v2221
    %2311 = vmatprep.subr.mxu0 %v2226
    %2312 = vmatpush1.msra.mxu0 %v2225
    %2313 = vmatprep.subr.mxu0 %v2230
    %2314 = vmatpush1.msra.mxu0 %v2229
    %2315 = vmatprep.subr.mxu0 %v2234
    %2316 = vmatpush1.msra.mxu0 %v2233
    %2317 = vmatprep.subr.mxu0 %v2238
    %2318 = vmatpush1.msra.mxu0 %v2237
    %2319 = vmatprep.subr.mxu0 %v2242
    %2320 = vmatpush1.msra.mxu0 %v2241
    %2321 = vmatprep.subr.mxu0 %v2246
    %2322 = vmatpush1.msra.mxu0 %v2245
    %2323 = vmatprep.subr.mxu0 %v2250
    %2324 = vmatpush1.msra.mxu0 %v2249
    %2325 = vmatprep.subr.mxu0 %v2254
    %2326 = vmatpush1.msra.mxu0 %v2253
    %2327 = vmatprep.subr.mxu0 %v2258
    %2328 = vmatpush1.msra.mxu0 %v2257
    %2329 = vmatprep.subr.mxu0 %v2262
    %2330 = vmatpush1.msra.mxu0 %v2261
    %2331 = vmatprep.subr.mxu0 %v2266
    %2332 = vmatpush1.msra.mxu0 %v2265
    %2333 = vmatprep.subr.mxu0 %v2270
    %2334 = vmatpush1.msra.mxu0 %v2269
    %2335 = vmatprep.subr.mxu0 0.0
    %2336 = vmatpush1.msra.mxu0 0.0
    %2337 = vmatprep.subr.mxu0 0.0
    %2338 = vmatpush1.msra.mxu0 0.0
    %2339 = vmatprep.subr.mxu0 0.0
    %2340 = vmatpush1.msra.mxu0 0.0
    %2341 = vmatprep.subr.mxu0 0.0
    %2342 = vmatpush1.msra.mxu0 0.0
    %2343 = vmatprep.subr.mxu0 0.0
    %2344 = vmatpush1.msra.mxu0 0.0
    %2345 = vmatprep.subr.mxu0 0.0
    %2346 = vmatpush1.msra.mxu0 0.0
    %2347 = vmatprep.subr.mxu0 0.0
    %2348 = vmatpush1.msra.mxu0 0.0
    %2349 = vmatprep.subr.mxu0 0.0
    %2350 = vmatpush1.msra.mxu0 0.0
    %2351 = vmatprep.subr.mxu0 0.0
    %2352 = vmatpush1.msra.mxu0 0.0
    %2353 = vmatprep.subr.mxu0 0.0
    %2354 = vmatpush1.msra.mxu0 0.0
    %2355 = vmatprep.subr.mxu0 0.0
    %2356 = vmatpush1.msra.mxu0 0.0
    %2357 = vmatprep.subr.mxu0 0.0
    %2358 = vmatpush1.msra.mxu0 0.0
    %2359 = vmatprep.subr.mxu0 0.0
    %2360 = vmatpush1.msra.mxu0 0.0
    %2361 = vmatprep.subr.mxu0 0.0
    %2362 = vmatpush1.msra.mxu0 0.0
    %2363 = vmatprep.subr.mxu0 0.0
    %2364 = vmatpush1.msra.mxu0 0.0
    %2365 = vmatprep.subr.mxu0 0.0
    %2366 = vmatpush1.msra.mxu0 0.0
    %2367 = vmatprep.subr.mxu0 0.0
    %2368 = vmatpush1.msra.mxu0 0.0
    %2369 = vmatprep.subr.mxu0 0.0
    %2370 = vmatpush1.msra.mxu0 0.0
    %2371 = vmatprep.mubr.f32.mxu0 0.0
    %2372 = vmatmul.mubr.f32.gmra.mrb[0].mxu0 %v2296
    %v2373 = vpop.f32.mrb[0].mxu0
    %v2374 = vadd.f32 %v2277, %v2373
    %v2375 = vpop.f32.mrb[0].mxu0
    %v2376 = vadd.f32 %v2281, %v2375
    %2377 = vmatprep.mubr.f32.mxu0 0.0
    %2378 = vmatmul.mubr.f32.gmra.mrb[0].mxu0 %v2299
    %v2379 = vpop.f32.mrb[0].mxu0
    %v2380 = vadd.f32 %v2277, %v2379
    %v2381 = vpop.f32.mrb[0].mxu0
    %v2382 = vadd.f32 %v2281, %v2381
    %2383 = vmatprep.mubr.f32.mxu0 0.0
    %2384 = vmatmul.mubr.f32.gmra.mrb[0].mxu0 %v2302
    %v2385 = vpop.f32.mrb[0].mxu0
    %v2386 = vadd.f32 %v2277, %v2385
    %v2387 = vpop.f32.mrb[0].mxu0
    %v2388 = vadd.f32 %v2281, %v2387
    %2389 = vmatprep.mubr.f32.mxu0 0.0
    %2390 = vmatmul.mubr.f32.gmra.mrb[0].mxu0 %v2305
    %v2391 = vpop.f32.mrb[0].mxu0
    %v2392 = vadd.f32 %v2277, %v2391
    %v2393 = vpop.f32.mrb[0].mxu0
    %v2394 = vadd.f32 %v2281, %v2393
    %2395 = vdwg.mxu0
    %2396 = vmatprep.subr.mxu0 %v2220
    %2397 = vmatpush1.msra.mxu0 %v2219
    %2398 = vmatprep.subr.mxu0 %v2224
    %2399 = vmatpush1.msra.mxu0 %v2223
    %2400 = vmatprep.subr.mxu0 %v2228
    %2401 = vmatpush1.msra.mxu0 %v2227
    %2402 = vmatprep.subr.mxu0 %v2232
    %2403 = vmatpush1.msra.mxu0 %v2231
    %2404 = vmatprep.subr.mxu0 %v2236
    %2405 = vmatpush1.msra.mxu0 %v2235
    %2406 = vmatprep.subr.mxu0 %v2240
    %2407 = vmatpush1.msra.mxu0 %v2239
    %2408 = vmatprep.subr.mxu0 %v2244
    %2409 = vmatpush1.msra.mxu0 %v2243
    %2410 = vmatprep.subr.mxu0 %v2248
    %2411 = vmatpush1.msra.mxu0 %v2247
    %2412 = vmatprep.subr.mxu0 %v2252
    %2413 = vmatpush1.msra.mxu0 %v2251
    %2414 = vmatprep.subr.mxu0 %v2256
    %2415 = vmatpush1.msra.mxu0 %v2255
    %2416 = vmatprep.subr.mxu0 %v2260
    %2417 = vmatpush1.msra.mxu0 %v2259
    %2418 = vmatprep.subr.mxu0 %v2264
    %2419 = vmatpush1.msra.mxu0 %v2263
    %2420 = vmatprep.subr.mxu0 %v2268
    %2421 = vmatpush1.msra.mxu0 %v2267
    %2422 = vmatprep.subr.mxu0 %v2272
    %2423 = vmatpush1.msra.mxu0 %v2271
    %2424 = vmatprep.subr.mxu0 0.0
    %2425 = vmatpush1.msra.mxu0 0.0
    %2426 = vmatprep.subr.mxu0 0.0
    %2427 = vmatpush1.msra.mxu0 0.0
    %2428 = vmatprep.subr.mxu0 0.0
    %2429 = vmatpush1.msra.mxu0 0.0
    %2430 = vmatprep.subr.mxu0 0.0
    %2431 = vmatpush1.msra.mxu0 0.0
    %2432 = vmatprep.subr.mxu0 0.0
    %2433 = vmatpush1.msra.mxu0 0.0
    %2434 = vmatprep.subr.mxu0 0.0
    %2435 = vmatpush1.msra.mxu0 0.0
    %2436 = vmatprep.subr.mxu0 0.0
    %2437 = vmatpush1.msra.mxu0 0.0
    %2438 = vmatprep.subr.mxu0 0.0
    %2439 = vmatpush1.msra.mxu0 0.0
    %2440 = vmatprep.subr.mxu0 0.0
    %2441 = vmatpush1.msra.mxu0 0.0
    %2442 = vmatprep.subr.mxu0 0.0
    %2443 = vmatpush1.msra.mxu0 0.0
    %2444 = vmatprep.subr.mxu0 0.0
    %2445 = vmatpush1.msra.mxu0 0.0
    %2446 = vmatprep.subr.mxu0 0.0
    %2447 = vmatpush1.msra.mxu0 0.0
    %2448 = vmatprep.subr.mxu0 0.0
    %2449 = vmatpush1.msra.mxu0 0.0
    %2450 = vmatprep.subr.mxu0 0.0
    %2451 = vmatpush1.msra.mxu0 0.0
    %2452 = vmatprep.subr.mxu0 0.0
    %2453 = vmatpush1.msra.mxu0 0.0
    %2454 = vmatprep.subr.mxu0 0.0
    %2455 = vmatpush1.msra.mxu0 0.0
    %2456 = vmatprep.subr.mxu0 0.0
    %2457 = vmatpush1.msra.mxu0 0.0
    %2458 = vmatprep.subr.mxu0 0.0
    %2459 = vmatpush1.msra.mxu0 0.0
    %2460 = vmatprep.mubr.f32.mxu0 0.0
    %2461 = vmatmul.mubr.f32.gmra.mrb[0].mxu0 %v2296
    %v2462 = vpop.f32.mrb[0].mxu0
    %v2463 = vadd.f32 %v2285, %v2462
    %v2464 = vpop.f32.mrb[0].mxu0
    %v2465 = vadd.f32 %v2289, %v2464
    %2466 = vmatprep.mubr.f32.mxu0 0.0
    %2467 = vmatmul.mubr.f32.gmra.mrb[0].mxu0 %v2299
    %v2468 = vpop.f32.mrb[0].mxu0
    %v2469 = vadd.f32 %v2285, %v2468
    %v2470 = vpop.f32.mrb[0].mxu0
    %v2471 = vadd.f32 %v2289, %v2470
    %2472 = vmatprep.mubr.f32.mxu0 0.0
    %2473 = vmatmul.mubr.f32.gmra.mrb[0].mxu0 %v2302
    %v2474 = vpop.f32.mrb[0].mxu0
    %v2475 = vadd.f32 %v2285, %v2474
    %v2476 = vpop.f32.mrb[0].mxu0
    %v2477 = vadd.f32 %v2289, %v2476
    %2478 = vmatprep.mubr.f32.mxu0 0.0
    %2479 = vmatmul.mubr.f32.gmra.mrb[0].mxu0 %v2305
    %v2480 = vpop.f32.mrb[0].mxu0
    %v2481 = vadd.f32 %v2285, %v2480
    %v2482 = vpop.f32.mrb[0].mxu0
    %v2483 = vadd.f32 %v2289, %v2482
    %2484 = vdwg.mxu0
    %v2485 = vmax.f32 %v2374, 0.0
    %v2486 = vmax.f32 %v2376, 0.0
    %v2487 = vmax.f32 %v2463, 0.0
    %v2488 = vmax.f32 %v2465, 0.0
    %v2489 = vmax.f32 %v2380, 0.0
    %v2490 = vmax.f32 %v2382, 0.0
    %v2491 = vmax.f32 %v2469, 0.0
    %v2492 = vmax.f32 %v2471, 0.0
    %v2493 = vmax.f32 %v2386, 0.0
    %v2494 = vmax.f32 %v2388, 0.0
    %v2495 = vmax.f32 %v2475, 0.0
    %v2496 = vmax.f32 %v2477, 0.0
    %v2497 = vmax.f32 %v2392, 0.0
    %v2498 = vmax.f32 %v2394, 0.0
    %v2499 = vmax.f32 %v2481, 0.0
    %v2500 = vmax.f32 %v2483, 0.0
    %v2501 = vld [vmem:[#allocation14] sm:$0xff]
    %v2502 = vld [vmem:[#allocation14 + $0x8] sm:$0xff]
    %v2503 = vld [vmem:[#allocation14 + $0x10] sm:$0xff]
    %v2504 = vld [vmem:[#allocation14 + $0x18] sm:$0xff]
    %v2505 = vld [vmem:[#allocation14 + $0x20] sm:$0xff]
    %v2506 = vld [vmem:[#allocation14 + $0x28] sm:$0xff]
    %v2507 = vld [vmem:[#allocation14 + $0x30] sm:$0xff]
    %v2508 = vld [vmem:[#allocation14 + $0x38] sm:$0xff]
    %v2509 = vld [vmem:[#allocation14 + $0x40] sm:$0xff]
    %v2510 = vld [vmem:[#allocation14 + $0x48] sm:$0xff]
    %v2511 = vld [vmem:[#allocation14 + $0x50] sm:$0xff]
    %v2512 = vld [vmem:[#allocation14 + $0x58] sm:$0xff]
    %v2513 = vld [vmem:[#allocation14 + $0x60] sm:$0xff]
    %v2514 = vld [vmem:[#allocation14 + $0x68] sm:$0xff]
    %v2515 = vld [vmem:[#allocation14 + $0x70] sm:$0xff]
    %v2516 = vld [vmem:[#allocation14 + $0x78] sm:$0xff]
    %v2517 = vld [vmem:[#allocation14 + $0x80] sm:$0xff]
    %v2518 = vld [vmem:[#allocation14 + $0x88] sm:$0xff]
    %v2519 = vld [vmem:[#allocation14 + $0x90] sm:$0xff]
    %v2520 = vld [vmem:[#allocation14 + $0x98] sm:$0xff]
    %v2521 = vld [vmem:[#allocation14 + $0xa0] sm:$0xff]
    %v2522 = vld [vmem:[#allocation14 + $0xa8] sm:$0xff]
    %v2523 = vld [vmem:[#allocation14 + $0xb0] sm:$0xff]
    %v2524 = vld [vmem:[#allocation14 + $0xb8] sm:$0xff]
    %v2525 = vld [vmem:[#allocation14 + $0xc0] sm:$0xff]
    %v2526 = vld [vmem:[#allocation14 + $0xc8] sm:$0xff]
    %v2527 = vld [vmem:[#allocation14 + $0xd0] sm:$0xff]
    %v2528 = vld [vmem:[#allocation14 + $0xd8] sm:$0xff]
    %v2529 = vld [vmem:[#allocation14 + $0xe0] sm:$0xff]
    %v2530 = vld [vmem:[#allocation14 + $0xe8] sm:$0xff]
    %v2531 = vld [vmem:[#allocation14 + $0xf0] sm:$0xff]
    %v2532 = vld [vmem:[#allocation14 + $0xf8] sm:$0xff]
    %v2533 = vld [vmem:[#allocation14 + $0x100] sm:$0xff]
    %v2534 = vld [vmem:[#allocation14 + $0x108] sm:$0xff]
    %v2535 = vld [vmem:[#allocation14 + $0x110] sm:$0xff]
    %v2536 = vld [vmem:[#allocation14 + $0x118] sm:$0xff]
    %v2537 = vld [vmem:[#allocation14 + $0x120] sm:$0xff]
    %v2538 = vld [vmem:[#allocation14 + $0x128] sm:$0xff]
    %v2539 = vld [vmem:[#allocation14 + $0x130] sm:$0xff]
    %v2540 = vld [vmem:[#allocation14 + $0x138] sm:$0xff]
    %v2541 = vld [vmem:[#allocation14 + $0x140] sm:$0xff]
    %v2542 = vld [vmem:[#allocation14 + $0x148] sm:$0xff]
    %v2543 = vld [vmem:[#allocation14 + $0x150] sm:$0xff]
    %v2544 = vld [vmem:[#allocation14 + $0x158] sm:$0xff]
    %v2545 = vld [vmem:[#allocation14 + $0x160] sm:$0xff]
    %v2546 = vld [vmem:[#allocation14 + $0x168] sm:$0xff]
    %v2547 = vld [vmem:[#allocation14 + $0x170] sm:$0xff]
    %v2548 = vld [vmem:[#allocation14 + $0x178] sm:$0xff]
    %v2549 = vld [vmem:[#allocation14 + $0x180] sm:$0xff]
    %v2550 = vld [vmem:[#allocation14 + $0x188] sm:$0xff]
    %v2551 = vld [vmem:[#allocation14 + $0x190] sm:$0xff]
    %v2552 = vld [vmem:[#allocation14 + $0x198] sm:$0xff]
    %v2553 = vld [vmem:[#allocation14 + $0x1a0] sm:$0xff]
    %v2554 = vld [vmem:[#allocation14 + $0x1a8] sm:$0xff]
    %v2555 = vld [vmem:[#allocation14 + $0x1b0] sm:$0xff]
    %v2556 = vld [vmem:[#allocation14 + $0x1b8] sm:$0xff]
    %v2557 = vld [vmem:[#allocation14 + $0x1c0] sm:$0xff]
    %v2558 = vld [vmem:[#allocation14 + $0x1c8] sm:$0xff]
    %v2559 = vld [vmem:[#allocation14 + $0x1d0] sm:$0xff]
    %v2560 = vld [vmem:[#allocation14 + $0x1d8] sm:$0xff]
    %v2561 = vld [vmem:[#allocation14 + $0x1e0] sm:$0xff]
    %v2562 = vld [vmem:[#allocation14 + $0x1e8] sm:$0xff]
    %v2563 = vld [vmem:[#allocation14 + $0x1f0] sm:$0xff]
    %v2564 = vld [vmem:[#allocation14 + $0x1f8] sm:$0xff]
    %v2565 = vld [vmem:[#allocation14 + $0x200] sm:$0xff]
    %v2566 = vld [vmem:[#allocation14 + $0x208] sm:$0xff]
    %v2567 = vld [vmem:[#allocation14 + $0x210] sm:$0xff]
    %v2568 = vld [vmem:[#allocation14 + $0x218] sm:$0xff]
    %v2569 = vld [vmem:[#allocation14 + $0x220] sm:$0xff]
    %v2570 = vld [vmem:[#allocation14 + $0x228] sm:$0xff]
    %v2571 = vld [vmem:[#allocation14 + $0x230] sm:$0xff]
    %v2572 = vld [vmem:[#allocation14 + $0x238] sm:$0xff]
    %v2573 = vld [vmem:[#allocation14 + $0x240] sm:$0xff]
    %v2574 = vld [vmem:[#allocation14 + $0x248] sm:$0xff]
    %v2575 = vld [vmem:[#allocation14 + $0x250] sm:$0xff]
    %v2576 = vld [vmem:[#allocation14 + $0x258] sm:$0xff]
    %v2577 = vld [vmem:[#allocation14 + $0x260] sm:$0xff]
    %v2578 = vld [vmem:[#allocation14 + $0x268] sm:$0xff]
    %v2579 = vld [vmem:[#allocation14 + $0x270] sm:$0xff]
    %v2580 = vld [vmem:[#allocation14 + $0x278] sm:$0xff]
    %v2581 = vld [vmem:[#allocation14 + $0x280] sm:$0xff]
    %v2582 = vld [vmem:[#allocation14 + $0x288] sm:$0xff]
    %v2583 = vld [vmem:[#allocation14 + $0x290] sm:$0xff]
    %v2584 = vld [vmem:[#allocation14 + $0x298] sm:$0xff]
    %v2585 = vld [vmem:[#allocation14 + $0x2a0] sm:$0xff]
    %v2586 = vld [vmem:[#allocation14 + $0x2a8] sm:$0xff]
    %v2587 = vld [vmem:[#allocation14 + $0x2b0] sm:$0xff]
    %v2588 = vld [vmem:[#allocation14 + $0x2b8] sm:$0xff]
    %v2589 = vld [vmem:[#allocation14 + $0x2c0] sm:$0xff]
    %v2590 = vld [vmem:[#allocation14 + $0x2c8] sm:$0xff]
    %v2591 = vld [vmem:[#allocation14 + $0x2d0] sm:$0xff]
    %v2592 = vld [vmem:[#allocation14 + $0x2d8] sm:$0xff]
    %v2593 = vld [vmem:[#allocation14 + $0x2e0] sm:$0xff]
    %v2594 = vld [vmem:[#allocation14 + $0x2e8] sm:$0xff]
    %v2595 = vld [vmem:[#allocation14 + $0x2f0] sm:$0xff]
    %v2596 = vld [vmem:[#allocation14 + $0x2f8] sm:$0xff]
    %v2597 = vld [vmem:[#allocation14 + $0x300] sm:$0xff]
    %v2598 = vld [vmem:[#allocation14 + $0x308] sm:$0xff]
    %v2599 = vld [vmem:[#allocation14 + $0x310] sm:$0xff]
    %v2600 = vld [vmem:[#allocation14 + $0x318] sm:$0xff]
    %v2601 = vld [vmem:[#allocation14 + $0x320] sm:$0xff]
    %v2602 = vld [vmem:[#allocation14 + $0x328] sm:$0xff]
    %v2603 = vld [vmem:[#allocation14 + $0x330] sm:$0xff]
    %v2604 = vld [vmem:[#allocation14 + $0x338] sm:$0xff]
    %v2605 = vld [vmem:[#allocation14 + $0x340] sm:$0xff]
    %v2606 = vld [vmem:[#allocation14 + $0x348] sm:$0xff]
    %v2607 = vld [vmem:[#allocation14 + $0x350] sm:$0xff]
    %v2608 = vld [vmem:[#allocation14 + $0x358] sm:$0xff]
    %v2609 = vld [vmem:[#allocation14 + $0x360] sm:$0xff]
    %v2610 = vld [vmem:[#allocation14 + $0x368] sm:$0xff]
    %v2611 = vld [vmem:[#allocation14 + $0x370] sm:$0xff]
    %v2612 = vld [vmem:[#allocation14 + $0x378] sm:$0xff]
    %v2613 = vld [vmem:[#allocation14 + $0x380] sm:$0xff]
    %v2614 = vld [vmem:[#allocation14 + $0x388] sm:$0xff]
    %v2615 = vld [vmem:[#allocation14 + $0x390] sm:$0xff]
    %v2616 = vld [vmem:[#allocation14 + $0x398] sm:$0xff]
    %v2617 = vld [vmem:[#allocation14 + $0x3a0] sm:$0xff]
    %v2618 = vld [vmem:[#allocation14 + $0x3a8] sm:$0xff]
    %v2619 = vld [vmem:[#allocation14 + $0x3b0] sm:$0xff]
    %v2620 = vld [vmem:[#allocation14 + $0x3b8] sm:$0xff]
    %v2621 = vld [vmem:[#allocation14 + $0x3c0] sm:$0xff]
    %v2622 = vld [vmem:[#allocation14 + $0x3c8] sm:$0xff]
    %v2623 = vld [vmem:[#allocation14 + $0x3d0] sm:$0xff]
    %v2624 = vld [vmem:[#allocation14 + $0x3d8] sm:$0xff]
    %v2625 = vld [vmem:[#allocation14 + $0x3e0] sm:$0xff]
    %v2626 = vld [vmem:[#allocation14 + $0x3e8] sm:$0xff]
    %2627 = vmatprep.subr.mxu0 %v2614
    %2628 = vmatpush1.msra.mxu0 %v2613
    %2629 = vmatprep.subr.mxu0 %v2616
    %2630 = vmatpush1.msra.mxu0 %v2615
    %2631 = vmatprep.subr.mxu0 %v2618
    %2632 = vmatpush1.msra.mxu0 %v2617
    %2633 = vmatprep.subr.mxu0 %v2620
    %2634 = vmatpush1.msra.mxu0 %v2619
    %2635 = vmatprep.subr.mxu0 %v2622
    %2636 = vmatpush1.msra.mxu0 %v2621
    %2637 = vmatprep.subr.mxu0 %v2624
    %2638 = vmatpush1.msra.mxu0 %v2623
    %2639 = vmatprep.subr.mxu0 %v2626
    %2640 = vmatpush1.msra.mxu0 %v2625
    %2641 = vmatprep.subr.mxu0 0.0
    %2642 = vmatpush1.msra.mxu0 0.0
    %2643 = vmatprep.subr.mxu0 0.0
    %2644 = vmatpush1.msra.mxu0 0.0
    %2645 = vmatprep.subr.mxu0 0.0
    %2646 = vmatpush1.msra.mxu0 0.0
    %2647 = vmatprep.subr.mxu0 0.0
    %2648 = vmatpush1.msra.mxu0 0.0
    %2649 = vmatprep.subr.mxu0 0.0
    %2650 = vmatpush1.msra.mxu0 0.0
    %2651 = vmatprep.subr.mxu0 0.0
    %2652 = vmatpush1.msra.mxu0 0.0
    %2653 = vmatprep.subr.mxu0 0.0
    %2654 = vmatpush1.msra.mxu0 0.0
    %2655 = vmatprep.subr.mxu0 0.0
    %2656 = vmatpush1.msra.mxu0 0.0
    %2657 = vmatprep.subr.mxu0 0.0
    %2658 = vmatpush1.msra.mxu0 0.0
    %2659 = vmatprep.subr.mxu0 0.0
    %2660 = vmatpush1.msra.mxu0 0.0
    %2661 = vmatprep.subr.mxu0 0.0
    %2662 = vmatpush1.msra.mxu0 0.0
    %2663 = vmatprep.subr.mxu0 0.0
    %2664 = vmatpush1.msra.mxu0 0.0
    %2665 = vmatprep.subr.mxu0 0.0
    %2666 = vmatpush1.msra.mxu0 0.0
    %2667 = vmatprep.subr.mxu0 0.0
    %2668 = vmatpush1.msra.mxu0 0.0
    %2669 = vmatprep.subr.mxu0 0.0
    %2670 = vmatpush1.msra.mxu0 0.0
    %2671 = vmatprep.subr.mxu0 0.0
    %2672 = vmatpush1.msra.mxu0 0.0
    %2673 = vmatprep.subr.mxu0 0.0
    %2674 = vmatpush1.msra.mxu0 0.0
    %2675 = vmatprep.subr.mxu0 0.0
    %2676 = vmatpush1.msra.mxu0 0.0
    %2677 = vmatprep.subr.mxu0 0.0
    %2678 = vmatpush1.msra.mxu0 0.0
    %2679 = vmatprep.subr.mxu0 0.0
    %2680 = vmatpush1.msra.mxu0 0.0
    %2681 = vmatprep.subr.mxu0 0.0
    %2682 = vmatpush1.msra.mxu0 0.0
    %2683 = vmatprep.subr.mxu0 0.0
    %2684 = vmatpush1.msra.mxu0 0.0
    %2685 = vmatprep.subr.mxu0 0.0
    %2686 = vmatpush1.msra.mxu0 0.0
    %2687 = vmatprep.subr.mxu0 0.0
    %2688 = vmatpush1.msra.mxu0 0.0
    %2689 = vmatprep.subr.mxu0 0.0
    %2690 = vmatpush1.msra.mxu0 0.0
    %2691 = vmatprep.mubr.f32.mxu0 0.0
    %2692 = vmatmul.mubr.f32.gmra.mrb[0].mxu0 %v158
    %v2693 = vpop.f32.mrb[0].mxu0
    %v2694 = vadd.f32 0.0, %v2693
    %v2695 = vpop.f32.mrb[0].mxu0
    %v2696 = vadd.f32 0.0, %v2695
    %2697 = vmatprep.mubr.f32.mxu0 0.0
    %2698 = vmatmul.mubr.f32.gmra.mrb[0].mxu0 %v161
    %v2699 = vpop.f32.mrb[0].mxu0
    %v2700 = vadd.f32 0.0, %v2699
    %v2701 = vpop.f32.mrb[0].mxu0
    %v2702 = vadd.f32 0.0, %v2701
    %2703 = vmatprep.mubr.f32.mxu0 0.0
    %2704 = vmatmul.mubr.f32.gmra.mrb[0].mxu0 %v164
    %v2705 = vpop.f32.mrb[0].mxu0
    %v2706 = vadd.f32 0.0, %v2705
    %v2707 = vpop.f32.mrb[0].mxu0
    %v2708 = vadd.f32 0.0, %v2707
    %2709 = vmatprep.mubr.f32.mxu0 0.0
    %2710 = vmatmul.mubr.f32.gmra.mrb[0].mxu0 %v167
    %v2711 = vpop.f32.mrb[0].mxu0
    %v2712 = vadd.f32 0.0, %v2711
    %v2713 = vpop.f32.mrb[0].mxu0
    %v2714 = vadd.f32 0.0, %v2713
    %2715 = vdwg.mxu0
    %vm2716 = vcmask 523264
    %v2718 = vsel %vm2716, %v2488, 0
    %v2721 = vsel %vm2716, %v2492, 0
    %v2724 = vsel %vm2716, %v2496, 0
    %v2727 = vsel %vm2716, %v2500, 0
    %2729 = vmatprep.subr.mxu0 %v2502
    %2730 = vmatpush1.msra.mxu0 %v2501
    %2731 = vmatprep.subr.mxu0 %v2504
    %2732 = vmatpush1.msra.mxu0 %v2503
    %2733 = vmatprep.subr.mxu0 %v2506
    %2734 = vmatpush1.msra.mxu0 %v2505
    %2735 = vmatprep.subr.mxu0 %v2508
    %2736 = vmatpush1.msra.mxu0 %v2507
    %2737 = vmatprep.subr.mxu0 %v2510
    %2738 = vmatpush1.msra.mxu0 %v2509
    %2739 = vmatprep.subr.mxu0 %v2512
    %2740 = vmatpush1.msra.mxu0 %v2511
    %2741 = vmatprep.subr.mxu0 %v2514
    %2742 = vmatpush1.msra.mxu0 %v2513
    %2743 = vmatprep.subr.mxu0 %v2516
    %2744 = vmatpush1.msra.mxu0 %v2515
    %2745 = vmatprep.subr.mxu0 %v2518
    %2746 = vmatpush1.msra.mxu0 %v2517
    %2747 = vmatprep.subr.mxu0 %v2520
    %2748 = vmatpush1.msra.mxu0 %v2519
    %2749 = vmatprep.subr.mxu0 %v2522
    %2750 = vmatpush1.msra.mxu0 %v2521
    %2751 = vmatprep.subr.mxu0 %v2524
    %2752 = vmatpush1.msra.mxu0 %v2523
    %2753 = vmatprep.subr.mxu0 %v2526
    %2754 = vmatpush1.msra.mxu0 %v2525
    %2755 = vmatprep.subr.mxu0 %v2528
    %2756 = vmatpush1.msra.mxu0 %v2527
    %2757 = vmatprep.subr.mxu0 %v2530
    %2758 = vmatpush1.msra.mxu0 %v2529
    %2759 = vmatprep.subr.mxu0 %v2532
    %2760 = vmatpush1.msra.mxu0 %v2531
    %2761 = vmatprep.subr.mxu0 %v2534
    %2762 = vmatpush1.msra.mxu0 %v2533
    %2763 = vmatprep.subr.mxu0 %v2536
    %2764 = vmatpush1.msra.mxu0 %v2535
    %2765 = vmatprep.subr.mxu0 %v2538
    %2766 = vmatpush1.msra.mxu0 %v2537
    %2767 = vmatprep.subr.mxu0 %v2540
    %2768 = vmatpush1.msra.mxu0 %v2539
    %2769 = vmatprep.subr.mxu0 %v2542
    %2770 = vmatpush1.msra.mxu0 %v2541
    %2771 = vmatprep.subr.mxu0 %v2544
    %2772 = vmatpush1.msra.mxu0 %v2543
    %2773 = vmatprep.subr.mxu0 %v2546
    %2774 = vmatpush1.msra.mxu0 %v2545
    %2775 = vmatprep.subr.mxu0 %v2548
    %2776 = vmatpush1.msra.mxu0 %v2547
    %2777 = vmatprep.subr.mxu0 %v2550
    %2778 = vmatpush1.msra.mxu0 %v2549
    %2779 = vmatprep.subr.mxu0 %v2552
    %2780 = vmatpush1.msra.mxu0 %v2551
    %2781 = vmatprep.subr.mxu0 %v2554
    %2782 = vmatpush1.msra.mxu0 %v2553
    %2783 = vmatprep.subr.mxu0 %v2556
    %2784 = vmatpush1.msra.mxu0 %v2555
    %2785 = vmatprep.subr.mxu0 %v2558
    %2786 = vmatpush1.msra.mxu0 %v2557
    %2787 = vmatprep.subr.mxu0 %v2560
    %2788 = vmatpush1.msra.mxu0 %v2559
    %2789 = vmatprep.subr.mxu0 %v2562
    %2790 = vmatpush1.msra.mxu0 %v2561
    %2791 = vmatprep.subr.mxu0 %v2564
    %2792 = vmatpush1.msra.mxu0 %v2563
    %2793 = vmatprep.mubr.f32.mxu0 %v2486
    %2794 = vmatmul.mubr.f32.gmra.mrb[0].mxu0 %v2485
    %v2795 = vpop.f32.mrb[0].mxu0
    %v2796 = vadd.f32 %v2694, %v2795
    %v2797 = vpop.f32.mrb[0].mxu0
    %v2798 = vadd.f32 %v2696, %v2797
    %2799 = vmatprep.mubr.f32.mxu0 %v2490
    %2800 = vmatmul.mubr.f32.gmra.mrb[0].mxu0 %v2489
    %v2801 = vpop.f32.mrb[0].mxu0
    %v2802 = vadd.f32 %v2700, %v2801
    %v2803 = vpop.f32.mrb[0].mxu0
    %v2804 = vadd.f32 %v2702, %v2803
    %2805 = vmatprep.mubr.f32.mxu0 %v2494
    %2806 = vmatmul.mubr.f32.gmra.mrb[0].mxu0 %v2493
    %v2807 = vpop.f32.mrb[0].mxu0
    %v2808 = vadd.f32 %v2706, %v2807
    %v2809 = vpop.f32.mrb[0].mxu0
    %v2810 = vadd.f32 %v2708, %v2809
    %2811 = vmatprep.mubr.f32.mxu0 %v2498
    %2812 = vmatmul.mubr.f32.gmra.mrb[0].mxu0 %v2497
    %v2813 = vpop.f32.mrb[0].mxu0
    %v2814 = vadd.f32 %v2712, %v2813
    %v2815 = vpop.f32.mrb[0].mxu0
    %v2816 = vadd.f32 %v2714, %v2815
    %2817 = vdwg.mxu0
    %2818 = vmatprep.subr.mxu0 %v2566
    %2819 = vmatpush1.msra.mxu0 %v2565
    %2820 = vmatprep.subr.mxu0 %v2568
    %2821 = vmatpush1.msra.mxu0 %v2567
    %2822 = vmatprep.subr.mxu0 %v2570
    %2823 = vmatpush1.msra.mxu0 %v2569
    %2824 = vmatprep.subr.mxu0 %v2572
    %2825 = vmatpush1.msra.mxu0 %v2571
    %2826 = vmatprep.subr.mxu0 %v2574
    %2827 = vmatpush1.msra.mxu0 %v2573
    %2828 = vmatprep.subr.mxu0 %v2576
    %2829 = vmatpush1.msra.mxu0 %v2575
    %2830 = vmatprep.subr.mxu0 %v2578
    %2831 = vmatpush1.msra.mxu0 %v2577
    %2832 = vmatprep.subr.mxu0 %v2580
    %2833 = vmatpush1.msra.mxu0 %v2579
    %2834 = vmatprep.subr.mxu0 %v2582
    %2835 = vmatpush1.msra.mxu0 %v2581
    %2836 = vmatprep.subr.mxu0 %v2584
    %2837 = vmatpush1.msra.mxu0 %v2583
    %2838 = vmatprep.subr.mxu0 %v2586
    %2839 = vmatpush1.msra.mxu0 %v2585
    %2840 = vmatprep.subr.mxu0 %v2588
    %2841 = vmatpush1.msra.mxu0 %v2587
    %2842 = vmatprep.subr.mxu0 %v2590
    %2843 = vmatpush1.msra.mxu0 %v2589
    %2844 = vmatprep.subr.mxu0 %v2592
    %2845 = vmatpush1.msra.mxu0 %v2591
    %2846 = vmatprep.subr.mxu0 %v2594
    %2847 = vmatpush1.msra.mxu0 %v2593
    %2848 = vmatprep.subr.mxu0 %v2596
    %2849 = vmatpush1.msra.mxu0 %v2595
    %2850 = vmatprep.subr.mxu0 %v2598
    %2851 = vmatpush1.msra.mxu0 %v2597
    %2852 = vmatprep.subr.mxu0 %v2600
    %2853 = vmatpush1.msra.mxu0 %v2599
    %2854 = vmatprep.subr.mxu0 %v2602
    %2855 = vmatpush1.msra.mxu0 %v2601
    %2856 = vmatprep.subr.mxu0 %v2604
    %2857 = vmatpush1.msra.mxu0 %v2603
    %2858 = vmatprep.subr.mxu0 %v2606
    %2859 = vmatpush1.msra.mxu0 %v2605
    %2860 = vmatprep.subr.mxu0 %v2608
    %2861 = vmatpush1.msra.mxu0 %v2607
    %2862 = vmatprep.subr.mxu0 %v2610
    %2863 = vmatpush1.msra.mxu0 %v2609
    %2864 = vmatprep.subr.mxu0 %v2612
    %2865 = vmatpush1.msra.mxu0 %v2611
    %2866 = vmatprep.subr.mxu0 0.0
    %2867 = vmatpush1.msra.mxu0 0.0
    %2868 = vmatprep.subr.mxu0 0.0
    %2869 = vmatpush1.msra.mxu0 0.0
    %2870 = vmatprep.subr.mxu0 0.0
    %2871 = vmatpush1.msra.mxu0 0.0
    %2872 = vmatprep.subr.mxu0 0.0
    %2873 = vmatpush1.msra.mxu0 0.0
    %2874 = vmatprep.subr.mxu0 0.0
    %2875 = vmatpush1.msra.mxu0 0.0
    %2876 = vmatprep.subr.mxu0 0.0
    %2877 = vmatpush1.msra.mxu0 0.0
    %2878 = vmatprep.subr.mxu0 0.0
    %2879 = vmatpush1.msra.mxu0 0.0
    %2880 = vmatprep.subr.mxu0 0.0
    %2881 = vmatpush1.msra.mxu0 0.0
    %2882 = vmatprep.mubr.f32.mxu0 %v2718
    %2883 = vmatmul.mubr.f32.gmra.mrb[0].mxu0 %v2487
    %v2884 = vpop.f32.mrb[0].mxu0
    %v2885 = vadd.f32 %v2796, %v2884
    %v2886 = vpop.f32.mrb[0].mxu0
    %v2887 = vadd.f32 %v2798, %v2886
    %2888 = vmatprep.mubr.f32.mxu0 %v2721
    %2889 = vmatmul.mubr.f32.gmra.mrb[0].mxu0 %v2491
    %v2890 = vpop.f32.mrb[0].mxu0
    %v2891 = vadd.f32 %v2802, %v2890
    %v2892 = vpop.f32.mrb[0].mxu0
    %v2893 = vadd.f32 %v2804, %v2892
    %2894 = vmatprep.mubr.f32.mxu0 %v2724
    %2895 = vmatmul.mubr.f32.gmra.mrb[0].mxu0 %v2495
    %v2896 = vpop.f32.mrb[0].mxu0
    %v2897 = vadd.f32 %v2808, %v2896
    %v2898 = vpop.f32.mrb[0].mxu0
    %v2899 = vadd.f32 %v2810, %v2898
    %2900 = vmatprep.mubr.f32.mxu0 %v2727
    %2901 = vmatmul.mubr.f32.gmra.mrb[0].mxu0 %v2499
    %v2902 = vpop.f32.mrb[0].mxu0
    %v2903 = vadd.f32 %v2814, %v2902
    %v2904 = vpop.f32.mrb[0].mxu0
    %v2905 = vadd.f32 %v2816, %v2904
    %2906 = vdwg.mxu0
    %v2908 = vlaneseq
    %v2909 = vshrl.u32 %v2908, 7
    %v2910 = vsub.s32 0, %v2909
    %v2911 = vrot.slane %v2210, %v2910
    %v2912 = vlaneseq
    %v2913 = vshrl.u32 %v2912, 7
    %v2914 = vsub.s32 1, %v2913
    %v2915 = vrot.slane %v2210, %v2914
    %v2918 = vadd.f32 %v2885, %v2911
    %v2919 = vadd.f32 %v2887, %v2915
    %v2920 = vadd.f32 %v2891, %v2911
    %v2921 = vadd.f32 %v2893, %v2915
    %v2922 = vadd.f32 %v2897, %v2911
    %v2923 = vadd.f32 %v2899, %v2915
    %v2924 = vadd.f32 %v2903, %v2911
    %v2925 = vadd.f32 %v2905, %v2915
    %v2926 = vmax.f32 %v2918, 0.0
    %v2927 = vmax.f32 %v2919, 0.0
    %v2928 = vmax.f32 %v2920, 0.0
    %v2929 = vmax.f32 %v2921, 0.0
    %v2930 = vmax.f32 %v2922, 0.0
    %v2931 = vmax.f32 %v2923, 0.0
    %v2932 = vmax.f32 %v2924, 0.0
    %v2933 = vmax.f32 %v2925, 0.0
    %v2934 = vld [vmem:[#allocation15] sm:$0xff]
    %v2935 = vld [vmem:[#allocation15 + $0x8] sm:$0xff]
    %v2936 = vld [vmem:[#allocation15 + $0x10] sm:$0xff]
    %v2937 = vld [vmem:[#allocation15 + $0x18] sm:$0xff]
    %v2938 = vld [vmem:[#allocation15 + $0x20] sm:$0xff]
    %v2939 = vld [vmem:[#allocation15 + $0x28] sm:$0xff]
    %v2940 = vld [vmem:[#allocation15 + $0x30] sm:$0xff]
    %v2941 = vld [vmem:[#allocation15 + $0x38] sm:$0xff]
    %v2942 = vld [vmem:[#allocation15 + $0x40] sm:$0xff]
    %v2943 = vld [vmem:[#allocation15 + $0x48] sm:$0xff]
    %v2944 = vld [vmem:[#allocation15 + $0x50] sm:$0xff]
    %v2945 = vld [vmem:[#allocation15 + $0x58] sm:$0xff]
    %v2946 = vld [vmem:[#allocation15 + $0x60] sm:$0xff]
    %v2947 = vld [vmem:[#allocation15 + $0x68] sm:$0xff]
    %v2948 = vld [vmem:[#allocation15 + $0x70] sm:$0xff]
    %v2949 = vld [vmem:[#allocation15 + $0x78] sm:$0xff]
    %v2950 = vld [vmem:[#allocation15 + $0x80] sm:$0xff]
    %v2951 = vld [vmem:[#allocation15 + $0x88] sm:$0xff]
    %v2952 = vld [vmem:[#allocation15 + $0x90] sm:$0xff]
    %v2953 = vld [vmem:[#allocation15 + $0x98] sm:$0xff]
    %v2954 = vld [vmem:[#allocation15 + $0xa0] sm:$0xff]
    %v2955 = vld [vmem:[#allocation15 + $0xa8] sm:$0xff]
    %v2956 = vld [vmem:[#allocation15 + $0xb0] sm:$0xff]
    %v2957 = vld [vmem:[#allocation15 + $0xb8] sm:$0xff]
    %v2958 = vld [vmem:[#allocation15 + $0xc0] sm:$0xff]
    %v2959 = vld [vmem:[#allocation15 + $0xc8] sm:$0xff]
    %v2960 = vld [vmem:[#allocation15 + $0xd0] sm:$0xff]
    %v2961 = vld [vmem:[#allocation15 + $0xd8] sm:$0xff]
    %v2962 = vld [vmem:[#allocation15 + $0xe0] sm:$0xff]
    %v2963 = vld [vmem:[#allocation15 + $0xe8] sm:$0xff]
    %v2964 = vld [vmem:[#allocation15 + $0xf0] sm:$0xff]
    %v2965 = vld [vmem:[#allocation15 + $0xf8] sm:$0xff]
    %v2966 = vld [vmem:[#allocation15 + $0x100] sm:$0xff]
    %v2967 = vld [vmem:[#allocation15 + $0x108] sm:$0xff]
    %v2968 = vld [vmem:[#allocation15 + $0x110] sm:$0xff]
    %v2969 = vld [vmem:[#allocation15 + $0x118] sm:$0xff]
    %v2970 = vld [vmem:[#allocation15 + $0x120] sm:$0xff]
    %v2971 = vld [vmem:[#allocation15 + $0x128] sm:$0xff]
    %v2972 = vld [vmem:[#allocation15 + $0x130] sm:$0xff]
    %v2973 = vld [vmem:[#allocation15 + $0x138] sm:$0xff]
    %v2974 = vld [vmem:[#allocation15 + $0x140] sm:$0xff]
    %v2975 = vld [vmem:[#allocation15 + $0x148] sm:$0xff]
    %v2976 = vld [vmem:[#allocation15 + $0x150] sm:$0xff]
    %v2977 = vld [vmem:[#allocation15 + $0x158] sm:$0xff]
    %v2978 = vld [vmem:[#allocation15 + $0x160] sm:$0xff]
    %v2979 = vld [vmem:[#allocation15 + $0x168] sm:$0xff]
    %v2980 = vld [vmem:[#allocation15 + $0x170] sm:$0xff]
    %v2981 = vld [vmem:[#allocation15 + $0x178] sm:$0xff]
    %v2982 = vld [vmem:[#allocation15 + $0x180] sm:$0xff]
    %v2983 = vld [vmem:[#allocation15 + $0x188] sm:$0xff]
    %v2984 = vld [vmem:[#allocation15 + $0x190] sm:$0xff]
    %v2985 = vld [vmem:[#allocation15 + $0x198] sm:$0xff]
    %v2986 = vld [vmem:[#allocation15 + $0x1a0] sm:$0xff]
    %v2987 = vld [vmem:[#allocation15 + $0x1a8] sm:$0xff]
    %v2988 = vld [vmem:[#allocation15 + $0x1b0] sm:$0xff]
    %v2989 = vld [vmem:[#allocation15 + $0x1b8] sm:$0xff]
    %v2990 = vld [vmem:[#allocation15 + $0x1c0] sm:$0xff]
    %v2991 = vld [vmem:[#allocation15 + $0x1c8] sm:$0xff]
    %v2992 = vld [vmem:[#allocation15 + $0x1d0] sm:$0xff]
    %v2993 = vld [vmem:[#allocation15 + $0x1d8] sm:$0xff]
    %v2994 = vld [vmem:[#allocation15 + $0x1e0] sm:$0xff]
    %v2995 = vld [vmem:[#allocation15 + $0x1e8] sm:$0xff]
    %v2996 = vld [vmem:[#allocation15 + $0x1f0] sm:$0xff]
    %v2997 = vld [vmem:[#allocation15 + $0x1f8] sm:$0xff]
    %2998 = vmatprep.subr.mxu0 %v2935
    %2999 = vmatpush1.msra.mxu0 %v2934
    %3000 = vmatprep.subr.mxu0 %v2937
    %3001 = vmatpush1.msra.mxu0 %v2936
    %3002 = vmatprep.subr.mxu0 %v2939
    %3003 = vmatpush1.msra.mxu0 %v2938
    %3004 = vmatprep.subr.mxu0 %v2941
    %3005 = vmatpush1.msra.mxu0 %v2940
    %3006 = vmatprep.subr.mxu0 %v2943
    %3007 = vmatpush1.msra.mxu0 %v2942
    %3008 = vmatprep.subr.mxu0 %v2945
    %3009 = vmatpush1.msra.mxu0 %v2944
    %3010 = vmatprep.subr.mxu0 %v2947
    %3011 = vmatpush1.msra.mxu0 %v2946
    %3012 = vmatprep.subr.mxu0 %v2949
    %3013 = vmatpush1.msra.mxu0 %v2948
    %3014 = vmatprep.subr.mxu0 %v2951
    %3015 = vmatpush1.msra.mxu0 %v2950
    %3016 = vmatprep.subr.mxu0 %v2953
    %3017 = vmatpush1.msra.mxu0 %v2952
    %3018 = vmatprep.subr.mxu0 %v2955
    %3019 = vmatpush1.msra.mxu0 %v2954
    %3020 = vmatprep.subr.mxu0 %v2957
    %3021 = vmatpush1.msra.mxu0 %v2956
    %3022 = vmatprep.subr.mxu0 %v2959
    %3023 = vmatpush1.msra.mxu0 %v2958
    %3024 = vmatprep.subr.mxu0 %v2961
    %3025 = vmatpush1.msra.mxu0 %v2960
    %3026 = vmatprep.subr.mxu0 %v2963
    %3027 = vmatpush1.msra.mxu0 %v2962
    %3028 = vmatprep.subr.mxu0 %v2965
    %3029 = vmatpush1.msra.mxu0 %v2964
    %3030 = vmatprep.subr.mxu0 %v2967
    %3031 = vmatpush1.msra.mxu0 %v2966
    %3032 = vmatprep.subr.mxu0 %v2969
    %3033 = vmatpush1.msra.mxu0 %v2968
    %3034 = vmatprep.subr.mxu0 %v2971
    %3035 = vmatpush1.msra.mxu0 %v2970
    %3036 = vmatprep.subr.mxu0 %v2973
    %3037 = vmatpush1.msra.mxu0 %v2972
    %3038 = vmatprep.subr.mxu0 %v2975
    %3039 = vmatpush1.msra.mxu0 %v2974
    %3040 = vmatprep.subr.mxu0 %v2977
    %3041 = vmatpush1.msra.mxu0 %v2976
    %3042 = vmatprep.subr.mxu0 %v2979
    %3043 = vmatpush1.msra.mxu0 %v2978
    %3044 = vmatprep.subr.mxu0 %v2981
    %3045 = vmatpush1.msra.mxu0 %v2980
    %3046 = vmatprep.subr.mxu0 %v2983
    %3047 = vmatpush1.msra.mxu0 %v2982
    %3048 = vmatprep.subr.mxu0 %v2985
    %3049 = vmatpush1.msra.mxu0 %v2984
    %3050 = vmatprep.subr.mxu0 %v2987
    %3051 = vmatpush1.msra.mxu0 %v2986
    %3052 = vmatprep.subr.mxu0 %v2989
    %3053 = vmatpush1.msra.mxu0 %v2988
    %3054 = vmatprep.subr.mxu0 %v2991
    %3055 = vmatpush1.msra.mxu0 %v2990
    %3056 = vmatprep.subr.mxu0 %v2993
    %3057 = vmatpush1.msra.mxu0 %v2992
    %3058 = vmatprep.subr.mxu0 %v2995
    %3059 = vmatpush1.msra.mxu0 %v2994
    %3060 = vmatprep.subr.mxu0 %v2997
    %3061 = vmatpush1.msra.mxu0 %v2996
    %3062 = vmatprep.mubr.f32.mxu0 %v2927
    %3063 = vmatmul.mubr.f32.gmra.mrb[0].mxu0 %v2926
    %v3064 = vpop.f32.mrb[0].mxu0
    %v3065 = vadd.f32 0.0, %v3064
    %v3066 = vpop.f32.mrb[0].mxu0
    %v3067 = vadd.f32 0.0, %v3066
    %3068 = vmatprep.mubr.f32.mxu0 %v2929
    %3069 = vmatmul.mubr.f32.gmra.mrb[0].mxu0 %v2928
    %v3070 = vpop.f32.mrb[0].mxu0
    %v3071 = vadd.f32 0.0, %v3070
    %v3072 = vpop.f32.mrb[0].mxu0
    %v3073 = vadd.f32 0.0, %v3072
    %3074 = vmatprep.mubr.f32.mxu0 %v2931
    %3075 = vmatmul.mubr.f32.gmra.mrb[0].mxu0 %v2930
    %v3076 = vpop.f32.mrb[0].mxu0
    %v3077 = vadd.f32 0.0, %v3076
    %v3078 = vpop.f32.mrb[0].mxu0
    %v3079 = vadd.f32 0.0, %v3078
    %3080 = vmatprep.mubr.f32.mxu0 %v2933
    %3081 = vmatmul.mubr.f32.gmra.mrb[0].mxu0 %v2932
    %v3082 = vpop.f32.mrb[0].mxu0
    %v3083 = vadd.f32 0.0, %v3082
    %v3084 = vpop.f32.mrb[0].mxu0
    %v3085 = vadd.f32 0.0, %v3084
    %3086 = vdwg.mxu0
    %v3087 = vsub.f32 %v2926, %v3065
    %v3088 = vsub.f32 %v2927, %v3067
    %v3089 = vsub.f32 %v2928, %v3071
    %v3090 = vsub.f32 %v2929, %v3073
    %v3091 = vsub.f32 %v2930, %v3077
    %v3092 = vsub.f32 %v2931, %v3079
    %v3093 = vsub.f32 %v2932, %v3083
    %v3094 = vsub.f32 %v2933, %v3085
    %v3095 = vmul.f32 %v3087, %v3087
    %v3096 = vmul.f32 %v3088, %v3088
    %v3097 = vmul.f32 %v3089, %v3089
    %v3098 = vmul.f32 %v3090, %v3090
    %v3099 = vmul.f32 %v3091, %v3091
    %v3100 = vmul.f32 %v3092, %v3092
    %v3101 = vmul.f32 %v3093, %v3093
    %v3102 = vmul.f32 %v3094, %v3094
    %3103 = vmatprep.subr.mxu0 %v2935
    %3104 = vmatpush1.msra.mxu0 %v2934
    %3105 = vmatprep.subr.mxu0 %v2937
    %3106 = vmatpush1.msra.mxu0 %v2936
    %3107 = vmatprep.subr.mxu0 %v2939
    %3108 = vmatpush1.msra.mxu0 %v2938
    %3109 = vmatprep.subr.mxu0 %v2941
    %3110 = vmatpush1.msra.mxu0 %v2940
    %3111 = vmatprep.subr.mxu0 %v2943
    %3112 = vmatpush1.msra.mxu0 %v2942
    %3113 = vmatprep.subr.mxu0 %v2945
    %3114 = vmatpush1.msra.mxu0 %v2944
    %3115 = vmatprep.subr.mxu0 %v2947
    %3116 = vmatpush1.msra.mxu0 %v2946
    %3117 = vmatprep.subr.mxu0 %v2949
    %3118 = vmatpush1.msra.mxu0 %v2948
    %3119 = vmatprep.subr.mxu0 %v2951
    %3120 = vmatpush1.msra.mxu0 %v2950
    %3121 = vmatprep.subr.mxu0 %v2953
    %3122 = vmatpush1.msra.mxu0 %v2952
    %3123 = vmatprep.subr.mxu0 %v2955
    %3124 = vmatpush1.msra.mxu0 %v2954
    %3125 = vmatprep.subr.mxu0 %v2957
    %3126 = vmatpush1.msra.mxu0 %v2956
    %3127 = vmatprep.subr.mxu0 %v2959
    %3128 = vmatpush1.msra.mxu0 %v2958
    %3129 = vmatprep.subr.mxu0 %v2961
    %3130 = vmatpush1.msra.mxu0 %v2960
    %3131 = vmatprep.subr.mxu0 %v2963
    %3132 = vmatpush1.msra.mxu0 %v2962
    %3133 = vmatprep.subr.mxu0 %v2965
    %3134 = vmatpush1.msra.mxu0 %v2964
    %3135 = vmatprep.subr.mxu0 %v2967
    %3136 = vmatpush1.msra.mxu0 %v2966
    %3137 = vmatprep.subr.mxu0 %v2969
    %3138 = vmatpush1.msra.mxu0 %v2968
    %3139 = vmatprep.subr.mxu0 %v2971
    %3140 = vmatpush1.msra.mxu0 %v2970
    %3141 = vmatprep.subr.mxu0 %v2973
    %3142 = vmatpush1.msra.mxu0 %v2972
    %3143 = vmatprep.subr.mxu0 %v2975
    %3144 = vmatpush1.msra.mxu0 %v2974
    %3145 = vmatprep.subr.mxu0 %v2977
    %3146 = vmatpush1.msra.mxu0 %v2976
    %3147 = vmatprep.subr.mxu0 %v2979
    %3148 = vmatpush1.msra.mxu0 %v2978
    %3149 = vmatprep.subr.mxu0 %v2981
    %3150 = vmatpush1.msra.mxu0 %v2980
    %3151 = vmatprep.subr.mxu0 %v2983
    %3152 = vmatpush1.msra.mxu0 %v2982
    %3153 = vmatprep.subr.mxu0 %v2985
    %3154 = vmatpush1.msra.mxu0 %v2984
    %3155 = vmatprep.subr.mxu0 %v2987
    %3156 = vmatpush1.msra.mxu0 %v2986
    %3157 = vmatprep.subr.mxu0 %v2989
    %3158 = vmatpush1.msra.mxu0 %v2988
    %3159 = vmatprep.subr.mxu0 %v2991
    %3160 = vmatpush1.msra.mxu0 %v2990
    %3161 = vmatprep.subr.mxu0 %v2993
    %3162 = vmatpush1.msra.mxu0 %v2992
    %3163 = vmatprep.subr.mxu0 %v2995
    %3164 = vmatpush1.msra.mxu0 %v2994
    %3165 = vmatprep.subr.mxu0 %v2997
    %3166 = vmatpush1.msra.mxu0 %v2996
    %3167 = vmatprep.mubr.f32.mxu0 %v3096
    %3168 = vmatmul.mubr.f32.gmra.mrb[0].mxu0 %v3095
    %v3169 = vpop.f32.mrb[0].mxu0
    %v3170 = vadd.f32 1e-05, %v3169
    %v3171 = vpop.f32.mrb[0].mxu0
    %v3172 = vadd.f32 1e-05, %v3171
    %3173 = vmatprep.mubr.f32.mxu0 %v3098
    %3174 = vmatmul.mubr.f32.gmra.mrb[0].mxu0 %v3097
    %v3175 = vpop.f32.mrb[0].mxu0
    %v3176 = vadd.f32 1e-05, %v3175
    %v3177 = vpop.f32.mrb[0].mxu0
    %v3178 = vadd.f32 1e-05, %v3177
    %3179 = vmatprep.mubr.f32.mxu0 %v3100
    %3180 = vmatmul.mubr.f32.gmra.mrb[0].mxu0 %v3099
    %v3181 = vpop.f32.mrb[0].mxu0
    %v3182 = vadd.f32 1e-05, %v3181
    %v3183 = vpop.f32.mrb[0].mxu0
    %v3184 = vadd.f32 1e-05, %v3183
    %3185 = vmatprep.mubr.f32.mxu0 %v3102
    %3186 = vmatmul.mubr.f32.gmra.mrb[0].mxu0 %v3101
    %v3187 = vpop.f32.mrb[0].mxu0
    %v3188 = vadd.f32 1e-05, %v3187
    %v3189 = vpop.f32.mrb[0].mxu0
    %v3190 = vadd.f32 1e-05, %v3189
    %3191 = vdwg.mxu0
    %v3192 = vrsqrt.pop %v3170
    %v3193 = vrsqrt.pop %v3172
    %v3194 = vrsqrt.pop %v3176
    %v3195 = vrsqrt.pop %v3178
    %v3196 = vrsqrt.pop %v3182
    %v3197 = vrsqrt.pop %v3184
    %v3198 = vrsqrt.pop %v3188
    %v3199 = vrsqrt.pop %v3190
    %v3200 = vmul.f32 %v3087, %v3192
    %v3201 = vmul.f32 %v3088, %v3193
    %v3202 = vmul.f32 %v3089, %v3194
    %v3203 = vmul.f32 %v3090, %v3195
    %v3204 = vmul.f32 %v3091, %v3196
    %v3205 = vmul.f32 %v3092, %v3197
    %v3206 = vmul.f32 %v3093, %v3198
    %v3207 = vmul.f32 %v3094, %v3199
    %v3209 = vlaneseq
    %v3210 = vshrl.u32 %v3209, 7
    %v3211 = vsub.s32 0, %v3210
    %v3212 = vrot.slane %v2211, %v3211
    %v3213 = vlaneseq
    %v3214 = vshrl.u32 %v3213, 7
    %v3215 = vsub.s32 1, %v3214
    %v3216 = vrot.slane %v2211, %v3215
    %v3219 = vmul.f32 %v3200, %v3212
    %v3220 = vmul.f32 %v3201, %v3216
    %v3221 = vmul.f32 %v3202, %v3212
    %v3222 = vmul.f32 %v3203, %v3216
    %v3223 = vmul.f32 %v3204, %v3212
    %v3224 = vmul.f32 %v3205, %v3216
    %v3225 = vmul.f32 %v3206, %v3212
    %v3226 = vmul.f32 %v3207, %v3216
    %v3228 = vlaneseq
    %v3229 = vshrl.u32 %v3228, 7
    %v3230 = vsub.s32 0, %v3229
    %v3231 = vrot.slane %v2212, %v3230
    %v3232 = vlaneseq
    %v3233 = vshrl.u32 %v3232, 7
    %v3234 = vsub.s32 1, %v3233
    %v3235 = vrot.slane %v2212, %v3234
    %v3238 = vadd.f32 %v3219, %v3231
    %v3239 = vadd.f32 %v3220, %v3235
    %v3240 = vadd.f32 %v3221, %v3231
    %v3241 = vadd.f32 %v3222, %v3235
    %v3242 = vadd.f32 %v3223, %v3231
    %v3243 = vadd.f32 %v3224, %v3235
    %v3244 = vadd.f32 %v3225, %v3231
    %v3245 = vadd.f32 %v3226, %v3235
    %3246 = vst [vmem:[#allocation17] sm:$0xff] %v3238
    %3247 = vst [vmem:[#allocation17 + $0x8] sm:$0xff] %v3239
    %3248 = vst [vmem:[#allocation17 + $0x10] sm:$0xff] %v3240
    %3249 = vst [vmem:[#allocation17 + $0x18] sm:$0xff] %v3241
    %3250 = vst [vmem:[#allocation17 + $0x20] sm:$0xff] %v3242
    %3251 = vst [vmem:[#allocation17 + $0x28] sm:$0xff] %v3243
    %3252 = vst [vmem:[#allocation17 + $0x30] sm:$0xff] %v3244
    %3253 = vst [vmem:[#allocation17 + $0x38] sm:$0xff] %v3245
    // Predicated region
    $region74: #{tpu_custom_call.1} parent=1 // pred_check
      _
    $region75: #{tpu_custom_call.1} parent=1 // pred_check_branch
      %3255 = sbr.rel (0) target = $region77
    $region76: #{tpu_custom_call.1} parent=1 // pred_region
      %s3257 = ssub.s32 1024, 1024
      %3258 = vsyncadd [#allocation5], %s3257
      %s3259 = sshll.u32 [#allocation17], 4
      %s3260 = int_to_ptr.vmem [resolvable:$true] %s3259
      %3265 = dma.vmem_to_hbm [thread:$0]  %s3260, 1024, %s10, [#allocation5], 256, 256, 16
    $region77: #{tpu_custom_call.1} parent=1 // pred_fallthru
      _
    // Predicated region
    $region78: #{tpu_custom_call.1} parent=1 // pred_check
      _
    $region79: #{tpu_custom_call.1} parent=1 // pred_check_branch
      %3267 = sbr.rel (0) target = $region81
    $region80: #{tpu_custom_call.1} parent=1 // pred_region
      %3268 = dma.done [#allocation5], 1024
    $region81: #{tpu_custom_call.1} parent=1 // pred_fallthru
      _
    %3269 = vsyncpa [#allocation4], 1
    %3270 = vsyncpa [#allocation7], 1
    %3271 = vsyncpa [#allocation10], 1
    %3272 = vsyncpa [#allocation13], 1
    %3273 = vsyncpa [#allocation16], 1
    %3274 = vsyncpa [#allocation5], 1

</llo_original>
